<compile_context>
chip_gen: v6e
topology: v6e:2x2x1
jax: 0.10.0
libtpu: 0.0.40
codegen_flags: <defaults>
</compile_context>

<pallas_src>
import functools

import jax
import jax.numpy as jnp
from jax import lax
from jax.experimental import pallas as pl
from jax.experimental.pallas import tpu as pltpu

KSIZE = 7
PAD = KSIZE // 2  # 3


# ---------------------------------------------------------------------------
# generation-aware VMEM parameters
# ---------------------------------------------------------------------------
def _vmem_params():
    """(vmem_limit_bytes, per-block budget bytes), based on physical VMEM."""
    vmem_bytes = 64 * 1024 * 1024            # conservative default (v7x-like)
    try:
        info = pltpu.get_tpu_info()
        vmem_bytes = int(info.vmem_capacity_bytes)
    except Exception:
        pass
    if vmem_bytes >= 128 * 1024 * 1024:      # v5e / v6e: 128 MiB physical
        return 96 * 1024 * 1024, 8 * 1024 * 1024
    return 40 * 1024 * 1024, 4 * 1024 * 1024  # v7x: 64 MiB physical


# ---------------------------------------------------------------------------
# tiling helpers
# ---------------------------------------------------------------------------
def _tile_options(n, step):
    """Valid tile sizes for a dim of size n: n itself plus multiples of `step`
    that divide n, descending (keeps the (8,128) block rule happy)."""
    opts = [n]
    d = (n // step) * step
    while d > 0:
        if d != n and n % d == 0:
            opts.append(d)
        d -= step
    return opts


def _choose_tiles(C, HW, itemsize, B, budget_bytes):
    """Pick (c_tile, hw_tile): keep rows lane-dense (prefer full HW), shrink C
    first.  C tile step is dtype-aware (packed sublanes for sub-32-bit dtypes).
    Guarantees >=2 iterations on the pool pass' parallel axes for v7x."""
    step_c = 8 * max(1, 4 // itemsize)          # 8 f32, 16 bf16, 32 int8/fp8
    c_opts = _tile_options(C, step_c)
    hw_opts = _tile_options(HW, 128)
    c_tile = hw_tile = None
    for hw_t in hw_opts:
        for c_t in c_opts:
            if c_t * hw_t * itemsize <= budget_bytes:
                c_tile, hw_tile = c_t, hw_t
                break
        if c_tile is not None:
            break
    if c_tile is None:                          # nothing fits: smallest legal tile
        c_tile, hw_tile = c_opts[-1], hw_opts[-1]
    # v7x megacore: ensure the (B, n_hw) parallel extent is >= 2.
    if B * (HW // hw_tile) < 2:
        smaller = [h for h in hw_opts if h <= HW // 2]
        if smaller:
            hw_tile = smaller[0]
    return c_tile, hw_tile


# ---------------------------------------------------------------------------
# pass 1: channel max / mean pooling (C reduction) on lane-dense tiles
# ---------------------------------------------------------------------------
def _pool_kernel(x_ref, pooled_ref, mx_ref, sm_ref, *, inv_c, acc_rows):
    # x_ref:      (1, C_tile, HW_tile)      input slab
    # pooled_ref: (1, 2, HW_tile) f32       row 0 = channel max, row 1 = mean
    # mx_ref/sm_ref: (acc_rows, HW_tile) f32 running accumulators (VMEM scratch)
    ci = pl.program_id(2)
    x = x_ref[0].astype(jnp.float32)                         # (C_tile, HW_tile)
    c_tile, hw = x.shape

    if acc_rows > 1:
        # Reduce across vreg groups only (pure VPU); defer the cross-sublane
        # (XLU) reduction to the finalize step.
        xg = x.reshape(c_tile // acc_rows, acc_rows, hw)
        blk_max = jnp.max(xg, axis=0)                        # (8, HW_tile)
        blk_sum = jnp.sum(xg, axis=0)                        # (8, HW_tile)
    else:
        blk_max = jnp.max(x, axis=0, keepdims=True)          # (1, HW_tile)
        blk_sum = jnp.sum(x, axis=0, keepdims=True)          # (1, HW_tile)

    @pl.when(ci == 0)
    def _init():
        mx_ref[...] = blk_max
        sm_ref[...] = blk_sum

    @pl.when(ci > 0)
    def _accumulate():
        mx_ref[...] = jnp.maximum(mx_ref[...], blk_max)
        sm_ref[...] = sm_ref[...] + blk_sum

    @pl.when(ci == pl.num_programs(2) - 1)
    def _finalize():
        pooled_ref[0, 0:1, :] = jnp.max(mx_ref[...], axis=0, keepdims=True)
        pooled_ref[0, 1:2, :] = (jnp.sum(sm_ref[...], axis=0, keepdims=True)
                                 * inv_c)                    # mean = sum*(1/C)


# ---------------------------------------------------------------------------
# pass 2: 7x7 conv (2 -> 1, "same", no bias) + sigmoid, per batch element
# ---------------------------------------------------------------------------
def _conv_sigmoid_kernel(w_ref, pp_ref, attn_ref, pad_ref, shift_ref):
    # w_ref:     (2, 49)  SMEM conv weights (flattened 7x7 per input channel)
    # pp_ref:    (1, 2, H, W) f32   pooled maps (max, mean), unpadded
    # attn_ref:  (1, H, W) x.dtype  spatial attention map
    # pad_ref:   (2, H+6, W+6) f32  VMEM scratch: zero-padded pooled maps
    # shift_ref: (2, 7, H+6, W) f32 VMEM scratch: lane-shifted copies
    H, W = attn_ref.shape[1], attn_ref.shape[2]

    # In-kernel "same" zero padding (no host jnp.pad / extra HBM round trip).
    pad_ref[...] = jnp.zeros_like(pad_ref)
    for c in range(2):
        pad_ref[c, PAD:PAD + H, PAD:PAD + W] = pp_ref[0, c]
        # Hoist the lane-axis (kw) shift: 14 lane-offset slices total, not 98.
        for kw in range(KSIZE):
            shift_ref[c, kw, :, :] = pad_ref[c, :, kw:kw + W]

    # 7 independent per-kh partial accumulators; the inner loads are lane-
    # aligned (sublane offsets only) so the 98 MACs stay on the VPU path.
    parts = []
    for kh in range(KSIZE):
        acc = None
        for c in range(2):
            for kw in range(KSIZE):
                term = shift_ref[c, kw, kh:kh + H, :] * w_ref[c, kh * KSIZE + kw]
                acc = term if acc is None else acc + term
        parts.append(acc)

    # balanced tree-sum of the independent partials
    while len(parts) > 1:
        nxt = [parts[i] + parts[i + 1] for i in range(0, len(parts) - 1, 2)]
        if len(parts) % 2:
            nxt.append(parts[-1])
        parts = nxt

    attn_ref[...] = jax.nn.sigmoid(parts[0]).astype(attn_ref.dtype)[None]


# ---------------------------------------------------------------------------
# pass 3: out = x * attn (lane-dense, fully parallel grid, attn tile reused)
# ---------------------------------------------------------------------------
def _apply_kernel(attn_ref, x_ref, o_ref):
    # attn_ref: (1, 1, HW_tile) x.dtype; x_ref/o_ref: (1, C_tile, HW_tile)
    o_ref[...] = (x_ref[...] * attn_ref[...]).astype(o_ref.dtype)


# ---------------------------------------------------------------------------
# wrapper
# ---------------------------------------------------------------------------
@jax.jit
def spatial_attention(x, conv_weight):
    """x: (B, C, H, W). conv_weight: (1, 2, 7, 7) OIHW, no bias. -> (B, C, H, W)."""
    B, C, H, W = x.shape
    HW = H * W
    itemsize = x.dtype.itemsize
    vmem_limit, block_budget = _vmem_params()
    c_tile, hw_tile = _choose_tiles(C, HW, itemsize, B, block_budget)
    n_c, n_hw = C // c_tile, HW // hw_tile
    acc_rows = 8 if c_tile % 8 == 0 else 1
    x_bytes = B * C * HW * itemsize
    pooled_bytes = B * 2 * HW * 4
    attn_bytes = B * HW * itemsize

    x_flat = x.reshape(B, C, HW)                       # free trailing-dim collapse

    # ---- pass 1: pooled (B, 2, HW) f32 (max / mean over C) -------------------
    pooled = pl.pallas_call(
        functools.partial(_pool_kernel, inv_c=1.0 / C, acc_rows=acc_rows),
        out_shape=jax.ShapeDtypeStruct((B, 2, HW), jnp.float32),
        grid_spec=pltpu.PrefetchScalarGridSpec(
            num_scalar_prefetch=0,
            grid=(B, n_hw, n_c),
            in_specs=[
                pl.BlockSpec((1, c_tile, hw_tile), lambda b, s, c: (b, c, s)),
            ],
            out_specs=pl.BlockSpec((1, 2, hw_tile), lambda b, s, c: (b, 0, s)),
            scratch_shapes=[
                pltpu.VMEM((acc_rows, hw_tile), jnp.float32),   # running max
                pltpu.VMEM((acc_rows, hw_tile), jnp.float32),   # running sum
            ],
        ),
        compiler_params=pltpu.CompilerParams(
            dimension_semantics=("parallel", "parallel", "arbitrary"),
            vmem_limit_bytes=vmem_limit,
        ),
        cost_estimate=pl.CostEstimate(
            flops=2 * B * C * HW, transcendentals=0,
            bytes_accessed=x_bytes + pooled_bytes),
    )(x_flat)

    pooled_maps = pooled.reshape(B, 2, H, W)           # free trailing-dim split
    w_flat = conv_weight.reshape(2, KSIZE * KSIZE).astype(jnp.float32)

    # ---- pass 2: attn (B, H, W) in x.dtype ------------------------------------
    attn = pl.pallas_call(
        _conv_sigmoid_kernel,
        out_shape=jax.ShapeDtypeStruct((B, H, W), x.dtype),
        grid_spec=pltpu.PrefetchScalarGridSpec(
            num_scalar_prefetch=0,
            grid=(B,),
            in_specs=[
                pl.BlockSpec(memory_space=pltpu.MemorySpace.SMEM),   # weights
                pl.BlockSpec((1, 2, H, W), lambda b: (b, 0, 0, 0)),  # pooled
            ],
            out_specs=pl.BlockSpec((1, H, W), lambda b: (b, 0, 0)),
            scratch_shapes=[
                pltpu.VMEM((2, H + 2 * PAD, W + 2 * PAD), jnp.float32),
                pltpu.VMEM((2, KSIZE, H + 2 * PAD, W), jnp.float32),
            ],
        ),
        compiler_params=pltpu.CompilerParams(
            dimension_semantics=("parallel",),
            vmem_limit_bytes=vmem_limit,
        ),
        cost_estimate=pl.CostEstimate(
            flops=2 * 2 * KSIZE * KSIZE * B * HW,
            transcendentals=B * HW,
            bytes_accessed=pooled_bytes + attn_bytes),
    )(w_flat, pooled_maps)

    attn_flat = attn.reshape(B, 1, HW)                 # free trailing-dim collapse

    # ---- pass 3: out = x * attn (C innermost so the attn tile is not re-DMAed)
    out_flat = pl.pallas_call(
        _apply_kernel,
        out_shape=jax.ShapeDtypeStruct((B, C, HW), x.dtype),
        grid_spec=pltpu.PrefetchScalarGridSpec(
            num_scalar_prefetch=0,
            grid=(B, n_hw, n_c),
            in_specs=[
                pl.BlockSpec((1, 1, hw_tile), lambda b, s, c: (b, 0, s)),       # attn
                pl.BlockSpec((1, c_tile, hw_tile), lambda b, s, c: (b, c, s)),  # x
            ],
            out_specs=pl.BlockSpec((1, c_tile, hw_tile), lambda b, s, c: (b, c, s)),
        ),
        compiler_params=pltpu.CompilerParams(
            dimension_semantics=("parallel", "parallel", "parallel"),
            vmem_limit_bytes=vmem_limit,
        ),
        cost_estimate=pl.CostEstimate(
            flops=B * C * HW, transcendentals=0,
            bytes_accessed=2 * x_bytes + attn_bytes),
    )(attn_flat, x_flat)

    return out_flat.reshape(B, C, H, W)


# ---------------------------------------------------------------------------
# pure-JAX reference (matches the PyTorch forward exactly)
# ---------------------------------------------------------------------------
def spatial_attention_reference(x, conv_weight):
    maxp = jnp.max(x, axis=1, keepdims=True)
    avgp = jnp.mean(x, axis=1, keepdims=True)
    pooled = jnp.concatenate([maxp, avgp], axis=1)                # (B, 2, H, W)
    conv = lax.conv_general_dilated(
        pooled, conv_weight, window_strides=(1, 1),
        padding=((PAD, PAD), (PAD, PAD)),
        dimension_numbers=("NCHW", "OIHW", "NCHW"),
        precision=lax.Precision.HIGHEST)
    return x * jax.nn.sigmoid(conv)


if __name__ == "__main__":
    key = jax.random.PRNGKey(0)
    kx, kw = jax.random.split(key)

    # Shapes from the original module spec: inputs = torch.rand([4, 32, 16, 16])
    B, C, H, W = 4, 32, 16, 16
    x = jax.random.normal(kx, (B, C, H, W), dtype=jnp.float32)
    # Deterministic synthetic conv weight (out=1, in=2, 7, 7), no bias.
    conv_weight = (jax.random.normal(kw, (1, 2, KSIZE, KSIZE), dtype=jnp.float32)
                   * (1.0 / (2 * KSIZE * KSIZE) ** 0.5))

    out = jax.block_until_ready(spatial_attention(x, conv_weight))
    ref = spatial_attention_reference(x, conv_weight)
    assert out.shape == (B, C, H, W)
    assert jnp.allclose(out, ref, atol=1e-5, rtol=1e-5), "mismatch vs reference"

    # Second f32 config exercising the C % 8 != 0 accumulator path.
    x2 = jax.random.normal(kx, (2, 4, 16, 16), dtype=jnp.float32)
    out2 = jax.block_until_ready(spatial_attention(x2, conv_weight))
    ref2 = spatial_attention_reference(x2, conv_weight)
    assert jnp.allclose(out2, ref2, atol=1e-5, rtol=1e-5), "mismatch vs reference (C=4)"

    # bf16 smoke run: attn is emitted in bf16, apply multiplies in bf16.
    xb = x.astype(jnp.bfloat16)
    outb = jax.block_until_ready(spatial_attention(xb, conv_weight))
    assert outb.shape == (B, C, H, W) and outb.dtype == jnp.bfloat16
    assert bool(jnp.all(jnp.isfinite(outb.astype(jnp.float32))))

    print("KERNEL_OK")
</pallas_src>

<mosaic_0001>
module attributes {stable_mosaic.version = 11 : i64} {
  func.func @_pool_kernel(%arg0: i32, %arg1: i32, %arg2: i32, %arg3: memref<1x32x256xf32, #tpu.memory_space<vmem>>, %arg4: memref<1x2x256xf32, #tpu.memory_space<vmem>>, %arg5: memref<8x256xf32, #tpu.memory_space<vmem>>, %arg6: memref<8x256xf32, #tpu.memory_space<vmem>>) attributes {dimension_semantics = [#tpu.dimension_semantics<parallel>, #tpu.dimension_semantics<parallel>, #tpu.dimension_semantics<arbitrary>], iteration_bounds = array<i64: 4, 1, 1>, scalar_prefetch = 0 : i64, scratch_operands = 2 : i64, tpu.core_type = #tpu.core_type<tc>, window_params = [{transform_indices = @transform_0, window_bounds = array<i64: 1, 32, 256>}, {transform_indices = @transform_1, window_bounds = array<i64: 1, 2, 256>}]} {
    %c0 = arith.constant 0 : index
    %c0_0 = arith.constant 0 : index
    %c0_1 = arith.constant 0 : index
    %0 = vector.load %arg3[%c0, %c0_0, %c0_1] : memref<1x32x256xf32, #tpu.memory_space<vmem>>, vector<1x32x256xf32>
    %1 = vector.shape_cast %0 : vector<1x32x256xf32> to vector<32x256xf32>
    %2 = vector.shape_cast %1 : vector<32x256xf32> to vector<4x8x256xf32>
    %cst = arith.constant dense<0xFF800000> : vector<8x256xf32>
    %3 = vector.multi_reduction <maximumf>, %2, %cst [0] : vector<4x8x256xf32> to vector<8x256xf32>
    %cst_2 = arith.constant dense<0.000000e+00> : vector<8x256xf32>
    %4 = vector.multi_reduction <add>, %2, %cst_2 [0] : vector<4x8x256xf32> to vector<8x256xf32>
    %c0_i32 = arith.constant 0 : i32
    %5 = arith.cmpi eq, %arg2, %c0_i32 : i32
    %6 = arith.extui %5 : i1 to i32
    %c0_i32_3 = arith.constant 0 : i32
    %7 = arith.cmpi ne, %6, %c0_i32_3 : i32
    scf.if %7 {
      %c0_8 = arith.constant 0 : index
      %c0_9 = arith.constant 0 : index
      %14 = vector.load %arg5[%c0_8, %c0_9] : memref<8x256xf32, #tpu.memory_space<vmem>>, vector<8x256xf32>
      tpu.vector_store %arg5[%c0_8, %c0_9], %3 {strides = array<i32>} : memref<8x256xf32, #tpu.memory_space<vmem>>, vector<8x256xf32>,
      %c0_10 = arith.constant 0 : index
      %c0_11 = arith.constant 0 : index
      %15 = vector.load %arg6[%c0_10, %c0_11] : memref<8x256xf32, #tpu.memory_space<vmem>>, vector<8x256xf32>
      tpu.vector_store %arg6[%c0_10, %c0_11], %4 {strides = array<i32>} : memref<8x256xf32, #tpu.memory_space<vmem>>, vector<8x256xf32>,
    } else {
    }
    %c0_i32_4 = arith.constant 0 : i32
    %8 = arith.cmpi sgt, %arg2, %c0_i32_4 : i32
    %9 = arith.extui %8 : i1 to i32
    %c0_i32_5 = arith.constant 0 : i32
    %10 = arith.cmpi ne, %9, %c0_i32_5 : i32
    scf.if %10 {
      %c0_8 = arith.constant 0 : index
      %c0_9 = arith.constant 0 : index
      %14 = vector.load %arg5[%c0_8, %c0_9] : memref<8x256xf32, #tpu.memory_space<vmem>>, vector<8x256xf32>
      %15 = arith.maximumf %14, %3 : vector<8x256xf32>
      %c0_10 = arith.constant 0 : index
      %c0_11 = arith.constant 0 : index
      %16 = vector.load %arg5[%c0_10, %c0_11] : memref<8x256xf32, #tpu.memory_space<vmem>>, vector<8x256xf32>
      tpu.vector_store %arg5[%c0_10, %c0_11], %15 {strides = array<i32>} : memref<8x256xf32, #tpu.memory_space<vmem>>, vector<8x256xf32>,
      %c0_12 = arith.constant 0 : index
      %c0_13 = arith.constant 0 : index
      %17 = vector.load %arg6[%c0_12, %c0_13] : memref<8x256xf32, #tpu.memory_space<vmem>>, vector<8x256xf32>
      %18 = arith.addf %17, %4 : vector<8x256xf32>
      %c0_14 = arith.constant 0 : index
      %c0_15 = arith.constant 0 : index
      %19 = vector.load %arg6[%c0_14, %c0_15] : memref<8x256xf32, #tpu.memory_space<vmem>>, vector<8x256xf32>
      tpu.vector_store %arg6[%c0_14, %c0_15], %18 {strides = array<i32>} : memref<8x256xf32, #tpu.memory_space<vmem>>, vector<8x256xf32>,
    } else {
    }
    %c0_i32_6 = arith.constant 0 : i32
    %11 = arith.cmpi eq, %arg2, %c0_i32_6 : i32
    %12 = arith.extui %11 : i1 to i32
    %c0_i32_7 = arith.constant 0 : i32
    %13 = arith.cmpi ne, %12, %c0_i32_7 : i32
    scf.if %13 {
      %c0_8 = arith.constant 0 : index
      %c0_9 = arith.constant 0 : index
      %14 = vector.load %arg5[%c0_8, %c0_9] : memref<8x256xf32, #tpu.memory_space<vmem>>, vector<8x256xf32>
      %cst_10 = arith.constant dense<0xFF800000> : vector<256xf32>
      %15 = vector.multi_reduction <maximumf>, %14, %cst_10 [0] : vector<8x256xf32> to vector<256xf32>
      %16 = vector.shape_cast %15 : vector<256xf32> to vector<1x256xf32>
      %c0_11 = arith.constant 0 : index
      %c0_12 = arith.constant 0 : index
      %c0_13 = arith.constant 0 : index
      %17 = vector.load %arg4[%c0_11, %c0_12, %c0_13] : memref<1x2x256xf32, #tpu.memory_space<vmem>>, vector<1x1x256xf32>
      %18 = vector.shape_cast %17 : vector<1x1x256xf32> to vector<1x256xf32>
      %19 = vector.shape_cast %16 : vector<1x256xf32> to vector<1x1x256xf32>
      tpu.vector_store %arg4[%c0_11, %c0_12, %c0_13], %19 {strides = array<i32>} : memref<1x2x256xf32, #tpu.memory_space<vmem>>, vector<1x1x256xf32>,
      %c0_14 = arith.constant 0 : index
      %c0_15 = arith.constant 0 : index
      %20 = vector.load %arg6[%c0_14, %c0_15] : memref<8x256xf32, #tpu.memory_space<vmem>>, vector<8x256xf32>
      %cst_16 = arith.constant dense<0.000000e+00> : vector<256xf32>
      %21 = vector.multi_reduction <add>, %20, %cst_16 [0] : vector<8x256xf32> to vector<256xf32>
      %22 = vector.shape_cast %21 : vector<256xf32> to vector<1x256xf32>
      %cst_17 = arith.constant 3.125000e-02 : f32
      %23 = vector.broadcast %cst_17 : f32 to vector<1x256xf32>
      %24 = arith.mulf %22, %23 : vector<1x256xf32>
      %c0_18 = arith.constant 0 : index
      %c1 = arith.constant 1 : index
      %c0_19 = arith.constant 0 : index
      %25 = vector.load %arg4[%c0_18, %c1, %c0_19] : memref<1x2x256xf32, #tpu.memory_space<vmem>>, vector<1x1x256xf32>
      %26 = vector.shape_cast %25 : vector<1x1x256xf32> to vector<1x256xf32>
      %27 = vector.shape_cast %24 : vector<1x256xf32> to vector<1x1x256xf32>
      tpu.vector_store %arg4[%c0_18, %c1, %c0_19], %27 {strides = array<i32>} : memref<1x2x256xf32, #tpu.memory_space<vmem>>, vector<1x1x256xf32>,
    } else {
    }
    return
  }
  func.func @transform_0(%arg0: i32, %arg1: i32, %arg2: i32) -> (i32, i32, i32) {
    %c0_i32 = arith.constant 0 : i32
    return %arg0, %arg2, %arg1 : i32, i32, i32
  }
  func.func @transform_1(%arg0: i32, %arg1: i32, %arg2: i32) -> (i32, i32, i32) {
    %c0_i32 = arith.constant 0 : i32
    %c0_i32_0 = arith.constant 0 : i32
    return %arg0, %c0_i32, %arg1 : i32, i32, i32
  }
}

module attributes {stable_mosaic.version = 11 : i64} {
  func.func @_apply_kernel(%arg0: i32, %arg1: i32, %arg2: i32, %arg3: memref<1x1x256xf32, #tpu.memory_space<vmem>>, %arg4: memref<1x32x256xf32, #tpu.memory_space<vmem>>, %arg5: memref<1x32x256xf32, #tpu.memory_space<vmem>>) attributes {dimension_semantics = [#tpu.dimension_semantics<parallel>, #tpu.dimension_semantics<parallel>, #tpu.dimension_semantics<parallel>], iteration_bounds = array<i64: 4, 1, 1>, scalar_prefetch = 0 : i64, scratch_operands = 0 : i64, tpu.core_type = #tpu.core_type<tc>, window_params = [{transform_indices = @transform_0, window_bounds = array<i64: 1, 1, 256>}, {transform_indices = @transform_1, window_bounds = array<i64: 1, 32, 256>}, {transform_indices = @transform_2, window_bounds = array<i64: 1, 32, 256>}]} {
    %c0 = arith.constant 0 : index
    %c0_0 = arith.constant 0 : index
    %c0_1 = arith.constant 0 : index
    %0 = vector.load %arg4[%c0, %c0_0, %c0_1] : memref<1x32x256xf32, #tpu.memory_space<vmem>>, vector<1x32x256xf32>
    %c0_2 = arith.constant 0 : index
    %c0_3 = arith.constant 0 : index
    %c0_4 = arith.constant 0 : index
    %1 = vector.load %arg3[%c0_2, %c0_3, %c0_4] : memref<1x1x256xf32, #tpu.memory_space<vmem>>, vector<1x1x256xf32>
    %2 = vector.broadcast %1 : vector<1x1x256xf32> to vector<1x32x256xf32>
    %3 = arith.mulf %0, %2 : vector<1x32x256xf32>
    %c0_5 = arith.constant 0 : index
    %c0_6 = arith.constant 0 : index
    %c0_7 = arith.constant 0 : index
    %4 = vector.load %arg5[%c0_5, %c0_6, %c0_7] : memref<1x32x256xf32, #tpu.memory_space<vmem>>, vector<1x32x256xf32>
    tpu.vector_store %arg5[%c0_5, %c0_6, %c0_7], %3 {strides = array<i32>} : memref<1x32x256xf32, #tpu.memory_space<vmem>>, vector<1x32x256xf32>,
    return
  }
  func.func @transform_0(%arg0: i32, %arg1: i32, %arg2: i32) -> (i32, i32, i32) {
    %c0_i32 = arith.constant 0 : i32
    %c0_i32_0 = arith.constant 0 : i32
    return %arg0, %c0_i32, %arg1 : i32, i32, i32
  }
  func.func @transform_1(%arg0: i32, %arg1: i32, %arg2: i32) -> (i32, i32, i32) {
    %c0_i32 = arith.constant 0 : i32
    return %arg0, %arg2, %arg1 : i32, i32, i32
  }
  func.func @transform_2(%arg0: i32, %arg1: i32, %arg2: i32) -> (i32, i32, i32) {
    %c0_i32 = arith.constant 0 : i32
    return %arg0, %arg2, %arg1 : i32, i32, i32
  }
}

module attributes {stable_mosaic.version = 11 : i64} {
  func.func @_conv_sigmoid_kernel(%arg0: i32, %arg1: memref<2x49xf32, #tpu.memory_space<smem>>, %arg2: memref<1x2x16x16xf32, #tpu.memory_space<vmem>>, %arg3: memref<1x16x16xf32, #tpu.memory_space<vmem>>, %arg4: memref<2x22x22xf32, #tpu.memory_space<vmem>>, %arg5: memref<2x7x22x16xf32, #tpu.memory_space<vmem>>) attributes {dimension_semantics = [#tpu.dimension_semantics<parallel>], iteration_bounds = array<i64: 4>, scalar_prefetch = 0 : i64, scratch_operands = 2 : i64, tpu.core_type = #tpu.core_type<tc>, window_params = [{transform_indices = @transform_0, window_bounds = array<i64: 2, 49>}, {transform_indices = @transform_1, window_bounds = array<i64: 1, 2, 16, 16>}, {transform_indices = @transform_2, window_bounds = array<i64: 1, 16, 16>}]} {
    %cst = arith.constant 0.000000e+00 : f32
    %0 = vector.broadcast %cst : f32 to vector<2x22x22xf32>
    %c0 = arith.constant 0 : index
    %c0_0 = arith.constant 0 : index
    %c0_1 = arith.constant 0 : index
    %1 = vector.load %arg4[%c0, %c0_0, %c0_1] : memref<2x22x22xf32, #tpu.memory_space<vmem>>, vector<2x22x22xf32>
    tpu.vector_store %arg4[%c0, %c0_0, %c0_1], %0 {strides = array<i32>} : memref<2x22x22xf32, #tpu.memory_space<vmem>>, vector<2x22x22xf32>,
    %c0_2 = arith.constant 0 : index
    %c0_3 = arith.constant 0 : index
    %c0_4 = arith.constant 0 : index
    %c0_5 = arith.constant 0 : index
    %2 = vector.load %arg2[%c0_2, %c0_3, %c0_4, %c0_5] : memref<1x2x16x16xf32, #tpu.memory_space<vmem>>, vector<1x1x16x16xf32>
    %3 = vector.shape_cast %2 : vector<1x1x16x16xf32> to vector<16x16xf32>
    %c0_6 = arith.constant 0 : index
    %c3 = arith.constant 3 : index
    %c3_7 = arith.constant 3 : index
    %4 = vector.load %arg4[%c0_6, %c3, %c3_7] : memref<2x22x22xf32, #tpu.memory_space<vmem>>, vector<1x16x16xf32>
    %5 = vector.shape_cast %4 : vector<1x16x16xf32> to vector<16x16xf32>
    %6 = vector.shape_cast %3 : vector<16x16xf32> to vector<1x16x16xf32>
    tpu.vector_store %arg4[%c0_6, %c3, %c3_7], %6 {strides = array<i32>} : memref<2x22x22xf32, #tpu.memory_space<vmem>>, vector<1x16x16xf32>,
    %c0_8 = arith.constant 0 : index
    %c0_9 = arith.constant 0 : index
    %c0_10 = arith.constant 0 : index
    %7 = vector.load %arg4[%c0_8, %c0_9, %c0_10] : memref<2x22x22xf32, #tpu.memory_space<vmem>>, vector<1x22x16xf32>
    %8 = vector.shape_cast %7 : vector<1x22x16xf32> to vector<22x16xf32>
    %c0_11 = arith.constant 0 : index
    %c0_12 = arith.constant 0 : index
    %c0_13 = arith.constant 0 : index
    %c0_14 = arith.constant 0 : index
    %9 = vector.load %arg5[%c0_11, %c0_12, %c0_13, %c0_14] : memref<2x7x22x16xf32, #tpu.memory_space<vmem>>, vector<1x1x22x16xf32>
    %10 = vector.shape_cast %9 : vector<1x1x22x16xf32> to vector<22x16xf32>
    %11 = vector.shape_cast %8 : vector<22x16xf32> to vector<1x1x22x16xf32>
    tpu.vector_store %arg5[%c0_11, %c0_12, %c0_13, %c0_14], %11 {strides = array<i32>} : memref<2x7x22x16xf32, #tpu.memory_space<vmem>>, vector<1x1x22x16xf32>,
    %c0_15 = arith.constant 0 : index
    %c0_16 = arith.constant 0 : index
    %c1 = arith.constant 1 : index
    %12 = vector.load %arg4[%c0_15, %c0_16, %c1] : memref<2x22x22xf32, #tpu.memory_space<vmem>>, vector<1x22x16xf32>
    %13 = vector.shape_cast %12 : vector<1x22x16xf32> to vector<22x16xf32>
    %c0_17 = arith.constant 0 : index
    %c1_18 = arith.constant 1 : index
    %c0_19 = arith.constant 0 : index
    %c0_20 = arith.constant 0 : index
    %14 = vector.load %arg5[%c0_17, %c1_18, %c0_19, %c0_20] : memref<2x7x22x16xf32, #tpu.memory_space<vmem>>, vector<1x1x22x16xf32>
    %15 = vector.shape_cast %14 : vector<1x1x22x16xf32> to vector<22x16xf32>
    %16 = vector.shape_cast %13 : vector<22x16xf32> to vector<1x1x22x16xf32>
    tpu.vector_store %arg5[%c0_17, %c1_18, %c0_19, %c0_20], %16 {strides = array<i32>} : memref<2x7x22x16xf32, #tpu.memory_space<vmem>>, vector<1x1x22x16xf32>,
    %c0_21 = arith.constant 0 : index
    %c0_22 = arith.constant 0 : index
    %c2 = arith.constant 2 : index
    %17 = vector.load %arg4[%c0_21, %c0_22, %c2] : memref<2x22x22xf32, #tpu.memory_space<vmem>>, vector<1x22x16xf32>
    %18 = vector.shape_cast %17 : vector<1x22x16xf32> to vector<22x16xf32>
    %c0_23 = arith.constant 0 : index
    %c2_24 = arith.constant 2 : index
    %c0_25 = arith.constant 0 : index
    %c0_26 = arith.constant 0 : index
    %19 = vector.load %arg5[%c0_23, %c2_24, %c0_25, %c0_26] : memref<2x7x22x16xf32, #tpu.memory_space<vmem>>, vector<1x1x22x16xf32>
    %20 = vector.shape_cast %19 : vector<1x1x22x16xf32> to vector<22x16xf32>
    %21 = vector.shape_cast %18 : vector<22x16xf32> to vector<1x1x22x16xf32>
    tpu.vector_store %arg5[%c0_23, %c2_24, %c0_25, %c0_26], %21 {strides = array<i32>} : memref<2x7x22x16xf32, #tpu.memory_space<vmem>>, vector<1x1x22x16xf32>,
    %c0_27 = arith.constant 0 : index
    %c0_28 = arith.constant 0 : index
    %c3_29 = arith.constant 3 : index
    %22 = vector.load %arg4[%c0_27, %c0_28, %c3_29] : memref<2x22x22xf32, #tpu.memory_space<vmem>>, vector<1x22x16xf32>
    %23 = vector.shape_cast %22 : vector<1x22x16xf32> to vector<22x16xf32>
    %c0_30 = arith.constant 0 : index
    %c3_31 = arith.constant 3 : index
    %c0_32 = arith.constant 0 : index
    %c0_33 = arith.constant 0 : index
    %24 = vector.load %arg5[%c0_30, %c3_31, %c0_32, %c0_33] : memref<2x7x22x16xf32, #tpu.memory_space<vmem>>, vector<1x1x22x16xf32>
    %25 = vector.shape_cast %24 : vector<1x1x22x16xf32> to vector<22x16xf32>
    %26 = vector.shape_cast %23 : vector<22x16xf32> to vector<1x1x22x16xf32>
    tpu.vector_store %arg5[%c0_30, %c3_31, %c0_32, %c0_33], %26 {strides = array<i32>} : memref<2x7x22x16xf32, #tpu.memory_space<vmem>>, vector<1x1x22x16xf32>,
    %c0_34 = arith.constant 0 : index
    %c0_35 = arith.constant 0 : index
    %c4 = arith.constant 4 : index
    %27 = vector.load %arg4[%c0_34, %c0_35, %c4] : memref<2x22x22xf32, #tpu.memory_space<vmem>>, vector<1x22x16xf32>
    %28 = vector.shape_cast %27 : vector<1x22x16xf32> to vector<22x16xf32>
    %c0_36 = arith.constant 0 : index
    %c4_37 = arith.constant 4 : index
    %c0_38 = arith.constant 0 : index
    %c0_39 = arith.constant 0 : index
    %29 = vector.load %arg5[%c0_36, %c4_37, %c0_38, %c0_39] : memref<2x7x22x16xf32, #tpu.memory_space<vmem>>, vector<1x1x22x16xf32>
    %30 = vector.shape_cast %29 : vector<1x1x22x16xf32> to vector<22x16xf32>
    %31 = vector.shape_cast %28 : vector<22x16xf32> to vector<1x1x22x16xf32>
    tpu.vector_store %arg5[%c0_36, %c4_37, %c0_38, %c0_39], %31 {strides = array<i32>} : memref<2x7x22x16xf32, #tpu.memory_space<vmem>>, vector<1x1x22x16xf32>,
    %c0_40 = arith.constant 0 : index
    %c0_41 = arith.constant 0 : index
    %c5 = arith.constant 5 : index
    %32 = vector.load %arg4[%c0_40, %c0_41, %c5] : memref<2x22x22xf32, #tpu.memory_space<vmem>>, vector<1x22x16xf32>
    %33 = vector.shape_cast %32 : vector<1x22x16xf32> to vector<22x16xf32>
    %c0_42 = arith.constant 0 : index
    %c5_43 = arith.constant 5 : index
    %c0_44 = arith.constant 0 : index
    %c0_45 = arith.constant 0 : index
    %34 = vector.load %arg5[%c0_42, %c5_43, %c0_44, %c0_45] : memref<2x7x22x16xf32, #tpu.memory_space<vmem>>, vector<1x1x22x16xf32>
    %35 = vector.shape_cast %34 : vector<1x1x22x16xf32> to vector<22x16xf32>
    %36 = vector.shape_cast %33 : vector<22x16xf32> to vector<1x1x22x16xf32>
    tpu.vector_store %arg5[%c0_42, %c5_43, %c0_44, %c0_45], %36 {strides = array<i32>} : memref<2x7x22x16xf32, #tpu.memory_space<vmem>>, vector<1x1x22x16xf32>,
    %c0_46 = arith.constant 0 : index
    %c0_47 = arith.constant 0 : index
    %c6 = arith.constant 6 : index
    %37 = vector.load %arg4[%c0_46, %c0_47, %c6] : memref<2x22x22xf32, #tpu.memory_space<vmem>>, vector<1x22x16xf32>
    %38 = vector.shape_cast %37 : vector<1x22x16xf32> to vector<22x16xf32>
    %c0_48 = arith.constant 0 : index
    %c6_49 = arith.constant 6 : index
    %c0_50 = arith.constant 0 : index
    %c0_51 = arith.constant 0 : index
    %39 = vector.load %arg5[%c0_48, %c6_49, %c0_50, %c0_51] : memref<2x7x22x16xf32, #tpu.memory_space<vmem>>, vector<1x1x22x16xf32>
    %40 = vector.shape_cast %39 : vector<1x1x22x16xf32> to vector<22x16xf32>
    %41 = vector.shape_cast %38 : vector<22x16xf32> to vector<1x1x22x16xf32>
    tpu.vector_store %arg5[%c0_48, %c6_49, %c0_50, %c0_51], %41 {strides = array<i32>} : memref<2x7x22x16xf32, #tpu.memory_space<vmem>>, vector<1x1x22x16xf32>,
    %c0_52 = arith.constant 0 : index
    %c1_53 = arith.constant 1 : index
    %c0_54 = arith.constant 0 : index
    %c0_55 = arith.constant 0 : index
    %42 = vector.load %arg2[%c0_52, %c1_53, %c0_54, %c0_55] : memref<1x2x16x16xf32, #tpu.memory_space<vmem>>, vector<1x1x16x16xf32>
    %43 = vector.shape_cast %42 : vector<1x1x16x16xf32> to vector<16x16xf32>
    %c1_56 = arith.constant 1 : index
    %c3_57 = arith.constant 3 : index
    %c3_58 = arith.constant 3 : index
    %44 = vector.load %arg4[%c1_56, %c3_57, %c3_58] : memref<2x22x22xf32, #tpu.memory_space<vmem>>, vector<1x16x16xf32>
    %45 = vector.shape_cast %44 : vector<1x16x16xf32> to vector<16x16xf32>
    %46 = vector.shape_cast %43 : vector<16x16xf32> to vector<1x16x16xf32>
    tpu.vector_store %arg4[%c1_56, %c3_57, %c3_58], %46 {strides = array<i32>} : memref<2x22x22xf32, #tpu.memory_space<vmem>>, vector<1x16x16xf32>,
    %c1_59 = arith.constant 1 : index
    %c0_60 = arith.constant 0 : index
    %c0_61 = arith.constant 0 : index
    %47 = vector.load %arg4[%c1_59, %c0_60, %c0_61] : memref<2x22x22xf32, #tpu.memory_space<vmem>>, vector<1x22x16xf32>
    %48 = vector.shape_cast %47 : vector<1x22x16xf32> to vector<22x16xf32>
    %c1_62 = arith.constant 1 : index
    %c0_63 = arith.constant 0 : index
    %c0_64 = arith.constant 0 : index
    %c0_65 = arith.constant 0 : index
    %49 = vector.load %arg5[%c1_62, %c0_63, %c0_64, %c0_65] : memref<2x7x22x16xf32, #tpu.memory_space<vmem>>, vector<1x1x22x16xf32>
    %50 = vector.shape_cast %49 : vector<1x1x22x16xf32> to vector<22x16xf32>
    %51 = vector.shape_cast %48 : vector<22x16xf32> to vector<1x1x22x16xf32>
    tpu.vector_store %arg5[%c1_62, %c0_63, %c0_64, %c0_65], %51 {strides = array<i32>} : memref<2x7x22x16xf32, #tpu.memory_space<vmem>>, vector<1x1x22x16xf32>,
    %c1_66 = arith.constant 1 : index
    %c0_67 = arith.constant 0 : index
    %c1_68 = arith.constant 1 : index
    %52 = vector.load %arg4[%c1_66, %c0_67, %c1_68] : memref<2x22x22xf32, #tpu.memory_space<vmem>>, vector<1x22x16xf32>
    %53 = vector.shape_cast %52 : vector<1x22x16xf32> to vector<22x16xf32>
    %c1_69 = arith.constant 1 : index
    %c1_70 = arith.constant 1 : index
    %c0_71 = arith.constant 0 : index
    %c0_72 = arith.constant 0 : index
    %54 = vector.load %arg5[%c1_69, %c1_70, %c0_71, %c0_72] : memref<2x7x22x16xf32, #tpu.memory_space<vmem>>, vector<1x1x22x16xf32>
    %55 = vector.shape_cast %54 : vector<1x1x22x16xf32> to vector<22x16xf32>
    %56 = vector.shape_cast %53 : vector<22x16xf32> to vector<1x1x22x16xf32>
    tpu.vector_store %arg5[%c1_69, %c1_70, %c0_71, %c0_72], %56 {strides = array<i32>} : memref<2x7x22x16xf32, #tpu.memory_space<vmem>>, vector<1x1x22x16xf32>,
    %c1_73 = arith.constant 1 : index
    %c0_74 = arith.constant 0 : index
    %c2_75 = arith.constant 2 : index
    %57 = vector.load %arg4[%c1_73, %c0_74, %c2_75] : memref<2x22x22xf32, #tpu.memory_space<vmem>>, vector<1x22x16xf32>
    %58 = vector.shape_cast %57 : vector<1x22x16xf32> to vector<22x16xf32>
    %c1_76 = arith.constant 1 : index
    %c2_77 = arith.constant 2 : index
    %c0_78 = arith.constant 0 : index
    %c0_79 = arith.constant 0 : index
    %59 = vector.load %arg5[%c1_76, %c2_77, %c0_78, %c0_79] : memref<2x7x22x16xf32, #tpu.memory_space<vmem>>, vector<1x1x22x16xf32>
    %60 = vector.shape_cast %59 : vector<1x1x22x16xf32> to vector<22x16xf32>
    %61 = vector.shape_cast %58 : vector<22x16xf32> to vector<1x1x22x16xf32>
    tpu.vector_store %arg5[%c1_76, %c2_77, %c0_78, %c0_79], %61 {strides = array<i32>} : memref<2x7x22x16xf32, #tpu.memory_space<vmem>>, vector<1x1x22x16xf32>,
    %c1_80 = arith.constant 1 : index
    %c0_81 = arith.constant 0 : index
    %c3_82 = arith.constant 3 : index
    %62 = vector.load %arg4[%c1_80, %c0_81, %c3_82] : memref<2x22x22xf32, #tpu.memory_space<vmem>>, vector<1x22x16xf32>
    %63 = vector.shape_cast %62 : vector<1x22x16xf32> to vector<22x16xf32>
    %c1_83 = arith.constant 1 : index
    %c3_84 = arith.constant 3 : index
    %c0_85 = arith.constant 0 : index
    %c0_86 = arith.constant 0 : index
    %64 = vector.load %arg5[%c1_83, %c3_84, %c0_85, %c0_86] : memref<2x7x22x16xf32, #tpu.memory_space<vmem>>, vector<1x1x22x16xf32>
    %65 = vector.shape_cast %64 : vector<1x1x22x16xf32> to vector<22x16xf32>
    %66 = vector.shape_cast %63 : vector<22x16xf32> to vector<1x1x22x16xf32>
    tpu.vector_store %arg5[%c1_83, %c3_84, %c0_85, %c0_86], %66 {strides = array<i32>} : memref<2x7x22x16xf32, #tpu.memory_space<vmem>>, vector<1x1x22x16xf32>,
    %c1_87 = arith.constant 1 : index
    %c0_88 = arith.constant 0 : index
    %c4_89 = arith.constant 4 : index
    %67 = vector.load %arg4[%c1_87, %c0_88, %c4_89] : memref<2x22x22xf32, #tpu.memory_space<vmem>>, vector<1x22x16xf32>
    %68 = vector.shape_cast %67 : vector<1x22x16xf32> to vector<22x16xf32>
    %c1_90 = arith.constant 1 : index
    %c4_91 = arith.constant 4 : index
    %c0_92 = arith.constant 0 : index
    %c0_93 = arith.constant 0 : index
    %69 = vector.load %arg5[%c1_90, %c4_91, %c0_92, %c0_93] : memref<2x7x22x16xf32, #tpu.memory_space<vmem>>, vector<1x1x22x16xf32>
    %70 = vector.shape_cast %69 : vector<1x1x22x16xf32> to vector<22x16xf32>
    %71 = vector.shape_cast %68 : vector<22x16xf32> to vector<1x1x22x16xf32>
    tpu.vector_store %arg5[%c1_90, %c4_91, %c0_92, %c0_93], %71 {strides = array<i32>} : memref<2x7x22x16xf32, #tpu.memory_space<vmem>>, vector<1x1x22x16xf32>,
    %c1_94 = arith.constant 1 : index
    %c0_95 = arith.constant 0 : index
    %c5_96 = arith.constant 5 : index
    %72 = vector.load %arg4[%c1_94, %c0_95, %c5_96] : memref<2x22x22xf32, #tpu.memory_space<vmem>>, vector<1x22x16xf32>
    %73 = vector.shape_cast %72 : vector<1x22x16xf32> to vector<22x16xf32>
    %c1_97 = arith.constant 1 : index
    %c5_98 = arith.constant 5 : index
    %c0_99 = arith.constant 0 : index
    %c0_100 = arith.constant 0 : index
    %74 = vector.load %arg5[%c1_97, %c5_98, %c0_99, %c0_100] : memref<2x7x22x16xf32, #tpu.memory_space<vmem>>, vector<1x1x22x16xf32>
    %75 = vector.shape_cast %74 : vector<1x1x22x16xf32> to vector<22x16xf32>
    %76 = vector.shape_cast %73 : vector<22x16xf32> to vector<1x1x22x16xf32>
    tpu.vector_store %arg5[%c1_97, %c5_98, %c0_99, %c0_100], %76 {strides = array<i32>} : memref<2x7x22x16xf32, #tpu.memory_space<vmem>>, vector<1x1x22x16xf32>,
    %c1_101 = arith.constant 1 : index
    %c0_102 = arith.constant 0 : index
    %c6_103 = arith.constant 6 : index
    %77 = vector.load %arg4[%c1_101, %c0_102, %c6_103] : memref<2x22x22xf32, #tpu.memory_space<vmem>>, vector<1x22x16xf32>
    %78 = vector.shape_cast %77 : vector<1x22x16xf32> to vector<22x16xf32>
    %c1_104 = arith.constant 1 : index
    %c6_105 = arith.constant 6 : index
    %c0_106 = arith.constant 0 : index
    %c0_107 = arith.constant 0 : index
    %79 = vector.load %arg5[%c1_104, %c6_105, %c0_106, %c0_107] : memref<2x7x22x16xf32, #tpu.memory_space<vmem>>, vector<1x1x22x16xf32>
    %80 = vector.shape_cast %79 : vector<1x1x22x16xf32> to vector<22x16xf32>
    %81 = vector.shape_cast %78 : vector<22x16xf32> to vector<1x1x22x16xf32>
    tpu.vector_store %arg5[%c1_104, %c6_105, %c0_106, %c0_107], %81 {strides = array<i32>} : memref<2x7x22x16xf32, #tpu.memory_space<vmem>>, vector<1x1x22x16xf32>,
    %c0_108 = arith.constant 0 : index
    %c0_109 = arith.constant 0 : index
    %c0_110 = arith.constant 0 : index
    %c0_111 = arith.constant 0 : index
    %82 = vector.load %arg5[%c0_108, %c0_109, %c0_110, %c0_111] : memref<2x7x22x16xf32, #tpu.memory_space<vmem>>, vector<1x1x16x16xf32>
    %83 = vector.shape_cast %82 : vector<1x1x16x16xf32> to vector<16x16xf32>
    %c0_112 = arith.constant 0 : index
    %c0_113 = arith.constant 0 : index
    %84 = memref.load %arg1[%c0_112, %c0_113] : memref<2x49xf32, #tpu.memory_space<smem>>
    %85 = vector.broadcast %84 : f32 to vector<16x16xf32>
    %86 = arith.mulf %83, %85 : vector<16x16xf32>
    %c0_114 = arith.constant 0 : index
    %c1_115 = arith.constant 1 : index
    %c0_116 = arith.constant 0 : index
    %c0_117 = arith.constant 0 : index
    %87 = vector.load %arg5[%c0_114, %c1_115, %c0_116, %c0_117] : memref<2x7x22x16xf32, #tpu.memory_space<vmem>>, vector<1x1x16x16xf32>
    %88 = vector.shape_cast %87 : vector<1x1x16x16xf32> to vector<16x16xf32>
    %c0_118 = arith.constant 0 : index
    %c1_119 = arith.constant 1 : index
    %89 = memref.load %arg1[%c0_118, %c1_119] : memref<2x49xf32, #tpu.memory_space<smem>>
    %90 = vector.broadcast %89 : f32 to vector<16x16xf32>
    %91 = arith.mulf %88, %90 : vector<16x16xf32>
    %92 = arith.addf %86, %91 : vector<16x16xf32>
    %c0_120 = arith.constant 0 : index
    %c2_121 = arith.constant 2 : index
    %c0_122 = arith.constant 0 : index
    %c0_123 = arith.constant 0 : index
    %93 = vector.load %arg5[%c0_120, %c2_121, %c0_122, %c0_123] : memref<2x7x22x16xf32, #tpu.memory_space<vmem>>, vector<1x1x16x16xf32>
    %94 = vector.shape_cast %93 : vector<1x1x16x16xf32> to vector<16x16xf32>
    %c0_124 = arith.constant 0 : index
    %c2_125 = arith.constant 2 : index
    %95 = memref.load %arg1[%c0_124, %c2_125] : memref<2x49xf32, #tpu.memory_space<smem>>
    %96 = vector.broadcast %95 : f32 to vector<16x16xf32>
    %97 = arith.mulf %94, %96 : vector<16x16xf32>
    %98 = arith.addf %92, %97 : vector<16x16xf32>
    %c0_126 = arith.constant 0 : index
    %c3_127 = arith.constant 3 : index
    %c0_128 = arith.constant 0 : index
    %c0_129 = arith.constant 0 : index
    %99 = vector.load %arg5[%c0_126, %c3_127, %c0_128, %c0_129] : memref<2x7x22x16xf32, #tpu.memory_space<vmem>>, vector<1x1x16x16xf32>
    %100 = vector.shape_cast %99 : vector<1x1x16x16xf32> to vector<16x16xf32>
    %c0_130 = arith.constant 0 : index
    %c3_131 = arith.constant 3 : index
    %101 = memref.load %arg1[%c0_130, %c3_131] : memref<2x49xf32, #tpu.memory_space<smem>>
    %102 = vector.broadcast %101 : f32 to vector<16x16xf32>
    %103 = arith.mulf %100, %102 : vector<16x16xf32>
    %104 = arith.addf %98, %103 : vector<16x16xf32>
    %c0_132 = arith.constant 0 : index
    %c4_133 = arith.constant 4 : index
    %c0_134 = arith.constant 0 : index
    %c0_135 = arith.constant 0 : index
    %105 = vector.load %arg5[%c0_132, %c4_133, %c0_134, %c0_135] : memref<2x7x22x16xf32, #tpu.memory_space<vmem>>, vector<1x1x16x16xf32>
    %106 = vector.shape_cast %105 : vector<1x1x16x16xf32> to vector<16x16xf32>
    %c0_136 = arith.constant 0 : index
    %c4_137 = arith.constant 4 : index
    %107 = memref.load %arg1[%c0_136, %c4_137] : memref<2x49xf32, #tpu.memory_space<smem>>
    %108 = vector.broadcast %107 : f32 to vector<16x16xf32>
    %109 = arith.mulf %106, %108 : vector<16x16xf32>
    %110 = arith.addf %104, %109 : vector<16x16xf32>
    %c0_138 = arith.constant 0 : index
    %c5_139 = arith.constant 5 : index
    %c0_140 = arith.constant 0 : index
    %c0_141 = arith.constant 0 : index
    %111 = vector.load %arg5[%c0_138, %c5_139, %c0_140, %c0_141] : memref<2x7x22x16xf32, #tpu.memory_space<vmem>>, vector<1x1x16x16xf32>
    %112 = vector.shape_cast %111 : vector<1x1x16x16xf32> to vector<16x16xf32>
    %c0_142 = arith.constant 0 : index
    %c5_143 = arith.constant 5 : index
    %113 = memref.load %arg1[%c0_142, %c5_143] : memref<2x49xf32, #tpu.memory_space<smem>>
    %114 = vector.broadcast %113 : f32 to vector<16x16xf32>
    %115 = arith.mulf %112, %114 : vector<16x16xf32>
    %116 = arith.addf %110, %115 : vector<16x16xf32>
    %c0_144 = arith.constant 0 : index
    %c6_145 = arith.constant 6 : index
    %c0_146 = arith.constant 0 : index
    %c0_147 = arith.constant 0 : index
    %117 = vector.load %arg5[%c0_144, %c6_145, %c0_146, %c0_147] : memref<2x7x22x16xf32, #tpu.memory_space<vmem>>, vector<1x1x16x16xf32>
    %118 = vector.shape_cast %117 : vector<1x1x16x16xf32> to vector<16x16xf32>
    %c0_148 = arith.constant 0 : index
    %c6_149 = arith.constant 6 : index
    %119 = memref.load %arg1[%c0_148, %c6_149] : memref<2x49xf32, #tpu.memory_space<smem>>
    %120 = vector.broadcast %119 : f32 to vector<16x16xf32>
    %121 = arith.mulf %118, %120 : vector<16x16xf32>
    %122 = arith.addf %116, %121 : vector<16x16xf32>
    %c1_150 = arith.constant 1 : index
    %c0_151 = arith.constant 0 : index
    %c0_152 = arith.constant 0 : index
    %c0_153 = arith.constant 0 : index
    %123 = vector.load %arg5[%c1_150, %c0_151, %c0_152, %c0_153] : memref<2x7x22x16xf32, #tpu.memory_space<vmem>>, vector<1x1x16x16xf32>
    %124 = vector.shape_cast %123 : vector<1x1x16x16xf32> to vector<16x16xf32>
    %c1_154 = arith.constant 1 : index
    %c0_155 = arith.constant 0 : index
    %125 = memref.load %arg1[%c1_154, %c0_155] : memref<2x49xf32, #tpu.memory_space<smem>>
    %126 = vector.broadcast %125 : f32 to vector<16x16xf32>
    %127 = arith.mulf %124, %126 : vector<16x16xf32>
    %128 = arith.addf %122, %127 : vector<16x16xf32>
    %c1_156 = arith.constant 1 : index
    %c1_157 = arith.constant 1 : index
    %c0_158 = arith.constant 0 : index
    %c0_159 = arith.constant 0 : index
    %129 = vector.load %arg5[%c1_156, %c1_157, %c0_158, %c0_159] : memref<2x7x22x16xf32, #tpu.memory_space<vmem>>, vector<1x1x16x16xf32>
    %130 = vector.shape_cast %129 : vector<1x1x16x16xf32> to vector<16x16xf32>
    %c1_160 = arith.constant 1 : index
    %c1_161 = arith.constant 1 : index
    %131 = memref.load %arg1[%c1_160, %c1_161] : memref<2x49xf32, #tpu.memory_space<smem>>
    %132 = vector.broadcast %131 : f32 to vector<16x16xf32>
    %133 = arith.mulf %130, %132 : vector<16x16xf32>
    %134 = arith.addf %128, %133 : vector<16x16xf32>
    %c1_162 = arith.constant 1 : index
    %c2_163 = arith.constant 2 : index
    %c0_164 = arith.constant 0 : index
    %c0_165 = arith.constant 0 : index
    %135 = vector.load %arg5[%c1_162, %c2_163, %c0_164, %c0_165] : memref<2x7x22x16xf32, #tpu.memory_space<vmem>>, vector<1x1x16x16xf32>
    %136 = vector.shape_cast %135 : vector<1x1x16x16xf32> to vector<16x16xf32>
    %c1_166 = arith.constant 1 : index
    %c2_167 = arith.constant 2 : index
    %137 = memref.load %arg1[%c1_166, %c2_167] : memref<2x49xf32, #tpu.memory_space<smem>>
    %138 = vector.broadcast %137 : f32 to vector<16x16xf32>
    %139 = arith.mulf %136, %138 : vector<16x16xf32>
    %140 = arith.addf %134, %139 : vector<16x16xf32>
    %c1_168 = arith.constant 1 : index
    %c3_169 = arith.constant 3 : index
    %c0_170 = arith.constant 0 : index
    %c0_171 = arith.constant 0 : index
    %141 = vector.load %arg5[%c1_168, %c3_169, %c0_170, %c0_171] : memref<2x7x22x16xf32, #tpu.memory_space<vmem>>, vector<1x1x16x16xf32>
    %142 = vector.shape_cast %141 : vector<1x1x16x16xf32> to vector<16x16xf32>
    %c1_172 = arith.constant 1 : index
    %c3_173 = arith.constant 3 : index
    %143 = memref.load %arg1[%c1_172, %c3_173] : memref<2x49xf32, #tpu.memory_space<smem>>
    %144 = vector.broadcast %143 : f32 to vector<16x16xf32>
    %145 = arith.mulf %142, %144 : vector<16x16xf32>
    %146 = arith.addf %140, %145 : vector<16x16xf32>
    %c1_174 = arith.constant 1 : index
    %c4_175 = arith.constant 4 : index
    %c0_176 = arith.constant 0 : index
    %c0_177 = arith.constant 0 : index
    %147 = vector.load %arg5[%c1_174, %c4_175, %c0_176, %c0_177] : memref<2x7x22x16xf32, #tpu.memory_space<vmem>>, vector<1x1x16x16xf32>
    %148 = vector.shape_cast %147 : vector<1x1x16x16xf32> to vector<16x16xf32>
    %c1_178 = arith.constant 1 : index
    %c4_179 = arith.constant 4 : index
    %149 = memref.load %arg1[%c1_178, %c4_179] : memref<2x49xf32, #tpu.memory_space<smem>>
    %150 = vector.broadcast %149 : f32 to vector<16x16xf32>
    %151 = arith.mulf %148, %150 : vector<16x16xf32>
    %152 = arith.addf %146, %151 : vector<16x16xf32>
    %c1_180 = arith.constant 1 : index
    %c5_181 = arith.constant 5 : index
    %c0_182 = arith.constant 0 : index
    %c0_183 = arith.constant 0 : index
    %153 = vector.load %arg5[%c1_180, %c5_181, %c0_182, %c0_183] : memref<2x7x22x16xf32, #tpu.memory_space<vmem>>, vector<1x1x16x16xf32>
    %154 = vector.shape_cast %153 : vector<1x1x16x16xf32> to vector<16x16xf32>
    %c1_184 = arith.constant 1 : index
    %c5_185 = arith.constant 5 : index
    %155 = memref.load %arg1[%c1_184, %c5_185] : memref<2x49xf32, #tpu.memory_space<smem>>
    %156 = vector.broadcast %155 : f32 to vector<16x16xf32>
    %157 = arith.mulf %154, %156 : vector<16x16xf32>
    %158 = arith.addf %152, %157 : vector<16x16xf32>
    %c1_186 = arith.constant 1 : index
    %c6_187 = arith.constant 6 : index
    %c0_188 = arith.constant 0 : index
    %c0_189 = arith.constant 0 : index
    %159 = vector.load %arg5[%c1_186, %c6_187, %c0_188, %c0_189] : memref<2x7x22x16xf32, #tpu.memory_space<vmem>>, vector<1x1x16x16xf32>
    %160 = vector.shape_cast %159 : vector<1x1x16x16xf32> to vector<16x16xf32>
    %c1_190 = arith.constant 1 : index
    %c6_191 = arith.constant 6 : index
    %161 = memref.load %arg1[%c1_190, %c6_191] : memref<2x49xf32, #tpu.memory_space<smem>>
    %162 = vector.broadcast %161 : f32 to vector<16x16xf32>
    %163 = arith.mulf %160, %162 : vector<16x16xf32>
    %164 = arith.addf %158, %163 : vector<16x16xf32>
    %c0_192 = arith.constant 0 : index
    %c0_193 = arith.constant 0 : index
    %c1_194 = arith.constant 1 : index
    %c0_195 = arith.constant 0 : index
    %165 = vector.load %arg5[%c0_192, %c0_193, %c1_194, %c0_195] : memref<2x7x22x16xf32, #tpu.memory_space<vmem>>, vector<1x1x16x16xf32>
    %166 = vector.shape_cast %165 : vector<1x1x16x16xf32> to vector<16x16xf32>
    %c0_196 = arith.constant 0 : index
    %c7 = arith.constant 7 : index
    %167 = memref.load %arg1[%c0_196, %c7] : memref<2x49xf32, #tpu.memory_space<smem>>
    %168 = vector.broadcast %167 : f32 to vector<16x16xf32>
    %169 = arith.mulf %166, %168 : vector<16x16xf32>
    %c0_197 = arith.constant 0 : index
    %c1_198 = arith.constant 1 : index
    %c1_199 = arith.constant 1 : index
    %c0_200 = arith.constant 0 : index
    %170 = vector.load %arg5[%c0_197, %c1_198, %c1_199, %c0_200] : memref<2x7x22x16xf32, #tpu.memory_space<vmem>>, vector<1x1x16x16xf32>
    %171 = vector.shape_cast %170 : vector<1x1x16x16xf32> to vector<16x16xf32>
    %c0_201 = arith.constant 0 : index
    %c8 = arith.constant 8 : index
    %172 = memref.load %arg1[%c0_201, %c8] : memref<2x49xf32, #tpu.memory_space<smem>>
    %173 = vector.broadcast %172 : f32 to vector<16x16xf32>
    %174 = arith.mulf %171, %173 : vector<16x16xf32>
    %175 = arith.addf %169, %174 : vector<16x16xf32>
    %c0_202 = arith.constant 0 : index
    %c2_203 = arith.constant 2 : index
    %c1_204 = arith.constant 1 : index
    %c0_205 = arith.constant 0 : index
    %176 = vector.load %arg5[%c0_202, %c2_203, %c1_204, %c0_205] : memref<2x7x22x16xf32, #tpu.memory_space<vmem>>, vector<1x1x16x16xf32>
    %177 = vector.shape_cast %176 : vector<1x1x16x16xf32> to vector<16x16xf32>
    %c0_206 = arith.constant 0 : index
    %c9 = arith.constant 9 : index
    %178 = memref.load %arg1[%c0_206, %c9] : memref<2x49xf32, #tpu.memory_space<smem>>
    %179 = vector.broadcast %178 : f32 to vector<16x16xf32>
    %180 = arith.mulf %177, %179 : vector<16x16xf32>
    %181 = arith.addf %175, %180 : vector<16x16xf32>
    %c0_207 = arith.constant 0 : index
    %c3_208 = arith.constant 3 : index
    %c1_209 = arith.constant 1 : index
    %c0_210 = arith.constant 0 : index
    %182 = vector.load %arg5[%c0_207, %c3_208, %c1_209, %c0_210] : memref<2x7x22x16xf32, #tpu.memory_space<vmem>>, vector<1x1x16x16xf32>
    %183 = vector.shape_cast %182 : vector<1x1x16x16xf32> to vector<16x16xf32>
    %c0_211 = arith.constant 0 : index
    %c10 = arith.constant 10 : index
    %184 = memref.load %arg1[%c0_211, %c10] : memref<2x49xf32, #tpu.memory_space<smem>>
    %185 = vector.broadcast %184 : f32 to vector<16x16xf32>
    %186 = arith.mulf %183, %185 : vector<16x16xf32>
    %187 = arith.addf %181, %186 : vector<16x16xf32>
    %c0_212 = arith.constant 0 : index
    %c4_213 = arith.constant 4 : index
    %c1_214 = arith.constant 1 : index
    %c0_215 = arith.constant 0 : index
    %188 = vector.load %arg5[%c0_212, %c4_213, %c1_214, %c0_215] : memref<2x7x22x16xf32, #tpu.memory_space<vmem>>, vector<1x1x16x16xf32>
    %189 = vector.shape_cast %188 : vector<1x1x16x16xf32> to vector<16x16xf32>
    %c0_216 = arith.constant 0 : index
    %c11 = arith.constant 11 : index
    %190 = memref.load %arg1[%c0_216, %c11] : memref<2x49xf32, #tpu.memory_space<smem>>
    %191 = vector.broadcast %190 : f32 to vector<16x16xf32>
    %192 = arith.mulf %189, %191 : vector<16x16xf32>
    %193 = arith.addf %187, %192 : vector<16x16xf32>
    %c0_217 = arith.constant 0 : index
    %c5_218 = arith.constant 5 : index
    %c1_219 = arith.constant 1 : index
    %c0_220 = arith.constant 0 : index
    %194 = vector.load %arg5[%c0_217, %c5_218, %c1_219, %c0_220] : memref<2x7x22x16xf32, #tpu.memory_space<vmem>>, vector<1x1x16x16xf32>
    %195 = vector.shape_cast %194 : vector<1x1x16x16xf32> to vector<16x16xf32>
    %c0_221 = arith.constant 0 : index
    %c12 = arith.constant 12 : index
    %196 = memref.load %arg1[%c0_221, %c12] : memref<2x49xf32, #tpu.memory_space<smem>>
    %197 = vector.broadcast %196 : f32 to vector<16x16xf32>
    %198 = arith.mulf %195, %197 : vector<16x16xf32>
    %199 = arith.addf %193, %198 : vector<16x16xf32>
    %c0_222 = arith.constant 0 : index
    %c6_223 = arith.constant 6 : index
    %c1_224 = arith.constant 1 : index
    %c0_225 = arith.constant 0 : index
    %200 = vector.load %arg5[%c0_222, %c6_223, %c1_224, %c0_225] : memref<2x7x22x16xf32, #tpu.memory_space<vmem>>, vector<1x1x16x16xf32>
    %201 = vector.shape_cast %200 : vector<1x1x16x16xf32> to vector<16x16xf32>
    %c0_226 = arith.constant 0 : index
    %c13 = arith.constant 13 : index
    %202 = memref.load %arg1[%c0_226, %c13] : memref<2x49xf32, #tpu.memory_space<smem>>
    %203 = vector.broadcast %202 : f32 to vector<16x16xf32>
    %204 = arith.mulf %201, %203 : vector<16x16xf32>
    %205 = arith.addf %199, %204 : vector<16x16xf32>
    %c1_227 = arith.constant 1 : index
    %c0_228 = arith.constant 0 : index
    %c1_229 = arith.constant 1 : index
    %c0_230 = arith.constant 0 : index
    %206 = vector.load %arg5[%c1_227, %c0_228, %c1_229, %c0_230] : memref<2x7x22x16xf32, #tpu.memory_space<vmem>>, vector<1x1x16x16xf32>
    %207 = vector.shape_cast %206 : vector<1x1x16x16xf32> to vector<16x16xf32>
    %c1_231 = arith.constant 1 : index
    %c7_232 = arith.constant 7 : index
    %208 = memref.load %arg1[%c1_231, %c7_232] : memref<2x49xf32, #tpu.memory_space<smem>>
    %209 = vector.broadcast %208 : f32 to vector<16x16xf32>
    %210 = arith.mulf %207, %209 : vector<16x16xf32>
    %211 = arith.addf %205, %210 : vector<16x16xf32>
    %c1_233 = arith.constant 1 : index
    %c1_234 = arith.constant 1 : index
    %c1_235 = arith.constant 1 : index
    %c0_236 = arith.constant 0 : index
    %212 = vector.load %arg5[%c1_233, %c1_234, %c1_235, %c0_236] : memref<2x7x22x16xf32, #tpu.memory_space<vmem>>, vector<1x1x16x16xf32>
    %213 = vector.shape_cast %212 : vector<1x1x16x16xf32> to vector<16x16xf32>
    %c1_237 = arith.constant 1 : index
    %c8_238 = arith.constant 8 : index
    %214 = memref.load %arg1[%c1_237, %c8_238] : memref<2x49xf32, #tpu.memory_space<smem>>
    %215 = vector.broadcast %214 : f32 to vector<16x16xf32>
    %216 = arith.mulf %213, %215 : vector<16x16xf32>
    %217 = arith.addf %211, %216 : vector<16x16xf32>
    %c1_239 = arith.constant 1 : index
    %c2_240 = arith.constant 2 : index
    %c1_241 = arith.constant 1 : index
    %c0_242 = arith.constant 0 : index
    %218 = vector.load %arg5[%c1_239, %c2_240, %c1_241, %c0_242] : memref<2x7x22x16xf32, #tpu.memory_space<vmem>>, vector<1x1x16x16xf32>
    %219 = vector.shape_cast %218 : vector<1x1x16x16xf32> to vector<16x16xf32>
    %c1_243 = arith.constant 1 : index
    %c9_244 = arith.constant 9 : index
    %220 = memref.load %arg1[%c1_243, %c9_244] : memref<2x49xf32, #tpu.memory_space<smem>>
    %221 = vector.broadcast %220 : f32 to vector<16x16xf32>
    %222 = arith.mulf %219, %221 : vector<16x16xf32>
    %223 = arith.addf %217, %222 : vector<16x16xf32>
    %c1_245 = arith.constant 1 : index
    %c3_246 = arith.constant 3 : index
    %c1_247 = arith.constant 1 : index
    %c0_248 = arith.constant 0 : index
    %224 = vector.load %arg5[%c1_245, %c3_246, %c1_247, %c0_248] : memref<2x7x22x16xf32, #tpu.memory_space<vmem>>, vector<1x1x16x16xf32>
    %225 = vector.shape_cast %224 : vector<1x1x16x16xf32> to vector<16x16xf32>
    %c1_249 = arith.constant 1 : index
    %c10_250 = arith.constant 10 : index
    %226 = memref.load %arg1[%c1_249, %c10_250] : memref<2x49xf32, #tpu.memory_space<smem>>
    %227 = vector.broadcast %226 : f32 to vector<16x16xf32>
    %228 = arith.mulf %225, %227 : vector<16x16xf32>
    %229 = arith.addf %223, %228 : vector<16x16xf32>
    %c1_251 = arith.constant 1 : index
    %c4_252 = arith.constant 4 : index
    %c1_253 = arith.constant 1 : index
    %c0_254 = arith.constant 0 : index
    %230 = vector.load %arg5[%c1_251, %c4_252, %c1_253, %c0_254] : memref<2x7x22x16xf32, #tpu.memory_space<vmem>>, vector<1x1x16x16xf32>
    %231 = vector.shape_cast %230 : vector<1x1x16x16xf32> to vector<16x16xf32>
    %c1_255 = arith.constant 1 : index
    %c11_256 = arith.constant 11 : index
    %232 = memref.load %arg1[%c1_255, %c11_256] : memref<2x49xf32, #tpu.memory_space<smem>>
    %233 = vector.broadcast %232 : f32 to vector<16x16xf32>
    %234 = arith.mulf %231, %233 : vector<16x16xf32>
    %235 = arith.addf %229, %234 : vector<16x16xf32>
    %c1_257 = arith.constant 1 : index
    %c5_258 = arith.constant 5 : index
    %c1_259 = arith.constant 1 : index
    %c0_260 = arith.constant 0 : index
    %236 = vector.load %arg5[%c1_257, %c5_258, %c1_259, %c0_260] : memref<2x7x22x16xf32, #tpu.memory_space<vmem>>, vector<1x1x16x16xf32>
    %237 = vector.shape_cast %236 : vector<1x1x16x16xf32> to vector<16x16xf32>
    %c1_261 = arith.constant 1 : index
    %c12_262 = arith.constant 12 : index
    %238 = memref.load %arg1[%c1_261, %c12_262] : memref<2x49xf32, #tpu.memory_space<smem>>
    %239 = vector.broadcast %238 : f32 to vector<16x16xf32>
    %240 = arith.mulf %237, %239 : vector<16x16xf32>
    %241 = arith.addf %235, %240 : vector<16x16xf32>
    %c1_263 = arith.constant 1 : index
    %c6_264 = arith.constant 6 : index
    %c1_265 = arith.constant 1 : index
    %c0_266 = arith.constant 0 : index
    %242 = vector.load %arg5[%c1_263, %c6_264, %c1_265, %c0_266] : memref<2x7x22x16xf32, #tpu.memory_space<vmem>>, vector<1x1x16x16xf32>
    %243 = vector.shape_cast %242 : vector<1x1x16x16xf32> to vector<16x16xf32>
    %c1_267 = arith.constant 1 : index
    %c13_268 = arith.constant 13 : index
    %244 = memref.load %arg1[%c1_267, %c13_268] : memref<2x49xf32, #tpu.memory_space<smem>>
    %245 = vector.broadcast %244 : f32 to vector<16x16xf32>
    %246 = arith.mulf %243, %245 : vector<16x16xf32>
    %247 = arith.addf %241, %246 : vector<16x16xf32>
    %c0_269 = arith.constant 0 : index
    %c0_270 = arith.constant 0 : index
    %c2_271 = arith.constant 2 : index
    %c0_272 = arith.constant 0 : index
    %248 = vector.load %arg5[%c0_269, %c0_270, %c2_271, %c0_272] : memref<2x7x22x16xf32, #tpu.memory_space<vmem>>, vector<1x1x16x16xf32>
    %249 = vector.shape_cast %248 : vector<1x1x16x16xf32> to vector<16x16xf32>
    %c0_273 = arith.constant 0 : index
    %c14 = arith.constant 14 : index
    %250 = memref.load %arg1[%c0_273, %c14] : memref<2x49xf32, #tpu.memory_space<smem>>
    %251 = vector.broadcast %250 : f32 to vector<16x16xf32>
    %252 = arith.mulf %249, %251 : vector<16x16xf32>
    %c0_274 = arith.constant 0 : index
    %c1_275 = arith.constant 1 : index
    %c2_276 = arith.constant 2 : index
    %c0_277 = arith.constant 0 : index
    %253 = vector.load %arg5[%c0_274, %c1_275, %c2_276, %c0_277] : memref<2x7x22x16xf32, #tpu.memory_space<vmem>>, vector<1x1x16x16xf32>
    %254 = vector.shape_cast %253 : vector<1x1x16x16xf32> to vector<16x16xf32>
    %c0_278 = arith.constant 0 : index
    %c15 = arith.constant 15 : index
    %255 = memref.load %arg1[%c0_278, %c15] : memref<2x49xf32, #tpu.memory_space<smem>>
    %256 = vector.broadcast %255 : f32 to vector<16x16xf32>
    %257 = arith.mulf %254, %256 : vector<16x16xf32>
    %258 = arith.addf %252, %257 : vector<16x16xf32>
    %c0_279 = arith.constant 0 : index
    %c2_280 = arith.constant 2 : index
    %c2_281 = arith.constant 2 : index
    %c0_282 = arith.constant 0 : index
    %259 = vector.load %arg5[%c0_279, %c2_280, %c2_281, %c0_282] : memref<2x7x22x16xf32, #tpu.memory_space<vmem>>, vector<1x1x16x16xf32>
    %260 = vector.shape_cast %259 : vector<1x1x16x16xf32> to vector<16x16xf32>
    %c0_283 = arith.constant 0 : index
    %c16 = arith.constant 16 : index
    %261 = memref.load %arg1[%c0_283, %c16] : memref<2x49xf32, #tpu.memory_space<smem>>
    %262 = vector.broadcast %261 : f32 to vector<16x16xf32>
    %263 = arith.mulf %260, %262 : vector<16x16xf32>
    %264 = arith.addf %258, %263 : vector<16x16xf32>
    %c0_284 = arith.constant 0 : index
    %c3_285 = arith.constant 3 : index
    %c2_286 = arith.constant 2 : index
    %c0_287 = arith.constant 0 : index
    %265 = vector.load %arg5[%c0_284, %c3_285, %c2_286, %c0_287] : memref<2x7x22x16xf32, #tpu.memory_space<vmem>>, vector<1x1x16x16xf32>
    %266 = vector.shape_cast %265 : vector<1x1x16x16xf32> to vector<16x16xf32>
    %c0_288 = arith.constant 0 : index
    %c17 = arith.constant 17 : index
    %267 = memref.load %arg1[%c0_288, %c17] : memref<2x49xf32, #tpu.memory_space<smem>>
    %268 = vector.broadcast %267 : f32 to vector<16x16xf32>
    %269 = arith.mulf %266, %268 : vector<16x16xf32>
    %270 = arith.addf %264, %269 : vector<16x16xf32>
    %c0_289 = arith.constant 0 : index
    %c4_290 = arith.constant 4 : index
    %c2_291 = arith.constant 2 : index
    %c0_292 = arith.constant 0 : index
    %271 = vector.load %arg5[%c0_289, %c4_290, %c2_291, %c0_292] : memref<2x7x22x16xf32, #tpu.memory_space<vmem>>, vector<1x1x16x16xf32>
    %272 = vector.shape_cast %271 : vector<1x1x16x16xf32> to vector<16x16xf32>
    %c0_293 = arith.constant 0 : index
    %c18 = arith.constant 18 : index
    %273 = memref.load %arg1[%c0_293, %c18] : memref<2x49xf32, #tpu.memory_space<smem>>
    %274 = vector.broadcast %273 : f32 to vector<16x16xf32>
    %275 = arith.mulf %272, %274 : vector<16x16xf32>
    %276 = arith.addf %270, %275 : vector<16x16xf32>
    %c0_294 = arith.constant 0 : index
    %c5_295 = arith.constant 5 : index
    %c2_296 = arith.constant 2 : index
    %c0_297 = arith.constant 0 : index
    %277 = vector.load %arg5[%c0_294, %c5_295, %c2_296, %c0_297] : memref<2x7x22x16xf32, #tpu.memory_space<vmem>>, vector<1x1x16x16xf32>
    %278 = vector.shape_cast %277 : vector<1x1x16x16xf32> to vector<16x16xf32>
    %c0_298 = arith.constant 0 : index
    %c19 = arith.constant 19 : index
    %279 = memref.load %arg1[%c0_298, %c19] : memref<2x49xf32, #tpu.memory_space<smem>>
    %280 = vector.broadcast %279 : f32 to vector<16x16xf32>
    %281 = arith.mulf %278, %280 : vector<16x16xf32>
    %282 = arith.addf %276, %281 : vector<16x16xf32>
    %c0_299 = arith.constant 0 : index
    %c6_300 = arith.constant 6 : index
    %c2_301 = arith.constant 2 : index
    %c0_302 = arith.constant 0 : index
    %283 = vector.load %arg5[%c0_299, %c6_300, %c2_301, %c0_302] : memref<2x7x22x16xf32, #tpu.memory_space<vmem>>, vector<1x1x16x16xf32>
    %284 = vector.shape_cast %283 : vector<1x1x16x16xf32> to vector<16x16xf32>
    %c0_303 = arith.constant 0 : index
    %c20 = arith.constant 20 : index
    %285 = memref.load %arg1[%c0_303, %c20] : memref<2x49xf32, #tpu.memory_space<smem>>
    %286 = vector.broadcast %285 : f32 to vector<16x16xf32>
    %287 = arith.mulf %284, %286 : vector<16x16xf32>
    %288 = arith.addf %282, %287 : vector<16x16xf32>
    %c1_304 = arith.constant 1 : index
    %c0_305 = arith.constant 0 : index
    %c2_306 = arith.constant 2 : index
    %c0_307 = arith.constant 0 : index
    %289 = vector.load %arg5[%c1_304, %c0_305, %c2_306, %c0_307] : memref<2x7x22x16xf32, #tpu.memory_space<vmem>>, vector<1x1x16x16xf32>
    %290 = vector.shape_cast %289 : vector<1x1x16x16xf32> to vector<16x16xf32>
    %c1_308 = arith.constant 1 : index
    %c14_309 = arith.constant 14 : index
    %291 = memref.load %arg1[%c1_308, %c14_309] : memref<2x49xf32, #tpu.memory_space<smem>>
    %292 = vector.broadcast %291 : f32 to vector<16x16xf32>
    %293 = arith.mulf %290, %292 : vector<16x16xf32>
    %294 = arith.addf %288, %293 : vector<16x16xf32>
    %c1_310 = arith.constant 1 : index
    %c1_311 = arith.constant 1 : index
    %c2_312 = arith.constant 2 : index
    %c0_313 = arith.constant 0 : index
    %295 = vector.load %arg5[%c1_310, %c1_311, %c2_312, %c0_313] : memref<2x7x22x16xf32, #tpu.memory_space<vmem>>, vector<1x1x16x16xf32>
    %296 = vector.shape_cast %295 : vector<1x1x16x16xf32> to vector<16x16xf32>
    %c1_314 = arith.constant 1 : index
    %c15_315 = arith.constant 15 : index
    %297 = memref.load %arg1[%c1_314, %c15_315] : memref<2x49xf32, #tpu.memory_space<smem>>
    %298 = vector.broadcast %297 : f32 to vector<16x16xf32>
    %299 = arith.mulf %296, %298 : vector<16x16xf32>
    %300 = arith.addf %294, %299 : vector<16x16xf32>
    %c1_316 = arith.constant 1 : index
    %c2_317 = arith.constant 2 : index
    %c2_318 = arith.constant 2 : index
    %c0_319 = arith.constant 0 : index
    %301 = vector.load %arg5[%c1_316, %c2_317, %c2_318, %c0_319] : memref<2x7x22x16xf32, #tpu.memory_space<vmem>>, vector<1x1x16x16xf32>
    %302 = vector.shape_cast %301 : vector<1x1x16x16xf32> to vector<16x16xf32>
    %c1_320 = arith.constant 1 : index
    %c16_321 = arith.constant 16 : index
    %303 = memref.load %arg1[%c1_320, %c16_321] : memref<2x49xf32, #tpu.memory_space<smem>>
    %304 = vector.broadcast %303 : f32 to vector<16x16xf32>
    %305 = arith.mulf %302, %304 : vector<16x16xf32>
    %306 = arith.addf %300, %305 : vector<16x16xf32>
    %c1_322 = arith.constant 1 : index
    %c3_323 = arith.constant 3 : index
    %c2_324 = arith.constant 2 : index
    %c0_325 = arith.constant 0 : index
    %307 = vector.load %arg5[%c1_322, %c3_323, %c2_324, %c0_325] : memref<2x7x22x16xf32, #tpu.memory_space<vmem>>, vector<1x1x16x16xf32>
    %308 = vector.shape_cast %307 : vector<1x1x16x16xf32> to vector<16x16xf32>
    %c1_326 = arith.constant 1 : index
    %c17_327 = arith.constant 17 : index
    %309 = memref.load %arg1[%c1_326, %c17_327] : memref<2x49xf32, #tpu.memory_space<smem>>
    %310 = vector.broadcast %309 : f32 to vector<16x16xf32>
    %311 = arith.mulf %308, %310 : vector<16x16xf32>
    %312 = arith.addf %306, %311 : vector<16x16xf32>
    %c1_328 = arith.constant 1 : index
    %c4_329 = arith.constant 4 : index
    %c2_330 = arith.constant 2 : index
    %c0_331 = arith.constant 0 : index
    %313 = vector.load %arg5[%c1_328, %c4_329, %c2_330, %c0_331] : memref<2x7x22x16xf32, #tpu.memory_space<vmem>>, vector<1x1x16x16xf32>
    %314 = vector.shape_cast %313 : vector<1x1x16x16xf32> to vector<16x16xf32>
    %c1_332 = arith.constant 1 : index
    %c18_333 = arith.constant 18 : index
    %315 = memref.load %arg1[%c1_332, %c18_333] : memref<2x49xf32, #tpu.memory_space<smem>>
    %316 = vector.broadcast %315 : f32 to vector<16x16xf32>
    %317 = arith.mulf %314, %316 : vector<16x16xf32>
    %318 = arith.addf %312, %317 : vector<16x16xf32>
    %c1_334 = arith.constant 1 : index
    %c5_335 = arith.constant 5 : index
    %c2_336 = arith.constant 2 : index
    %c0_337 = arith.constant 0 : index
    %319 = vector.load %arg5[%c1_334, %c5_335, %c2_336, %c0_337] : memref<2x7x22x16xf32, #tpu.memory_space<vmem>>, vector<1x1x16x16xf32>
    %320 = vector.shape_cast %319 : vector<1x1x16x16xf32> to vector<16x16xf32>
    %c1_338 = arith.constant 1 : index
    %c19_339 = arith.constant 19 : index
    %321 = memref.load %arg1[%c1_338, %c19_339] : memref<2x49xf32, #tpu.memory_space<smem>>
    %322 = vector.broadcast %321 : f32 to vector<16x16xf32>
    %323 = arith.mulf %320, %322 : vector<16x16xf32>
    %324 = arith.addf %318, %323 : vector<16x16xf32>
    %c1_340 = arith.constant 1 : index
    %c6_341 = arith.constant 6 : index
    %c2_342 = arith.constant 2 : index
    %c0_343 = arith.constant 0 : index
    %325 = vector.load %arg5[%c1_340, %c6_341, %c2_342, %c0_343] : memref<2x7x22x16xf32, #tpu.memory_space<vmem>>, vector<1x1x16x16xf32>
    %326 = vector.shape_cast %325 : vector<1x1x16x16xf32> to vector<16x16xf32>
    %c1_344 = arith.constant 1 : index
    %c20_345 = arith.constant 20 : index
    %327 = memref.load %arg1[%c1_344, %c20_345] : memref<2x49xf32, #tpu.memory_space<smem>>
    %328 = vector.broadcast %327 : f32 to vector<16x16xf32>
    %329 = arith.mulf %326, %328 : vector<16x16xf32>
    %330 = arith.addf %324, %329 : vector<16x16xf32>
    %c0_346 = arith.constant 0 : index
    %c0_347 = arith.constant 0 : index
    %c3_348 = arith.constant 3 : index
    %c0_349 = arith.constant 0 : index
    %331 = vector.load %arg5[%c0_346, %c0_347, %c3_348, %c0_349] : memref<2x7x22x16xf32, #tpu.memory_space<vmem>>, vector<1x1x16x16xf32>
    %332 = vector.shape_cast %331 : vector<1x1x16x16xf32> to vector<16x16xf32>
    %c0_350 = arith.constant 0 : index
    %c21 = arith.constant 21 : index
    %333 = memref.load %arg1[%c0_350, %c21] : memref<2x49xf32, #tpu.memory_space<smem>>
    %334 = vector.broadcast %333 : f32 to vector<16x16xf32>
    %335 = arith.mulf %332, %334 : vector<16x16xf32>
    %c0_351 = arith.constant 0 : index
    %c1_352 = arith.constant 1 : index
    %c3_353 = arith.constant 3 : index
    %c0_354 = arith.constant 0 : index
    %336 = vector.load %arg5[%c0_351, %c1_352, %c3_353, %c0_354] : memref<2x7x22x16xf32, #tpu.memory_space<vmem>>, vector<1x1x16x16xf32>
    %337 = vector.shape_cast %336 : vector<1x1x16x16xf32> to vector<16x16xf32>
    %c0_355 = arith.constant 0 : index
    %c22 = arith.constant 22 : index
    %338 = memref.load %arg1[%c0_355, %c22] : memref<2x49xf32, #tpu.memory_space<smem>>
    %339 = vector.broadcast %338 : f32 to vector<16x16xf32>
    %340 = arith.mulf %337, %339 : vector<16x16xf32>
    %341 = arith.addf %335, %340 : vector<16x16xf32>
    %c0_356 = arith.constant 0 : index
    %c2_357 = arith.constant 2 : index
    %c3_358 = arith.constant 3 : index
    %c0_359 = arith.constant 0 : index
    %342 = vector.load %arg5[%c0_356, %c2_357, %c3_358, %c0_359] : memref<2x7x22x16xf32, #tpu.memory_space<vmem>>, vector<1x1x16x16xf32>
    %343 = vector.shape_cast %342 : vector<1x1x16x16xf32> to vector<16x16xf32>
    %c0_360 = arith.constant 0 : index
    %c23 = arith.constant 23 : index
    %344 = memref.load %arg1[%c0_360, %c23] : memref<2x49xf32, #tpu.memory_space<smem>>
    %345 = vector.broadcast %344 : f32 to vector<16x16xf32>
    %346 = arith.mulf %343, %345 : vector<16x16xf32>
    %347 = arith.addf %341, %346 : vector<16x16xf32>
    %c0_361 = arith.constant 0 : index
    %c3_362 = arith.constant 3 : index
    %c3_363 = arith.constant 3 : index
    %c0_364 = arith.constant 0 : index
    %348 = vector.load %arg5[%c0_361, %c3_362, %c3_363, %c0_364] : memref<2x7x22x16xf32, #tpu.memory_space<vmem>>, vector<1x1x16x16xf32>
    %349 = vector.shape_cast %348 : vector<1x1x16x16xf32> to vector<16x16xf32>
    %c0_365 = arith.constant 0 : index
    %c24 = arith.constant 24 : index
    %350 = memref.load %arg1[%c0_365, %c24] : memref<2x49xf32, #tpu.memory_space<smem>>
    %351 = vector.broadcast %350 : f32 to vector<16x16xf32>
    %352 = arith.mulf %349, %351 : vector<16x16xf32>
    %353 = arith.addf %347, %352 : vector<16x16xf32>
    %c0_366 = arith.constant 0 : index
    %c4_367 = arith.constant 4 : index
    %c3_368 = arith.constant 3 : index
    %c0_369 = arith.constant 0 : index
    %354 = vector.load %arg5[%c0_366, %c4_367, %c3_368, %c0_369] : memref<2x7x22x16xf32, #tpu.memory_space<vmem>>, vector<1x1x16x16xf32>
    %355 = vector.shape_cast %354 : vector<1x1x16x16xf32> to vector<16x16xf32>
    %c0_370 = arith.constant 0 : index
    %c25 = arith.constant 25 : index
    %356 = memref.load %arg1[%c0_370, %c25] : memref<2x49xf32, #tpu.memory_space<smem>>
    %357 = vector.broadcast %356 : f32 to vector<16x16xf32>
    %358 = arith.mulf %355, %357 : vector<16x16xf32>
    %359 = arith.addf %353, %358 : vector<16x16xf32>
    %c0_371 = arith.constant 0 : index
    %c5_372 = arith.constant 5 : index
    %c3_373 = arith.constant 3 : index
    %c0_374 = arith.constant 0 : index
    %360 = vector.load %arg5[%c0_371, %c5_372, %c3_373, %c0_374] : memref<2x7x22x16xf32, #tpu.memory_space<vmem>>, vector<1x1x16x16xf32>
    %361 = vector.shape_cast %360 : vector<1x1x16x16xf32> to vector<16x16xf32>
    %c0_375 = arith.constant 0 : index
    %c26 = arith.constant 26 : index
    %362 = memref.load %arg1[%c0_375, %c26] : memref<2x49xf32, #tpu.memory_space<smem>>
    %363 = vector.broadcast %362 : f32 to vector<16x16xf32>
    %364 = arith.mulf %361, %363 : vector<16x16xf32>
    %365 = arith.addf %359, %364 : vector<16x16xf32>
    %c0_376 = arith.constant 0 : index
    %c6_377 = arith.constant 6 : index
    %c3_378 = arith.constant 3 : index
    %c0_379 = arith.constant 0 : index
    %366 = vector.load %arg5[%c0_376, %c6_377, %c3_378, %c0_379] : memref<2x7x22x16xf32, #tpu.memory_space<vmem>>, vector<1x1x16x16xf32>
    %367 = vector.shape_cast %366 : vector<1x1x16x16xf32> to vector<16x16xf32>
    %c0_380 = arith.constant 0 : index
    %c27 = arith.constant 27 : index
    %368 = memref.load %arg1[%c0_380, %c27] : memref<2x49xf32, #tpu.memory_space<smem>>
    %369 = vector.broadcast %368 : f32 to vector<16x16xf32>
    %370 = arith.mulf %367, %369 : vector<16x16xf32>
    %371 = arith.addf %365, %370 : vector<16x16xf32>
    %c1_381 = arith.constant 1 : index
    %c0_382 = arith.constant 0 : index
    %c3_383 = arith.constant 3 : index
    %c0_384 = arith.constant 0 : index
    %372 = vector.load %arg5[%c1_381, %c0_382, %c3_383, %c0_384] : memref<2x7x22x16xf32, #tpu.memory_space<vmem>>, vector<1x1x16x16xf32>
    %373 = vector.shape_cast %372 : vector<1x1x16x16xf32> to vector<16x16xf32>
    %c1_385 = arith.constant 1 : index
    %c21_386 = arith.constant 21 : index
    %374 = memref.load %arg1[%c1_385, %c21_386] : memref<2x49xf32, #tpu.memory_space<smem>>
    %375 = vector.broadcast %374 : f32 to vector<16x16xf32>
    %376 = arith.mulf %373, %375 : vector<16x16xf32>
    %377 = arith.addf %371, %376 : vector<16x16xf32>
    %c1_387 = arith.constant 1 : index
    %c1_388 = arith.constant 1 : index
    %c3_389 = arith.constant 3 : index
    %c0_390 = arith.constant 0 : index
    %378 = vector.load %arg5[%c1_387, %c1_388, %c3_389, %c0_390] : memref<2x7x22x16xf32, #tpu.memory_space<vmem>>, vector<1x1x16x16xf32>
    %379 = vector.shape_cast %378 : vector<1x1x16x16xf32> to vector<16x16xf32>
    %c1_391 = arith.constant 1 : index
    %c22_392 = arith.constant 22 : index
    %380 = memref.load %arg1[%c1_391, %c22_392] : memref<2x49xf32, #tpu.memory_space<smem>>
    %381 = vector.broadcast %380 : f32 to vector<16x16xf32>
    %382 = arith.mulf %379, %381 : vector<16x16xf32>
    %383 = arith.addf %377, %382 : vector<16x16xf32>
    %c1_393 = arith.constant 1 : index
    %c2_394 = arith.constant 2 : index
    %c3_395 = arith.constant 3 : index
    %c0_396 = arith.constant 0 : index
    %384 = vector.load %arg5[%c1_393, %c2_394, %c3_395, %c0_396] : memref<2x7x22x16xf32, #tpu.memory_space<vmem>>, vector<1x1x16x16xf32>
    %385 = vector.shape_cast %384 : vector<1x1x16x16xf32> to vector<16x16xf32>
    %c1_397 = arith.constant 1 : index
    %c23_398 = arith.constant 23 : index
    %386 = memref.load %arg1[%c1_397, %c23_398] : memref<2x49xf32, #tpu.memory_space<smem>>
    %387 = vector.broadcast %386 : f32 to vector<16x16xf32>
    %388 = arith.mulf %385, %387 : vector<16x16xf32>
    %389 = arith.addf %383, %388 : vector<16x16xf32>
    %c1_399 = arith.constant 1 : index
    %c3_400 = arith.constant 3 : index
    %c3_401 = arith.constant 3 : index
    %c0_402 = arith.constant 0 : index
    %390 = vector.load %arg5[%c1_399, %c3_400, %c3_401, %c0_402] : memref<2x7x22x16xf32, #tpu.memory_space<vmem>>, vector<1x1x16x16xf32>
    %391 = vector.shape_cast %390 : vector<1x1x16x16xf32> to vector<16x16xf32>
    %c1_403 = arith.constant 1 : index
    %c24_404 = arith.constant 24 : index
    %392 = memref.load %arg1[%c1_403, %c24_404] : memref<2x49xf32, #tpu.memory_space<smem>>
    %393 = vector.broadcast %392 : f32 to vector<16x16xf32>
    %394 = arith.mulf %391, %393 : vector<16x16xf32>
    %395 = arith.addf %389, %394 : vector<16x16xf32>
    %c1_405 = arith.constant 1 : index
    %c4_406 = arith.constant 4 : index
    %c3_407 = arith.constant 3 : index
    %c0_408 = arith.constant 0 : index
    %396 = vector.load %arg5[%c1_405, %c4_406, %c3_407, %c0_408] : memref<2x7x22x16xf32, #tpu.memory_space<vmem>>, vector<1x1x16x16xf32>
    %397 = vector.shape_cast %396 : vector<1x1x16x16xf32> to vector<16x16xf32>
    %c1_409 = arith.constant 1 : index
    %c25_410 = arith.constant 25 : index
    %398 = memref.load %arg1[%c1_409, %c25_410] : memref<2x49xf32, #tpu.memory_space<smem>>
    %399 = vector.broadcast %398 : f32 to vector<16x16xf32>
    %400 = arith.mulf %397, %399 : vector<16x16xf32>
    %401 = arith.addf %395, %400 : vector<16x16xf32>
    %c1_411 = arith.constant 1 : index
    %c5_412 = arith.constant 5 : index
    %c3_413 = arith.constant 3 : index
    %c0_414 = arith.constant 0 : index
    %402 = vector.load %arg5[%c1_411, %c5_412, %c3_413, %c0_414] : memref<2x7x22x16xf32, #tpu.memory_space<vmem>>, vector<1x1x16x16xf32>
    %403 = vector.shape_cast %402 : vector<1x1x16x16xf32> to vector<16x16xf32>
    %c1_415 = arith.constant 1 : index
    %c26_416 = arith.constant 26 : index
    %404 = memref.load %arg1[%c1_415, %c26_416] : memref<2x49xf32, #tpu.memory_space<smem>>
    %405 = vector.broadcast %404 : f32 to vector<16x16xf32>
    %406 = arith.mulf %403, %405 : vector<16x16xf32>
    %407 = arith.addf %401, %406 : vector<16x16xf32>
    %c1_417 = arith.constant 1 : index
    %c6_418 = arith.constant 6 : index
    %c3_419 = arith.constant 3 : index
    %c0_420 = arith.constant 0 : index
    %408 = vector.load %arg5[%c1_417, %c6_418, %c3_419, %c0_420] : memref<2x7x22x16xf32, #tpu.memory_space<vmem>>, vector<1x1x16x16xf32>
    %409 = vector.shape_cast %408 : vector<1x1x16x16xf32> to vector<16x16xf32>
    %c1_421 = arith.constant 1 : index
    %c27_422 = arith.constant 27 : index
    %410 = memref.load %arg1[%c1_421, %c27_422] : memref<2x49xf32, #tpu.memory_space<smem>>
    %411 = vector.broadcast %410 : f32 to vector<16x16xf32>
    %412 = arith.mulf %409, %411 : vector<16x16xf32>
    %413 = arith.addf %407, %412 : vector<16x16xf32>
    %c0_423 = arith.constant 0 : index
    %c0_424 = arith.constant 0 : index
    %c4_425 = arith.constant 4 : index
    %c0_426 = arith.constant 0 : index
    %414 = vector.load %arg5[%c0_423, %c0_424, %c4_425, %c0_426] : memref<2x7x22x16xf32, #tpu.memory_space<vmem>>, vector<1x1x16x16xf32>
    %415 = vector.shape_cast %414 : vector<1x1x16x16xf32> to vector<16x16xf32>
    %c0_427 = arith.constant 0 : index
    %c28 = arith.constant 28 : index
    %416 = memref.load %arg1[%c0_427, %c28] : memref<2x49xf32, #tpu.memory_space<smem>>
    %417 = vector.broadcast %416 : f32 to vector<16x16xf32>
    %418 = arith.mulf %415, %417 : vector<16x16xf32>
    %c0_428 = arith.constant 0 : index
    %c1_429 = arith.constant 1 : index
    %c4_430 = arith.constant 4 : index
    %c0_431 = arith.constant 0 : index
    %419 = vector.load %arg5[%c0_428, %c1_429, %c4_430, %c0_431] : memref<2x7x22x16xf32, #tpu.memory_space<vmem>>, vector<1x1x16x16xf32>
    %420 = vector.shape_cast %419 : vector<1x1x16x16xf32> to vector<16x16xf32>
    %c0_432 = arith.constant 0 : index
    %c29 = arith.constant 29 : index
    %421 = memref.load %arg1[%c0_432, %c29] : memref<2x49xf32, #tpu.memory_space<smem>>
    %422 = vector.broadcast %421 : f32 to vector<16x16xf32>
    %423 = arith.mulf %420, %422 : vector<16x16xf32>
    %424 = arith.addf %418, %423 : vector<16x16xf32>
    %c0_433 = arith.constant 0 : index
    %c2_434 = arith.constant 2 : index
    %c4_435 = arith.constant 4 : index
    %c0_436 = arith.constant 0 : index
    %425 = vector.load %arg5[%c0_433, %c2_434, %c4_435, %c0_436] : memref<2x7x22x16xf32, #tpu.memory_space<vmem>>, vector<1x1x16x16xf32>
    %426 = vector.shape_cast %425 : vector<1x1x16x16xf32> to vector<16x16xf32>
    %c0_437 = arith.constant 0 : index
    %c30 = arith.constant 30 : index
    %427 = memref.load %arg1[%c0_437, %c30] : memref<2x49xf32, #tpu.memory_space<smem>>
    %428 = vector.broadcast %427 : f32 to vector<16x16xf32>
    %429 = arith.mulf %426, %428 : vector<16x16xf32>
    %430 = arith.addf %424, %429 : vector<16x16xf32>
    %c0_438 = arith.constant 0 : index
    %c3_439 = arith.constant 3 : index
    %c4_440 = arith.constant 4 : index
    %c0_441 = arith.constant 0 : index
    %431 = vector.load %arg5[%c0_438, %c3_439, %c4_440, %c0_441] : memref<2x7x22x16xf32, #tpu.memory_space<vmem>>, vector<1x1x16x16xf32>
    %432 = vector.shape_cast %431 : vector<1x1x16x16xf32> to vector<16x16xf32>
    %c0_442 = arith.constant 0 : index
    %c31 = arith.constant 31 : index
    %433 = memref.load %arg1[%c0_442, %c31] : memref<2x49xf32, #tpu.memory_space<smem>>
    %434 = vector.broadcast %433 : f32 to vector<16x16xf32>
    %435 = arith.mulf %432, %434 : vector<16x16xf32>
    %436 = arith.addf %430, %435 : vector<16x16xf32>
    %c0_443 = arith.constant 0 : index
    %c4_444 = arith.constant 4 : index
    %c4_445 = arith.constant 4 : index
    %c0_446 = arith.constant 0 : index
    %437 = vector.load %arg5[%c0_443, %c4_444, %c4_445, %c0_446] : memref<2x7x22x16xf32, #tpu.memory_space<vmem>>, vector<1x1x16x16xf32>
    %438 = vector.shape_cast %437 : vector<1x1x16x16xf32> to vector<16x16xf32>
    %c0_447 = arith.constant 0 : index
    %c32 = arith.constant 32 : index
    %439 = memref.load %arg1[%c0_447, %c32] : memref<2x49xf32, #tpu.memory_space<smem>>
    %440 = vector.broadcast %439 : f32 to vector<16x16xf32>
    %441 = arith.mulf %438, %440 : vector<16x16xf32>
    %442 = arith.addf %436, %441 : vector<16x16xf32>
    %c0_448 = arith.constant 0 : index
    %c5_449 = arith.constant 5 : index
    %c4_450 = arith.constant 4 : index
    %c0_451 = arith.constant 0 : index
    %443 = vector.load %arg5[%c0_448, %c5_449, %c4_450, %c0_451] : memref<2x7x22x16xf32, #tpu.memory_space<vmem>>, vector<1x1x16x16xf32>
    %444 = vector.shape_cast %443 : vector<1x1x16x16xf32> to vector<16x16xf32>
    %c0_452 = arith.constant 0 : index
    %c33 = arith.constant 33 : index
    %445 = memref.load %arg1[%c0_452, %c33] : memref<2x49xf32, #tpu.memory_space<smem>>
    %446 = vector.broadcast %445 : f32 to vector<16x16xf32>
    %447 = arith.mulf %444, %446 : vector<16x16xf32>
    %448 = arith.addf %442, %447 : vector<16x16xf32>
    %c0_453 = arith.constant 0 : index
    %c6_454 = arith.constant 6 : index
    %c4_455 = arith.constant 4 : index
    %c0_456 = arith.constant 0 : index
    %449 = vector.load %arg5[%c0_453, %c6_454, %c4_455, %c0_456] : memref<2x7x22x16xf32, #tpu.memory_space<vmem>>, vector<1x1x16x16xf32>
    %450 = vector.shape_cast %449 : vector<1x1x16x16xf32> to vector<16x16xf32>
    %c0_457 = arith.constant 0 : index
    %c34 = arith.constant 34 : index
    %451 = memref.load %arg1[%c0_457, %c34] : memref<2x49xf32, #tpu.memory_space<smem>>
    %452 = vector.broadcast %451 : f32 to vector<16x16xf32>
    %453 = arith.mulf %450, %452 : vector<16x16xf32>
    %454 = arith.addf %448, %453 : vector<16x16xf32>
    %c1_458 = arith.constant 1 : index
    %c0_459 = arith.constant 0 : index
    %c4_460 = arith.constant 4 : index
    %c0_461 = arith.constant 0 : index
    %455 = vector.load %arg5[%c1_458, %c0_459, %c4_460, %c0_461] : memref<2x7x22x16xf32, #tpu.memory_space<vmem>>, vector<1x1x16x16xf32>
    %456 = vector.shape_cast %455 : vector<1x1x16x16xf32> to vector<16x16xf32>
    %c1_462 = arith.constant 1 : index
    %c28_463 = arith.constant 28 : index
    %457 = memref.load %arg1[%c1_462, %c28_463] : memref<2x49xf32, #tpu.memory_space<smem>>
    %458 = vector.broadcast %457 : f32 to vector<16x16xf32>
    %459 = arith.mulf %456, %458 : vector<16x16xf32>
    %460 = arith.addf %454, %459 : vector<16x16xf32>
    %c1_464 = arith.constant 1 : index
    %c1_465 = arith.constant 1 : index
    %c4_466 = arith.constant 4 : index
    %c0_467 = arith.constant 0 : index
    %461 = vector.load %arg5[%c1_464, %c1_465, %c4_466, %c0_467] : memref<2x7x22x16xf32, #tpu.memory_space<vmem>>, vector<1x1x16x16xf32>
    %462 = vector.shape_cast %461 : vector<1x1x16x16xf32> to vector<16x16xf32>
    %c1_468 = arith.constant 1 : index
    %c29_469 = arith.constant 29 : index
    %463 = memref.load %arg1[%c1_468, %c29_469] : memref<2x49xf32, #tpu.memory_space<smem>>
    %464 = vector.broadcast %463 : f32 to vector<16x16xf32>
    %465 = arith.mulf %462, %464 : vector<16x16xf32>
    %466 = arith.addf %460, %465 : vector<16x16xf32>
    %c1_470 = arith.constant 1 : index
    %c2_471 = arith.constant 2 : index
    %c4_472 = arith.constant 4 : index
    %c0_473 = arith.constant 0 : index
    %467 = vector.load %arg5[%c1_470, %c2_471, %c4_472, %c0_473] : memref<2x7x22x16xf32, #tpu.memory_space<vmem>>, vector<1x1x16x16xf32>
    %468 = vector.shape_cast %467 : vector<1x1x16x16xf32> to vector<16x16xf32>
    %c1_474 = arith.constant 1 : index
    %c30_475 = arith.constant 30 : index
    %469 = memref.load %arg1[%c1_474, %c30_475] : memref<2x49xf32, #tpu.memory_space<smem>>
    %470 = vector.broadcast %469 : f32 to vector<16x16xf32>
    %471 = arith.mulf %468, %470 : vector<16x16xf32>
    %472 = arith.addf %466, %471 : vector<16x16xf32>
    %c1_476 = arith.constant 1 : index
    %c3_477 = arith.constant 3 : index
    %c4_478 = arith.constant 4 : index
    %c0_479 = arith.constant 0 : index
    %473 = vector.load %arg5[%c1_476, %c3_477, %c4_478, %c0_479] : memref<2x7x22x16xf32, #tpu.memory_space<vmem>>, vector<1x1x16x16xf32>
    %474 = vector.shape_cast %473 : vector<1x1x16x16xf32> to vector<16x16xf32>
    %c1_480 = arith.constant 1 : index
    %c31_481 = arith.constant 31 : index
    %475 = memref.load %arg1[%c1_480, %c31_481] : memref<2x49xf32, #tpu.memory_space<smem>>
    %476 = vector.broadcast %475 : f32 to vector<16x16xf32>
    %477 = arith.mulf %474, %476 : vector<16x16xf32>
    %478 = arith.addf %472, %477 : vector<16x16xf32>
    %c1_482 = arith.constant 1 : index
    %c4_483 = arith.constant 4 : index
    %c4_484 = arith.constant 4 : index
    %c0_485 = arith.constant 0 : index
    %479 = vector.load %arg5[%c1_482, %c4_483, %c4_484, %c0_485] : memref<2x7x22x16xf32, #tpu.memory_space<vmem>>, vector<1x1x16x16xf32>
    %480 = vector.shape_cast %479 : vector<1x1x16x16xf32> to vector<16x16xf32>
    %c1_486 = arith.constant 1 : index
    %c32_487 = arith.constant 32 : index
    %481 = memref.load %arg1[%c1_486, %c32_487] : memref<2x49xf32, #tpu.memory_space<smem>>
    %482 = vector.broadcast %481 : f32 to vector<16x16xf32>
    %483 = arith.mulf %480, %482 : vector<16x16xf32>
    %484 = arith.addf %478, %483 : vector<16x16xf32>
    %c1_488 = arith.constant 1 : index
    %c5_489 = arith.constant 5 : index
    %c4_490 = arith.constant 4 : index
    %c0_491 = arith.constant 0 : index
    %485 = vector.load %arg5[%c1_488, %c5_489, %c4_490, %c0_491] : memref<2x7x22x16xf32, #tpu.memory_space<vmem>>, vector<1x1x16x16xf32>
    %486 = vector.shape_cast %485 : vector<1x1x16x16xf32> to vector<16x16xf32>
    %c1_492 = arith.constant 1 : index
    %c33_493 = arith.constant 33 : index
    %487 = memref.load %arg1[%c1_492, %c33_493] : memref<2x49xf32, #tpu.memory_space<smem>>
    %488 = vector.broadcast %487 : f32 to vector<16x16xf32>
    %489 = arith.mulf %486, %488 : vector<16x16xf32>
    %490 = arith.addf %484, %489 : vector<16x16xf32>
    %c1_494 = arith.constant 1 : index
    %c6_495 = arith.constant 6 : index
    %c4_496 = arith.constant 4 : index
    %c0_497 = arith.constant 0 : index
    %491 = vector.load %arg5[%c1_494, %c6_495, %c4_496, %c0_497] : memref<2x7x22x16xf32, #tpu.memory_space<vmem>>, vector<1x1x16x16xf32>
    %492 = vector.shape_cast %491 : vector<1x1x16x16xf32> to vector<16x16xf32>
    %c1_498 = arith.constant 1 : index
    %c34_499 = arith.constant 34 : index
    %493 = memref.load %arg1[%c1_498, %c34_499] : memref<2x49xf32, #tpu.memory_space<smem>>
    %494 = vector.broadcast %493 : f32 to vector<16x16xf32>
    %495 = arith.mulf %492, %494 : vector<16x16xf32>
    %496 = arith.addf %490, %495 : vector<16x16xf32>
    %c0_500 = arith.constant 0 : index
    %c0_501 = arith.constant 0 : index
    %c5_502 = arith.constant 5 : index
    %c0_503 = arith.constant 0 : index
    %497 = vector.load %arg5[%c0_500, %c0_501, %c5_502, %c0_503] : memref<2x7x22x16xf32, #tpu.memory_space<vmem>>, vector<1x1x16x16xf32>
    %498 = vector.shape_cast %497 : vector<1x1x16x16xf32> to vector<16x16xf32>
    %c0_504 = arith.constant 0 : index
    %c35 = arith.constant 35 : index
    %499 = memref.load %arg1[%c0_504, %c35] : memref<2x49xf32, #tpu.memory_space<smem>>
    %500 = vector.broadcast %499 : f32 to vector<16x16xf32>
    %501 = arith.mulf %498, %500 : vector<16x16xf32>
    %c0_505 = arith.constant 0 : index
    %c1_506 = arith.constant 1 : index
    %c5_507 = arith.constant 5 : index
    %c0_508 = arith.constant 0 : index
    %502 = vector.load %arg5[%c0_505, %c1_506, %c5_507, %c0_508] : memref<2x7x22x16xf32, #tpu.memory_space<vmem>>, vector<1x1x16x16xf32>
    %503 = vector.shape_cast %502 : vector<1x1x16x16xf32> to vector<16x16xf32>
    %c0_509 = arith.constant 0 : index
    %c36 = arith.constant 36 : index
    %504 = memref.load %arg1[%c0_509, %c36] : memref<2x49xf32, #tpu.memory_space<smem>>
    %505 = vector.broadcast %504 : f32 to vector<16x16xf32>
    %506 = arith.mulf %503, %505 : vector<16x16xf32>
    %507 = arith.addf %501, %506 : vector<16x16xf32>
    %c0_510 = arith.constant 0 : index
    %c2_511 = arith.constant 2 : index
    %c5_512 = arith.constant 5 : index
    %c0_513 = arith.constant 0 : index
    %508 = vector.load %arg5[%c0_510, %c2_511, %c5_512, %c0_513] : memref<2x7x22x16xf32, #tpu.memory_space<vmem>>, vector<1x1x16x16xf32>
    %509 = vector.shape_cast %508 : vector<1x1x16x16xf32> to vector<16x16xf32>
    %c0_514 = arith.constant 0 : index
    %c37 = arith.constant 37 : index
    %510 = memref.load %arg1[%c0_514, %c37] : memref<2x49xf32, #tpu.memory_space<smem>>
    %511 = vector.broadcast %510 : f32 to vector<16x16xf32>
    %512 = arith.mulf %509, %511 : vector<16x16xf32>
    %513 = arith.addf %507, %512 : vector<16x16xf32>
    %c0_515 = arith.constant 0 : index
    %c3_516 = arith.constant 3 : index
    %c5_517 = arith.constant 5 : index
    %c0_518 = arith.constant 0 : index
    %514 = vector.load %arg5[%c0_515, %c3_516, %c5_517, %c0_518] : memref<2x7x22x16xf32, #tpu.memory_space<vmem>>, vector<1x1x16x16xf32>
    %515 = vector.shape_cast %514 : vector<1x1x16x16xf32> to vector<16x16xf32>
    %c0_519 = arith.constant 0 : index
    %c38 = arith.constant 38 : index
    %516 = memref.load %arg1[%c0_519, %c38] : memref<2x49xf32, #tpu.memory_space<smem>>
    %517 = vector.broadcast %516 : f32 to vector<16x16xf32>
    %518 = arith.mulf %515, %517 : vector<16x16xf32>
    %519 = arith.addf %513, %518 : vector<16x16xf32>
    %c0_520 = arith.constant 0 : index
    %c4_521 = arith.constant 4 : index
    %c5_522 = arith.constant 5 : index
    %c0_523 = arith.constant 0 : index
    %520 = vector.load %arg5[%c0_520, %c4_521, %c5_522, %c0_523] : memref<2x7x22x16xf32, #tpu.memory_space<vmem>>, vector<1x1x16x16xf32>
    %521 = vector.shape_cast %520 : vector<1x1x16x16xf32> to vector<16x16xf32>
    %c0_524 = arith.constant 0 : index
    %c39 = arith.constant 39 : index
    %522 = memref.load %arg1[%c0_524, %c39] : memref<2x49xf32, #tpu.memory_space<smem>>
    %523 = vector.broadcast %522 : f32 to vector<16x16xf32>
    %524 = arith.mulf %521, %523 : vector<16x16xf32>
    %525 = arith.addf %519, %524 : vector<16x16xf32>
    %c0_525 = arith.constant 0 : index
    %c5_526 = arith.constant 5 : index
    %c5_527 = arith.constant 5 : index
    %c0_528 = arith.constant 0 : index
    %526 = vector.load %arg5[%c0_525, %c5_526, %c5_527, %c0_528] : memref<2x7x22x16xf32, #tpu.memory_space<vmem>>, vector<1x1x16x16xf32>
    %527 = vector.shape_cast %526 : vector<1x1x16x16xf32> to vector<16x16xf32>
    %c0_529 = arith.constant 0 : index
    %c40 = arith.constant 40 : index
    %528 = memref.load %arg1[%c0_529, %c40] : memref<2x49xf32, #tpu.memory_space<smem>>
    %529 = vector.broadcast %528 : f32 to vector<16x16xf32>
    %530 = arith.mulf %527, %529 : vector<16x16xf32>
    %531 = arith.addf %525, %530 : vector<16x16xf32>
    %c0_530 = arith.constant 0 : index
    %c6_531 = arith.constant 6 : index
    %c5_532 = arith.constant 5 : index
    %c0_533 = arith.constant 0 : index
    %532 = vector.load %arg5[%c0_530, %c6_531, %c5_532, %c0_533] : memref<2x7x22x16xf32, #tpu.memory_space<vmem>>, vector<1x1x16x16xf32>
    %533 = vector.shape_cast %532 : vector<1x1x16x16xf32> to vector<16x16xf32>
    %c0_534 = arith.constant 0 : index
    %c41 = arith.constant 41 : index
    %534 = memref.load %arg1[%c0_534, %c41] : memref<2x49xf32, #tpu.memory_space<smem>>
    %535 = vector.broadcast %534 : f32 to vector<16x16xf32>
    %536 = arith.mulf %533, %535 : vector<16x16xf32>
    %537 = arith.addf %531, %536 : vector<16x16xf32>
    %c1_535 = arith.constant 1 : index
    %c0_536 = arith.constant 0 : index
    %c5_537 = arith.constant 5 : index
    %c0_538 = arith.constant 0 : index
    %538 = vector.load %arg5[%c1_535, %c0_536, %c5_537, %c0_538] : memref<2x7x22x16xf32, #tpu.memory_space<vmem>>, vector<1x1x16x16xf32>
    %539 = vector.shape_cast %538 : vector<1x1x16x16xf32> to vector<16x16xf32>
    %c1_539 = arith.constant 1 : index
    %c35_540 = arith.constant 35 : index
    %540 = memref.load %arg1[%c1_539, %c35_540] : memref<2x49xf32, #tpu.memory_space<smem>>
    %541 = vector.broadcast %540 : f32 to vector<16x16xf32>
    %542 = arith.mulf %539, %541 : vector<16x16xf32>
    %543 = arith.addf %537, %542 : vector<16x16xf32>
    %c1_541 = arith.constant 1 : index
    %c1_542 = arith.constant 1 : index
    %c5_543 = arith.constant 5 : index
    %c0_544 = arith.constant 0 : index
    %544 = vector.load %arg5[%c1_541, %c1_542, %c5_543, %c0_544] : memref<2x7x22x16xf32, #tpu.memory_space<vmem>>, vector<1x1x16x16xf32>
    %545 = vector.shape_cast %544 : vector<1x1x16x16xf32> to vector<16x16xf32>
    %c1_545 = arith.constant 1 : index
    %c36_546 = arith.constant 36 : index
    %546 = memref.load %arg1[%c1_545, %c36_546] : memref<2x49xf32, #tpu.memory_space<smem>>
    %547 = vector.broadcast %546 : f32 to vector<16x16xf32>
    %548 = arith.mulf %545, %547 : vector<16x16xf32>
    %549 = arith.addf %543, %548 : vector<16x16xf32>
    %c1_547 = arith.constant 1 : index
    %c2_548 = arith.constant 2 : index
    %c5_549 = arith.constant 5 : index
    %c0_550 = arith.constant 0 : index
    %550 = vector.load %arg5[%c1_547, %c2_548, %c5_549, %c0_550] : memref<2x7x22x16xf32, #tpu.memory_space<vmem>>, vector<1x1x16x16xf32>
    %551 = vector.shape_cast %550 : vector<1x1x16x16xf32> to vector<16x16xf32>
    %c1_551 = arith.constant 1 : index
    %c37_552 = arith.constant 37 : index
    %552 = memref.load %arg1[%c1_551, %c37_552] : memref<2x49xf32, #tpu.memory_space<smem>>
    %553 = vector.broadcast %552 : f32 to vector<16x16xf32>
    %554 = arith.mulf %551, %553 : vector<16x16xf32>
    %555 = arith.addf %549, %554 : vector<16x16xf32>
    %c1_553 = arith.constant 1 : index
    %c3_554 = arith.constant 3 : index
    %c5_555 = arith.constant 5 : index
    %c0_556 = arith.constant 0 : index
    %556 = vector.load %arg5[%c1_553, %c3_554, %c5_555, %c0_556] : memref<2x7x22x16xf32, #tpu.memory_space<vmem>>, vector<1x1x16x16xf32>
    %557 = vector.shape_cast %556 : vector<1x1x16x16xf32> to vector<16x16xf32>
    %c1_557 = arith.constant 1 : index
    %c38_558 = arith.constant 38 : index
    %558 = memref.load %arg1[%c1_557, %c38_558] : memref<2x49xf32, #tpu.memory_space<smem>>
    %559 = vector.broadcast %558 : f32 to vector<16x16xf32>
    %560 = arith.mulf %557, %559 : vector<16x16xf32>
    %561 = arith.addf %555, %560 : vector<16x16xf32>
    %c1_559 = arith.constant 1 : index
    %c4_560 = arith.constant 4 : index
    %c5_561 = arith.constant 5 : index
    %c0_562 = arith.constant 0 : index
    %562 = vector.load %arg5[%c1_559, %c4_560, %c5_561, %c0_562] : memref<2x7x22x16xf32, #tpu.memory_space<vmem>>, vector<1x1x16x16xf32>
    %563 = vector.shape_cast %562 : vector<1x1x16x16xf32> to vector<16x16xf32>
    %c1_563 = arith.constant 1 : index
    %c39_564 = arith.constant 39 : index
    %564 = memref.load %arg1[%c1_563, %c39_564] : memref<2x49xf32, #tpu.memory_space<smem>>
    %565 = vector.broadcast %564 : f32 to vector<16x16xf32>
    %566 = arith.mulf %563, %565 : vector<16x16xf32>
    %567 = arith.addf %561, %566 : vector<16x16xf32>
    %c1_565 = arith.constant 1 : index
    %c5_566 = arith.constant 5 : index
    %c5_567 = arith.constant 5 : index
    %c0_568 = arith.constant 0 : index
    %568 = vector.load %arg5[%c1_565, %c5_566, %c5_567, %c0_568] : memref<2x7x22x16xf32, #tpu.memory_space<vmem>>, vector<1x1x16x16xf32>
    %569 = vector.shape_cast %568 : vector<1x1x16x16xf32> to vector<16x16xf32>
    %c1_569 = arith.constant 1 : index
    %c40_570 = arith.constant 40 : index
    %570 = memref.load %arg1[%c1_569, %c40_570] : memref<2x49xf32, #tpu.memory_space<smem>>
    %571 = vector.broadcast %570 : f32 to vector<16x16xf32>
    %572 = arith.mulf %569, %571 : vector<16x16xf32>
    %573 = arith.addf %567, %572 : vector<16x16xf32>
    %c1_571 = arith.constant 1 : index
    %c6_572 = arith.constant 6 : index
    %c5_573 = arith.constant 5 : index
    %c0_574 = arith.constant 0 : index
    %574 = vector.load %arg5[%c1_571, %c6_572, %c5_573, %c0_574] : memref<2x7x22x16xf32, #tpu.memory_space<vmem>>, vector<1x1x16x16xf32>
    %575 = vector.shape_cast %574 : vector<1x1x16x16xf32> to vector<16x16xf32>
    %c1_575 = arith.constant 1 : index
    %c41_576 = arith.constant 41 : index
    %576 = memref.load %arg1[%c1_575, %c41_576] : memref<2x49xf32, #tpu.memory_space<smem>>
    %577 = vector.broadcast %576 : f32 to vector<16x16xf32>
    %578 = arith.mulf %575, %577 : vector<16x16xf32>
    %579 = arith.addf %573, %578 : vector<16x16xf32>
    %c0_577 = arith.constant 0 : index
    %c0_578 = arith.constant 0 : index
    %c6_579 = arith.constant 6 : index
    %c0_580 = arith.constant 0 : index
    %580 = vector.load %arg5[%c0_577, %c0_578, %c6_579, %c0_580] : memref<2x7x22x16xf32, #tpu.memory_space<vmem>>, vector<1x1x16x16xf32>
    %581 = vector.shape_cast %580 : vector<1x1x16x16xf32> to vector<16x16xf32>
    %c0_581 = arith.constant 0 : index
    %c42 = arith.constant 42 : index
    %582 = memref.load %arg1[%c0_581, %c42] : memref<2x49xf32, #tpu.memory_space<smem>>
    %583 = vector.broadcast %582 : f32 to vector<16x16xf32>
    %584 = arith.mulf %581, %583 : vector<16x16xf32>
    %c0_582 = arith.constant 0 : index
    %c1_583 = arith.constant 1 : index
    %c6_584 = arith.constant 6 : index
    %c0_585 = arith.constant 0 : index
    %585 = vector.load %arg5[%c0_582, %c1_583, %c6_584, %c0_585] : memref<2x7x22x16xf32, #tpu.memory_space<vmem>>, vector<1x1x16x16xf32>
    %586 = vector.shape_cast %585 : vector<1x1x16x16xf32> to vector<16x16xf32>
    %c0_586 = arith.constant 0 : index
    %c43 = arith.constant 43 : index
    %587 = memref.load %arg1[%c0_586, %c43] : memref<2x49xf32, #tpu.memory_space<smem>>
    %588 = vector.broadcast %587 : f32 to vector<16x16xf32>
    %589 = arith.mulf %586, %588 : vector<16x16xf32>
    %590 = arith.addf %584, %589 : vector<16x16xf32>
    %c0_587 = arith.constant 0 : index
    %c2_588 = arith.constant 2 : index
    %c6_589 = arith.constant 6 : index
    %c0_590 = arith.constant 0 : index
    %591 = vector.load %arg5[%c0_587, %c2_588, %c6_589, %c0_590] : memref<2x7x22x16xf32, #tpu.memory_space<vmem>>, vector<1x1x16x16xf32>
    %592 = vector.shape_cast %591 : vector<1x1x16x16xf32> to vector<16x16xf32>
    %c0_591 = arith.constant 0 : index
    %c44 = arith.constant 44 : index
    %593 = memref.load %arg1[%c0_591, %c44] : memref<2x49xf32, #tpu.memory_space<smem>>
    %594 = vector.broadcast %593 : f32 to vector<16x16xf32>
    %595 = arith.mulf %592, %594 : vector<16x16xf32>
    %596 = arith.addf %590, %595 : vector<16x16xf32>
    %c0_592 = arith.constant 0 : index
    %c3_593 = arith.constant 3 : index
    %c6_594 = arith.constant 6 : index
    %c0_595 = arith.constant 0 : index
    %597 = vector.load %arg5[%c0_592, %c3_593, %c6_594, %c0_595] : memref<2x7x22x16xf32, #tpu.memory_space<vmem>>, vector<1x1x16x16xf32>
    %598 = vector.shape_cast %597 : vector<1x1x16x16xf32> to vector<16x16xf32>
    %c0_596 = arith.constant 0 : index
    %c45 = arith.constant 45 : index
    %599 = memref.load %arg1[%c0_596, %c45] : memref<2x49xf32, #tpu.memory_space<smem>>
    %600 = vector.broadcast %599 : f32 to vector<16x16xf32>
    %601 = arith.mulf %598, %600 : vector<16x16xf32>
    %602 = arith.addf %596, %601 : vector<16x16xf32>
    %c0_597 = arith.constant 0 : index
    %c4_598 = arith.constant 4 : index
    %c6_599 = arith.constant 6 : index
    %c0_600 = arith.constant 0 : index
    %603 = vector.load %arg5[%c0_597, %c4_598, %c6_599, %c0_600] : memref<2x7x22x16xf32, #tpu.memory_space<vmem>>, vector<1x1x16x16xf32>
    %604 = vector.shape_cast %603 : vector<1x1x16x16xf32> to vector<16x16xf32>
    %c0_601 = arith.constant 0 : index
    %c46 = arith.constant 46 : index
    %605 = memref.load %arg1[%c0_601, %c46] : memref<2x49xf32, #tpu.memory_space<smem>>
    %606 = vector.broadcast %605 : f32 to vector<16x16xf32>
    %607 = arith.mulf %604, %606 : vector<16x16xf32>
    %608 = arith.addf %602, %607 : vector<16x16xf32>
    %c0_602 = arith.constant 0 : index
    %c5_603 = arith.constant 5 : index
    %c6_604 = arith.constant 6 : index
    %c0_605 = arith.constant 0 : index
    %609 = vector.load %arg5[%c0_602, %c5_603, %c6_604, %c0_605] : memref<2x7x22x16xf32, #tpu.memory_space<vmem>>, vector<1x1x16x16xf32>
    %610 = vector.shape_cast %609 : vector<1x1x16x16xf32> to vector<16x16xf32>
    %c0_606 = arith.constant 0 : index
    %c47 = arith.constant 47 : index
    %611 = memref.load %arg1[%c0_606, %c47] : memref<2x49xf32, #tpu.memory_space<smem>>
    %612 = vector.broadcast %611 : f32 to vector<16x16xf32>
    %613 = arith.mulf %610, %612 : vector<16x16xf32>
    %614 = arith.addf %608, %613 : vector<16x16xf32>
    %c0_607 = arith.constant 0 : index
    %c6_608 = arith.constant 6 : index
    %c6_609 = arith.constant 6 : index
    %c0_610 = arith.constant 0 : index
    %615 = vector.load %arg5[%c0_607, %c6_608, %c6_609, %c0_610] : memref<2x7x22x16xf32, #tpu.memory_space<vmem>>, vector<1x1x16x16xf32>
    %616 = vector.shape_cast %615 : vector<1x1x16x16xf32> to vector<16x16xf32>
    %c0_611 = arith.constant 0 : index
    %c48 = arith.constant 48 : index
    %617 = memref.load %arg1[%c0_611, %c48] : memref<2x49xf32, #tpu.memory_space<smem>>
    %618 = vector.broadcast %617 : f32 to vector<16x16xf32>
    %619 = arith.mulf %616, %618 : vector<16x16xf32>
    %620 = arith.addf %614, %619 : vector<16x16xf32>
    %c1_612 = arith.constant 1 : index
    %c0_613 = arith.constant 0 : index
    %c6_614 = arith.constant 6 : index
    %c0_615 = arith.constant 0 : index
    %621 = vector.load %arg5[%c1_612, %c0_613, %c6_614, %c0_615] : memref<2x7x22x16xf32, #tpu.memory_space<vmem>>, vector<1x1x16x16xf32>
    %622 = vector.shape_cast %621 : vector<1x1x16x16xf32> to vector<16x16xf32>
    %c1_616 = arith.constant 1 : index
    %c42_617 = arith.constant 42 : index
    %623 = memref.load %arg1[%c1_616, %c42_617] : memref<2x49xf32, #tpu.memory_space<smem>>
    %624 = vector.broadcast %623 : f32 to vector<16x16xf32>
    %625 = arith.mulf %622, %624 : vector<16x16xf32>
    %626 = arith.addf %620, %625 : vector<16x16xf32>
    %c1_618 = arith.constant 1 : index
    %c1_619 = arith.constant 1 : index
    %c6_620 = arith.constant 6 : index
    %c0_621 = arith.constant 0 : index
    %627 = vector.load %arg5[%c1_618, %c1_619, %c6_620, %c0_621] : memref<2x7x22x16xf32, #tpu.memory_space<vmem>>, vector<1x1x16x16xf32>
    %628 = vector.shape_cast %627 : vector<1x1x16x16xf32> to vector<16x16xf32>
    %c1_622 = arith.constant 1 : index
    %c43_623 = arith.constant 43 : index
    %629 = memref.load %arg1[%c1_622, %c43_623] : memref<2x49xf32, #tpu.memory_space<smem>>
    %630 = vector.broadcast %629 : f32 to vector<16x16xf32>
    %631 = arith.mulf %628, %630 : vector<16x16xf32>
    %632 = arith.addf %626, %631 : vector<16x16xf32>
    %c1_624 = arith.constant 1 : index
    %c2_625 = arith.constant 2 : index
    %c6_626 = arith.constant 6 : index
    %c0_627 = arith.constant 0 : index
    %633 = vector.load %arg5[%c1_624, %c2_625, %c6_626, %c0_627] : memref<2x7x22x16xf32, #tpu.memory_space<vmem>>, vector<1x1x16x16xf32>
    %634 = vector.shape_cast %633 : vector<1x1x16x16xf32> to vector<16x16xf32>
    %c1_628 = arith.constant 1 : index
    %c44_629 = arith.constant 44 : index
    %635 = memref.load %arg1[%c1_628, %c44_629] : memref<2x49xf32, #tpu.memory_space<smem>>
    %636 = vector.broadcast %635 : f32 to vector<16x16xf32>
    %637 = arith.mulf %634, %636 : vector<16x16xf32>
    %638 = arith.addf %632, %637 : vector<16x16xf32>
    %c1_630 = arith.constant 1 : index
    %c3_631 = arith.constant 3 : index
    %c6_632 = arith.constant 6 : index
    %c0_633 = arith.constant 0 : index
    %639 = vector.load %arg5[%c1_630, %c3_631, %c6_632, %c0_633] : memref<2x7x22x16xf32, #tpu.memory_space<vmem>>, vector<1x1x16x16xf32>
    %640 = vector.shape_cast %639 : vector<1x1x16x16xf32> to vector<16x16xf32>
    %c1_634 = arith.constant 1 : index
    %c45_635 = arith.constant 45 : index
    %641 = memref.load %arg1[%c1_634, %c45_635] : memref<2x49xf32, #tpu.memory_space<smem>>
    %642 = vector.broadcast %641 : f32 to vector<16x16xf32>
    %643 = arith.mulf %640, %642 : vector<16x16xf32>
    %644 = arith.addf %638, %643 : vector<16x16xf32>
    %c1_636 = arith.constant 1 : index
    %c4_637 = arith.constant 4 : index
    %c6_638 = arith.constant 6 : index
    %c0_639 = arith.constant 0 : index
    %645 = vector.load %arg5[%c1_636, %c4_637, %c6_638, %c0_639] : memref<2x7x22x16xf32, #tpu.memory_space<vmem>>, vector<1x1x16x16xf32>
    %646 = vector.shape_cast %645 : vector<1x1x16x16xf32> to vector<16x16xf32>
    %c1_640 = arith.constant 1 : index
    %c46_641 = arith.constant 46 : index
    %647 = memref.load %arg1[%c1_640, %c46_641] : memref<2x49xf32, #tpu.memory_space<smem>>
    %648 = vector.broadcast %647 : f32 to vector<16x16xf32>
    %649 = arith.mulf %646, %648 : vector<16x16xf32>
    %650 = arith.addf %644, %649 : vector<16x16xf32>
    %c1_642 = arith.constant 1 : index
    %c5_643 = arith.constant 5 : index
    %c6_644 = arith.constant 6 : index
    %c0_645 = arith.constant 0 : index
    %651 = vector.load %arg5[%c1_642, %c5_643, %c6_644, %c0_645] : memref<2x7x22x16xf32, #tpu.memory_space<vmem>>, vector<1x1x16x16xf32>
    %652 = vector.shape_cast %651 : vector<1x1x16x16xf32> to vector<16x16xf32>
    %c1_646 = arith.constant 1 : index
    %c47_647 = arith.constant 47 : index
    %653 = memref.load %arg1[%c1_646, %c47_647] : memref<2x49xf32, #tpu.memory_space<smem>>
    %654 = vector.broadcast %653 : f32 to vector<16x16xf32>
    %655 = arith.mulf %652, %654 : vector<16x16xf32>
    %656 = arith.addf %650, %655 : vector<16x16xf32>
    %c1_648 = arith.constant 1 : index
    %c6_649 = arith.constant 6 : index
    %c6_650 = arith.constant 6 : index
    %c0_651 = arith.constant 0 : index
    %657 = vector.load %arg5[%c1_648, %c6_649, %c6_650, %c0_651] : memref<2x7x22x16xf32, #tpu.memory_space<vmem>>, vector<1x1x16x16xf32>
    %658 = vector.shape_cast %657 : vector<1x1x16x16xf32> to vector<16x16xf32>
    %c1_652 = arith.constant 1 : index
    %c48_653 = arith.constant 48 : index
    %659 = memref.load %arg1[%c1_652, %c48_653] : memref<2x49xf32, #tpu.memory_space<smem>>
    %660 = vector.broadcast %659 : f32 to vector<16x16xf32>
    %661 = arith.mulf %658, %660 : vector<16x16xf32>
    %662 = arith.addf %656, %661 : vector<16x16xf32>
    %663 = arith.addf %164, %247 : vector<16x16xf32>
    %664 = arith.addf %330, %413 : vector<16x16xf32>
    %665 = arith.addf %496, %579 : vector<16x16xf32>
    %666 = arith.addf %663, %664 : vector<16x16xf32>
    %667 = arith.addf %665, %662 : vector<16x16xf32>
    %668 = arith.addf %666, %667 : vector<16x16xf32>
    %669 = arith.negf %668 : vector<16x16xf32>
    %670 = math.exp %669 : vector<16x16xf32>
    %cst_654 = arith.constant 1.000000e+00 : f32
    %671 = vector.broadcast %cst_654 : f32 to vector<16x16xf32>
    %672 = arith.addf %671, %670 : vector<16x16xf32>
    %673 = arith.divf %671, %672 : vector<16x16xf32>
    %674 = vector.shape_cast %673 : vector<16x16xf32> to vector<1x16x16xf32>
    %c0_655 = arith.constant 0 : index
    %c0_656 = arith.constant 0 : index
    %c0_657 = arith.constant 0 : index
    %675 = vector.load %arg3[%c0_655, %c0_656, %c0_657] : memref<1x16x16xf32, #tpu.memory_space<vmem>>, vector<1x16x16xf32>
    tpu.vector_store %arg3[%c0_655, %c0_656, %c0_657], %674 {strides = array<i32>} : memref<1x16x16xf32, #tpu.memory_space<vmem>>, vector<1x16x16xf32>,
    return
  }
  func.func @transform_0(%arg0: i32) -> (i32, i32) {
    %c0_i32 = arith.constant 0 : i32
    %c0_i32_0 = arith.constant 0 : i32
    %c0_i32_1 = arith.constant 0 : i32
    return %c0_i32, %c0_i32_0 : i32, i32
  }
  func.func @transform_1(%arg0: i32) -> (i32, i32, i32, i32) {
    %c0_i32 = arith.constant 0 : i32
    %c0_i32_0 = arith.constant 0 : i32
    %c0_i32_1 = arith.constant 0 : i32
    %c0_i32_2 = arith.constant 0 : i32
    return %arg0, %c0_i32, %c0_i32_0, %c0_i32_1 : i32, i32, i32, i32
  }
  func.func @transform_2(%arg0: i32) -> (i32, i32, i32) {
    %c0_i32 = arith.constant 0 : i32
    %c0_i32_0 = arith.constant 0 : i32
    %c0_i32_1 = arith.constant 0 : i32
    return %arg0, %c0_i32, %c0_i32_0 : i32, i32, i32
  }
}

</mosaic_0001>

<llo_original>
// kernel: spatial_attention.5
$region0: #{spatial_attention.5}
  #allocation0 [shape = 'u32[]', space=smem, size = 0x4, offset = 0x4, fixed_abs, tag = 'smem constant byte address 0x4 - core index']
  #allocation1 [shape = 'u32[144,128]{1,0:T(1,128)}', space=vmem, size = 0x12000, scoped, tag = 'internal scratch']
  %s0 = inlined_call_operand.vmem [shape: f32[4,1,256], index: 0, kind: input, shape index: {}]
  %s1 = inlined_call_operand.vmem [shape: f32[4,32,256], index: 1, kind: input, shape index: {}]
  %s2 = inlined_call_operand.vmem [shape: f32[4,32,256], index: 2, kind: output, shape index: {}]
  %s3 = sld [smem:[#allocation0]]
  $region41: #{spatial_attention.5} parent=0
    _
  %s5 = ssub.s32 1, %s3
  %s6 = scalar_select 0, %s5, %s3
  loop: start=0, step=1, limit=6
  $region2: #{spatial_attention.5} parent=0 // loop_pre_header
    _
  $region3: #{spatial_attention.5} parent=0 // loop_header
    %s8 = sphi 0, %s12
    %p9 = scmp.ge.s32.totalorder %s8, 6
    %s15 = sphi 0, %s34
    %s16 = sphi 0, %s30
    %s17 = sphi 0, %s26
    %s18 = sphi 0, %s15
    %s19 = sphi 0, %s16
    %s20 = sphi 0, %s17
    %s21 = sphi 0, %s18
    %s22 = sphi 0, %s19
    %s23 = sphi 0, %s20
    %s39 = sphi 0, %s41
    %s42 = sphi 0, %s39
    %s43 = sphi 0, %s42
    %s59 = sphi 0, %s43
    %s69 = sphi 0, %s71
    %s72 = sphi 0, %s69
    %s73 = sphi 0, %s72
    %s89 = sphi 0, %s73
    %s99 = sphi 0, %s101
    %s102 = sphi 0, %s99
    %s103 = sphi 0, %s102
    %s119 = sphi 0, %s103
  $region4: #{spatial_attention.5} parent=0 // loop_header_branch
    %11 = sbr.rel (%p9) target = $region8
  $region5: #{spatial_attention.5} parent=0 // loop_body
    %s13 = ssub.s32 %s8, 1
    %s14 = ssub.s32 %s8, 2
    %s24 = sadd.s32 1, %s17
    %p25 = scmp.ge.s32.totalorder %s24, 1
    %s26 = scalar_select %p25, 0, %s24
    %s27 = sadd.s32 1, %s16
    %s28 = scalar_select %p25, %s27, %s16
    %p29 = scmp.ge.s32.totalorder %s28, 1
    %s30 = scalar_select %p29, 0, %s28
    %s31 = sadd.s32 1, %s15
    %s32 = scalar_select %p29, %s31, %s15
    %p33 = scmp.ge.s32.totalorder %s32, 4
    %s34 = scalar_select %p33, 0, %s32
    %s35 = ssub.s32 %s15, %s34
    %s36 = ssub.s32 %s16, %s30
    %s37 = sor.u32 %s35, %s36
    %p38 = scmp.eq.s32.totalorder %s37, 0
    %s40 = sadd.s32 %s39, 1
    %s41 = scalar_select %p38, %s39, %s40
    %p44 = pneg %p38
    %p45 = scmp.eq.s32.totalorder %s8, 3
    %p46 = por %p44, %p45
    %p47 = scmp.ne.s32.totalorder %s39, %s42
    %p48 = scmp.eq.s32.totalorder %s8, 0
    %p49 = por %p47, %p48
    %p50 = scmp.ne.s32.totalorder %s39, %s42
    %p51 = scmp.eq.s32.totalorder %s13, 3
    %p52 = por %p50, %p51
    %p53 = scmp.ne.s32.totalorder %s42, %s43
    %p54 = scmp.eq.s32.totalorder %s13, 0
    %p55 = por %p53, %p54
    %p56 = scmp.ne.s32.totalorder %s42, %s43
    %p57 = scmp.eq.s32.totalorder %s14, 3
    %p58 = por %p56, %p57
    %p60 = scmp.ne.s32.totalorder %s43, %s59
    %p61 = scmp.eq.s32.totalorder %s14, 0
    %p62 = por %p60, %p61
    %s63 = ssub.s32 %s15, %s34
    %s64 = ssub.s32 %s17, %s26
    %s65 = sor.u32 %s63, %s64
    %s66 = ssub.s32 %s16, %s30
    %s67 = sor.u32 %s65, %s66
    %p68 = scmp.eq.s32.totalorder %s67, 0
    %s70 = sadd.s32 %s69, 1
    %s71 = scalar_select %p68, %s69, %s70
    %p74 = pneg %p68
    %p75 = scmp.eq.s32.totalorder %s8, 3
    %p76 = por %p74, %p75
    %p77 = scmp.ne.s32.totalorder %s69, %s72
    %p78 = scmp.eq.s32.totalorder %s8, 0
    %p79 = por %p77, %p78
    %p80 = scmp.ne.s32.totalorder %s69, %s72
    %p81 = scmp.eq.s32.totalorder %s13, 3
    %p82 = por %p80, %p81
    %p83 = scmp.ne.s32.totalorder %s72, %s73
    %p84 = scmp.eq.s32.totalorder %s13, 0
    %p85 = por %p83, %p84
    %p86 = scmp.ne.s32.totalorder %s72, %s73
    %p87 = scmp.eq.s32.totalorder %s14, 3
    %p88 = por %p86, %p87
    %p90 = scmp.ne.s32.totalorder %s73, %s89
    %p91 = scmp.eq.s32.totalorder %s14, 0
    %p92 = por %p90, %p91
    %s93 = ssub.s32 %s15, %s34
    %s94 = ssub.s32 %s17, %s26
    %s95 = sor.u32 %s93, %s94
    %s96 = ssub.s32 %s16, %s30
    %s97 = sor.u32 %s95, %s96
    %p98 = scmp.eq.s32.totalorder %s97, 0
    %s100 = sadd.s32 %s99, 1
    %s101 = scalar_select %p98, %s99, %s100
    %p104 = pneg %p98
    %p105 = scmp.eq.s32.totalorder %s8, 3
    %p106 = por %p104, %p105
    %p107 = scmp.ne.s32.totalorder %s99, %s102
    %p108 = scmp.eq.s32.totalorder %s8, 0
    %p109 = por %p107, %p108
    %p110 = scmp.ne.s32.totalorder %s99, %s102
    %p111 = scmp.eq.s32.totalorder %s13, 3
    %p112 = por %p110, %p111
    %p113 = scmp.ne.s32.totalorder %s102, %s103
    %p114 = scmp.eq.s32.totalorder %s13, 0
    %p115 = por %p113, %p114
    %p116 = scmp.ne.s32.totalorder %s102, %s103
    %p117 = scmp.eq.s32.totalorder %s14, 3
    %p118 = por %p116, %p117
    %p120 = scmp.ne.s32.totalorder %s103, %s119
    %p121 = scmp.eq.s32.totalorder %s14, 0
    %p122 = por %p120, %p121
    %p123 = scmp.le.s32.totalorder 1, %s8
    %p124 = scmp.lt.s32.totalorder %s8, 5
    %p125 = pnand %p123, %p124
    %p126 = pneg %p125
    // Predicated region
    $region9: #{spatial_attention.5} parent=5 // pred_check
      _
    $region10: #{spatial_attention.5} parent=5 // pred_check_branch
      %128 = sbr.rel (%p125) target = $region12
    $region11: #{spatial_attention.5} parent=5 // pred_region
      %s129 = ssub.s32 %s8, 1
    $region12: #{spatial_attention.5} parent=5 // pred_fallthru
      _
    %p130 = scmp.lt.s32.totalorder %s8, 4
    // Predicated region
    $region13: #{spatial_attention.5} parent=5 // pred_check
      %p131 = pneg %p130
    $region14: #{spatial_attention.5} parent=5 // pred_check_branch
      %133 = sbr.rel (%p131) target = $region16
    $region15: #{spatial_attention.5} parent=5 // pred_region
      // Predicated region
      $region17: #{spatial_attention.5} parent=15 // pred_check
        %p134 = pneg %p49
      $region18: #{spatial_attention.5} parent=15 // pred_check_branch
        %136 = sbr.rel (%p134) target = $region20
      $region19: #{spatial_attention.5} parent=15 // pred_region
        %s137 = smul.u32 2, %s16
        %p138 = scmp.lt.s32.totalorder %s15, 3
        %s139 = scalar_select %p138, %s15, 3
        %p140 = scmp.lt.s32.totalorder %s137, 1
        %s141 = scalar_select %p140, %s137, 1
        %s142 = smul.addr %s139, 2
        %s143 = sadd.s32 %s141, %s142
        %s144 = scalar_lea.vmem %s0, %s143
        %s145 = smul.u32 2, %s16
      $region20: #{spatial_attention.5} parent=15 // pred_fallthru
        _
      // Predicated region
      $region21: #{spatial_attention.5} parent=15 // pred_check
        %p146 = pneg %p79
      $region22: #{spatial_attention.5} parent=15 // pred_check_branch
        %148 = sbr.rel (%p146) target = $region24
      $region23: #{spatial_attention.5} parent=15 // pred_region
        %s149 = smul.u32 4, %s17
        %s150 = smul.u32 2, %s16
        %p151 = scmp.lt.s32.totalorder %s15, 3
        %s152 = scalar_select %p151, %s15, 3
        %p153 = scmp.lt.s32.totalorder %s149, 3
        %s154 = scalar_select %p153, %s149, 3
        %p155 = scmp.lt.s32.totalorder %s150, 1
        %s156 = scalar_select %p155, %s150, 1
        %s157 = smul.addr %s154, 2
        %s158 = sadd.s32 %s156, %s157
        %s159 = smul.addr %s152, 8
        %s160 = sadd.s32 %s158, %s159
        %s161 = smul.addr %s160, 8
        %s162 = scalar_lea.vmem %s1, %s161
        %s163 = smul.u32 4, %s17
        %s164 = smul.u32 2, %s16
      $region24: #{spatial_attention.5} parent=15 // pred_fallthru
        _
    $region16: #{spatial_attention.5} parent=5 // pred_fallthru
      _
    %p165 = scmp.le.s32.totalorder 1, %s8
    %p166 = scmp.lt.s32.totalorder %s8, 5
    %p167 = pnand %p165, %p166
    %p168 = pneg %p167
    // Predicated region
    $region25: #{spatial_attention.5} parent=5 // pred_check
      _
    $region26: #{spatial_attention.5} parent=5 // pred_check_branch
      %170 = sbr.rel (%p167) target = $region28
    $region27: #{spatial_attention.5} parent=5 // pred_region
      %s171 = ssub.s32 %s8, 1
      %s172 = smul.u32 2, %s19
      %p173 = scmp.lt.s32.totalorder %s18, 3
      %s174 = scalar_select %p173, %s18, 3
      %p175 = scmp.lt.s32.totalorder %s172, 1
      %s176 = scalar_select %p175, %s172, 1
      %s177 = smul.addr %s174, 2
      %s178 = sadd.s32 %s176, %s177
      %s179 = scalar_lea.vmem %s0, %s178
      %p180 = pneg %p55
      %p181 = pneg %p52
      %s182 = smul.u32 4, %s20
      %s183 = smul.u32 2, %s19
      %p184 = scmp.lt.s32.totalorder %s18, 3
      %s185 = scalar_select %p184, %s18, 3
      %p186 = scmp.lt.s32.totalorder %s182, 3
      %s187 = scalar_select %p186, %s182, 3
      %p188 = scmp.lt.s32.totalorder %s183, 1
      %s189 = scalar_select %p188, %s183, 1
      %s190 = smul.addr %s187, 2
      %s191 = sadd.s32 %s189, %s190
      %s192 = smul.addr %s185, 8
      %s193 = sadd.s32 %s191, %s192
      %s194 = smul.addr %s193, 8
      %s195 = scalar_lea.vmem %s1, %s194
      %p196 = pneg %p85
      %p197 = pneg %p82
      %p198 = pneg %p115
      %p199 = pneg %p112
      %s200 = smul.u32 4, %s20
      %s201 = smul.u32 2, %s19
      %p202 = scmp.lt.s32.totalorder %s18, 3
      %s203 = scalar_select %p202, %s18, 3
      %p204 = scmp.lt.s32.totalorder %s200, 3
      %s205 = scalar_select %p204, %s200, 3
      %p206 = scmp.lt.s32.totalorder %s201, 1
      %s207 = scalar_select %p206, %s201, 1
      %s208 = smul.addr %s205, 2
      %s209 = sadd.s32 %s207, %s208
      %s210 = smul.addr %s203, 8
      %s211 = sadd.s32 %s209, %s210
      %s212 = smul.addr %s211, 8
      %s213 = scalar_lea.vmem %s2, %s212
      %s214 = smul.u32 2, %s19
      %p215 = scmp.lt.s32.totalorder %s18, 3
      %s216 = scalar_select %p215, %s18, 3
      %p217 = scmp.lt.s32.totalorder %s214, 1
      %s218 = scalar_select %p217, %s214, 1
      %s219 = smul.addr %s216, 2
      %s220 = sadd.s32 %s218, %s219
      %s221 = scalar_lea.vmem %s0, %s220
      %s222 = smul.u32 2, %s19
      %s223 = smul.u32 4, %s20
      %s224 = smul.u32 2, %s19
      %p225 = scmp.lt.s32.totalorder %s18, 3
      %s226 = scalar_select %p225, %s18, 3
      %p227 = scmp.lt.s32.totalorder %s223, 3
      %s228 = scalar_select %p227, %s223, 3
      %p229 = scmp.lt.s32.totalorder %s224, 1
      %s230 = scalar_select %p229, %s224, 1
      %s231 = smul.addr %s228, 2
      %s232 = sadd.s32 %s230, %s231
      %s233 = smul.addr %s226, 8
      %s234 = sadd.s32 %s232, %s233
      %s235 = smul.addr %s234, 8
      %s236 = scalar_lea.vmem %s1, %s235
      %s237 = smul.u32 4, %s20
      %s238 = smul.u32 2, %s19
      %s239 = smul.u32 4, %s20
      %s240 = smul.u32 2, %s19
      %p241 = scmp.lt.s32.totalorder %s18, 3
      %s242 = scalar_select %p241, %s18, 3
      %p243 = scmp.lt.s32.totalorder %s239, 3
      %s244 = scalar_select %p243, %s239, 3
      %p245 = scmp.lt.s32.totalorder %s240, 1
      %s246 = scalar_select %p245, %s240, 1
      %s247 = smul.addr %s244, 2
      %s248 = sadd.s32 %s246, %s247
      %s249 = smul.addr %s242, 8
      %s250 = sadd.s32 %s248, %s249
      %s251 = smul.addr %s250, 8
      %s252 = scalar_lea.vmem %s2, %s251
      %s253 = smul.u32 4, %s20
      %s254 = smul.u32 2, %s19
      %v255 = vld [vmem:[%s236] sm:$0xff]
      %v256 = vld [vmem:[%s236 + $0x8] sm:$0xff]
      %v257 = vld [vmem:[%s236 + $0x10] sm:$0xff]
      %v258 = vld [vmem:[%s236 + $0x18] sm:$0xff]
      %v259 = vld [vmem:[%s236 + $0x20] sm:$0xff]
      %v260 = vld [vmem:[%s236 + $0x28] sm:$0xff]
      %v261 = vld [vmem:[%s236 + $0x30] sm:$0xff]
      %v262 = vld [vmem:[%s236 + $0x38] sm:$0xff]
      %v263 = vld [vmem:[%s221] sm:$0x3]
      %v265 = vlaneseq
      %v266 = vshrl.u32 %v265, 7
      %v267 = vsub.s32 0, %v266
      %v268 = vrot.slane %v263, %v267
      %v269 = vlaneseq
      %v270 = vshrl.u32 %v269, 7
      %v271 = vsub.s32 1, %v270
      %v272 = vrot.slane %v263, %v271
      %v275 = vmul.f32 %v255, %v268
      %v276 = vmul.f32 %v256, %v272
      %v277 = vmul.f32 %v257, %v268
      %v278 = vmul.f32 %v258, %v272
      %v279 = vmul.f32 %v259, %v268
      %v280 = vmul.f32 %v260, %v272
      %v281 = vmul.f32 %v261, %v268
      %v282 = vmul.f32 %v262, %v272
      %283 = vst [vmem:[%s252] sm:$0xff] %v275
      %284 = vst [vmem:[%s252 + $0x8] sm:$0xff] %v276
      %285 = vst [vmem:[%s252 + $0x10] sm:$0xff] %v277
      %286 = vst [vmem:[%s252 + $0x18] sm:$0xff] %v278
      %287 = vst [vmem:[%s252 + $0x20] sm:$0xff] %v279
      %288 = vst [vmem:[%s252 + $0x28] sm:$0xff] %v280
      %289 = vst [vmem:[%s252 + $0x30] sm:$0xff] %v281
      %290 = vst [vmem:[%s252 + $0x38] sm:$0xff] %v282
      %s291 = smul.u32 4, %s20
      %s292 = smul.u32 2, %s19
      %p293 = scmp.lt.s32.totalorder %s18, 3
      %s294 = scalar_select %p293, %s18, 3
      %p295 = scmp.lt.s32.totalorder %s291, 3
      %s296 = scalar_select %p295, %s291, 3
      %p297 = scmp.lt.s32.totalorder %s292, 1
      %s298 = scalar_select %p297, %s292, 1
      %s299 = smul.addr %s296, 2
      %s300 = sadd.s32 %s298, %s299
      %s301 = smul.addr %s294, 8
      %s302 = sadd.s32 %s300, %s301
      %s303 = smul.addr %s302, 8
      %s304 = scalar_lea.vmem %s2, %s303
      // Predicated region
      $region29: #{spatial_attention.5} parent=27 // pred_check
        %p305 = pneg %p112
      $region30: #{spatial_attention.5} parent=27 // pred_check_branch
        %307 = sbr.rel (%p305) target = $region32
      $region31: #{spatial_attention.5} parent=27 // pred_region
        %s308 = smul.u32 4, %s20
        %s309 = smul.u32 2, %s19
      $region32: #{spatial_attention.5} parent=27 // pred_fallthru
        _
    $region28: #{spatial_attention.5} parent=5 // pred_fallthru
      _
    %p310 = scmp.le.s32.totalorder 2, %s8
    // Predicated region
    $region33: #{spatial_attention.5} parent=5 // pred_check
      %p311 = pneg %p310
    $region34: #{spatial_attention.5} parent=5 // pred_check_branch
      %313 = sbr.rel (%p311) target = $region36
    $region35: #{spatial_attention.5} parent=5 // pred_region
      %s314 = ssub.s32 %s8, 2
      // Predicated region
      $region37: #{spatial_attention.5} parent=35 // pred_check
        %p315 = pneg %p118
      $region38: #{spatial_attention.5} parent=35 // pred_check_branch
        %317 = sbr.rel (%p315) target = $region40
      $region39: #{spatial_attention.5} parent=35 // pred_region
        %s318 = smul.u32 4, %s23
        %s319 = smul.u32 2, %s22
        %p320 = scmp.lt.s32.totalorder %s21, 3
        %s321 = scalar_select %p320, %s21, 3
        %p322 = scmp.lt.s32.totalorder %s318, 3
        %s323 = scalar_select %p322, %s318, 3
        %p324 = scmp.lt.s32.totalorder %s319, 1
        %s325 = scalar_select %p324, %s319, 1
        %s326 = smul.addr %s323, 2
        %s327 = sadd.s32 %s325, %s326
        %s328 = smul.addr %s321, 8
        %s329 = sadd.s32 %s327, %s328
        %s330 = smul.addr %s329, 8
        %s331 = scalar_lea.vmem %s2, %s330
      $region40: #{spatial_attention.5} parent=35 // pred_fallthru
        _
    $region36: #{spatial_attention.5} parent=5 // pred_fallthru
      _
  $region6: #{spatial_attention.5} parent=0 // loop_footer
    %s12 = sadd.s32 1, %s8
  $region7: #{spatial_attention.5} parent=0 // loop_footer_branch
    %7 = sbr.rel target = $region3
  $region8: #{spatial_attention.5} parent=0 // loop_exit
    _

// kernel: spatial_attention.3
$region0: #{spatial_attention.3}
  #allocation0 [shape = 'u32[]', space=smem, size = 0x4, offset = 0x4, fixed_abs, tag = 'smem constant byte address 0x4 - core index']
  #allocation1 [shape = 'u32[144,128]{1,0:T(1,128)}', space=vmem, size = 0x12000, scoped, tag = 'internal scratch']
  #allocation2 [shape = 'f32[8,256]{1,0:T(8,128)}', space=vmem, size = 0x2000, scoped, tag = 'scratch operand']
  #allocation3 [shape = 'f32[8,256]{1,0:T(8,128)}', space=vmem, size = 0x2000, scoped, tag = 'scratch operand']
  %s0 = inlined_call_operand.vmem [shape: f32[4,32,256], index: 0, kind: input, shape index: {}]
  %s1 = inlined_call_operand.vmem [shape: f32[4,2,256], index: 1, kind: output, shape index: {}]
  %s2 = sld [smem:[#allocation0]]
  $region49: #{spatial_attention.3} parent=0
    _
  %s4 = ssub.s32 1, %s2
  %s5 = scalar_select 0, %s4, %s2
  loop: start=0, step=1, limit=6
  $region2: #{spatial_attention.3} parent=0 // loop_pre_header
    _
  $region3: #{spatial_attention.3} parent=0 // loop_header
    %s7 = sphi 0, %s11
    %p8 = scmp.ge.s32.totalorder %s7, 6
    %s14 = sphi 0, %s33
    %s15 = sphi 0, %s29
    %s16 = sphi 0, %s25
    %s17 = sphi 0, %s14
    %s18 = sphi 0, %s15
    %s19 = sphi 0, %s16
    %s20 = sphi 0, %s17
    %s21 = sphi 0, %s18
    %s22 = sphi 0, %s19
    %s40 = sphi 0, %s42
    %s43 = sphi 0, %s40
    %s44 = sphi 0, %s43
    %s60 = sphi 0, %s44
    %s68 = sphi 0, %s70
    %s71 = sphi 0, %s68
    %s72 = sphi 0, %s71
    %s88 = sphi 0, %s72
  $region4: #{spatial_attention.3} parent=0 // loop_header_branch
    %10 = sbr.rel (%p8) target = $region8
  $region5: #{spatial_attention.3} parent=0 // loop_body
    %s12 = ssub.s32 %s7, 1
    %s13 = ssub.s32 %s7, 2
    %s23 = sadd.s32 1, %s16
    %p24 = scmp.ge.s32.totalorder %s23, 1
    %s25 = scalar_select %p24, 0, %s23
    %s26 = sadd.s32 1, %s15
    %s27 = scalar_select %p24, %s26, %s15
    %p28 = scmp.ge.s32.totalorder %s27, 1
    %s29 = scalar_select %p28, 0, %s27
    %s30 = sadd.s32 1, %s14
    %s31 = scalar_select %p28, %s30, %s14
    %p32 = scmp.ge.s32.totalorder %s31, 4
    %s33 = scalar_select %p32, 0, %s31
    %s34 = ssub.s32 %s14, %s33
    %s35 = ssub.s32 %s16, %s25
    %s36 = sor.u32 %s34, %s35
    %s37 = ssub.s32 %s15, %s29
    %s38 = sor.u32 %s36, %s37
    %p39 = scmp.eq.s32.totalorder %s38, 0
    %s41 = sadd.s32 %s40, 1
    %s42 = scalar_select %p39, %s40, %s41
    %p45 = pneg %p39
    %p46 = scmp.eq.s32.totalorder %s7, 3
    %p47 = por %p45, %p46
    %p48 = scmp.ne.s32.totalorder %s40, %s43
    %p49 = scmp.eq.s32.totalorder %s7, 0
    %p50 = por %p48, %p49
    %p51 = scmp.ne.s32.totalorder %s40, %s43
    %p52 = scmp.eq.s32.totalorder %s12, 3
    %p53 = por %p51, %p52
    %p54 = scmp.ne.s32.totalorder %s43, %s44
    %p55 = scmp.eq.s32.totalorder %s12, 0
    %p56 = por %p54, %p55
    %p57 = scmp.ne.s32.totalorder %s43, %s44
    %p58 = scmp.eq.s32.totalorder %s13, 3
    %p59 = por %p57, %p58
    %p61 = scmp.ne.s32.totalorder %s44, %s60
    %p62 = scmp.eq.s32.totalorder %s13, 0
    %p63 = por %p61, %p62
    %s64 = ssub.s32 %s14, %s33
    %s65 = ssub.s32 %s15, %s29
    %s66 = sor.u32 %s64, %s65
    %p67 = scmp.eq.s32.totalorder %s66, 0
    %s69 = sadd.s32 %s68, 1
    %s70 = scalar_select %p67, %s68, %s69
    %p73 = pneg %p67
    %p74 = scmp.eq.s32.totalorder %s7, 3
    %p75 = por %p73, %p74
    %p76 = scmp.ne.s32.totalorder %s68, %s71
    %p77 = scmp.eq.s32.totalorder %s7, 0
    %p78 = por %p76, %p77
    %p79 = scmp.ne.s32.totalorder %s68, %s71
    %p80 = scmp.eq.s32.totalorder %s12, 3
    %p81 = por %p79, %p80
    %p82 = scmp.ne.s32.totalorder %s71, %s72
    %p83 = scmp.eq.s32.totalorder %s12, 0
    %p84 = por %p82, %p83
    %p85 = scmp.ne.s32.totalorder %s71, %s72
    %p86 = scmp.eq.s32.totalorder %s13, 3
    %p87 = por %p85, %p86
    %p89 = scmp.ne.s32.totalorder %s72, %s88
    %p90 = scmp.eq.s32.totalorder %s13, 0
    %p91 = por %p89, %p90
    %p92 = scmp.le.s32.totalorder 1, %s7
    %p93 = scmp.lt.s32.totalorder %s7, 5
    %p94 = pnand %p92, %p93
    %p95 = pneg %p94
    // Predicated region
    $region9: #{spatial_attention.3} parent=5 // pred_check
      _
    $region10: #{spatial_attention.3} parent=5 // pred_check_branch
      %97 = sbr.rel (%p94) target = $region12
    $region11: #{spatial_attention.3} parent=5 // pred_region
      %s98 = ssub.s32 %s7, 1
    $region12: #{spatial_attention.3} parent=5 // pred_fallthru
      _
    %p99 = scmp.lt.s32.totalorder %s7, 4
    // Predicated region
    $region13: #{spatial_attention.3} parent=5 // pred_check
      %p100 = pneg %p99
    $region14: #{spatial_attention.3} parent=5 // pred_check_branch
      %102 = sbr.rel (%p100) target = $region16
    $region15: #{spatial_attention.3} parent=5 // pred_region
      // Predicated region
      $region17: #{spatial_attention.3} parent=15 // pred_check
        %p103 = pneg %p50
      $region18: #{spatial_attention.3} parent=15 // pred_check_branch
        %105 = sbr.rel (%p103) target = $region20
      $region19: #{spatial_attention.3} parent=15 // pred_region
        %s106 = smul.u32 4, %s16
        %s107 = smul.u32 2, %s15
        %p108 = scmp.lt.s32.totalorder %s14, 3
        %s109 = scalar_select %p108, %s14, 3
        %p110 = scmp.lt.s32.totalorder %s106, 3
        %s111 = scalar_select %p110, %s106, 3
        %p112 = scmp.lt.s32.totalorder %s107, 1
        %s113 = scalar_select %p112, %s107, 1
        %s114 = smul.addr %s111, 2
        %s115 = sadd.s32 %s113, %s114
        %s116 = smul.addr %s109, 8
        %s117 = sadd.s32 %s115, %s116
        %s118 = smul.addr %s117, 8
        %s119 = scalar_lea.vmem %s0, %s118
        %s120 = smul.u32 4, %s16
        %s121 = smul.u32 2, %s15
      $region20: #{spatial_attention.3} parent=15 // pred_fallthru
        _
    $region16: #{spatial_attention.3} parent=5 // pred_fallthru
      _
    %p122 = scmp.le.s32.totalorder 1, %s7
    %p123 = scmp.lt.s32.totalorder %s7, 5
    %p124 = pnand %p122, %p123
    %p125 = pneg %p124
    // Predicated region
    $region21: #{spatial_attention.3} parent=5 // pred_check
      _
    $region22: #{spatial_attention.3} parent=5 // pred_check_branch
      %127 = sbr.rel (%p124) target = $region24
    $region23: #{spatial_attention.3} parent=5 // pred_region
      %s128 = ssub.s32 %s7, 1
      %s129 = smul.u32 4, %s19
      %s130 = smul.u32 2, %s18
      %p131 = scmp.lt.s32.totalorder %s17, 3
      %s132 = scalar_select %p131, %s17, 3
      %p133 = scmp.lt.s32.totalorder %s129, 3
      %s134 = scalar_select %p133, %s129, 3
      %p135 = scmp.lt.s32.totalorder %s130, 1
      %s136 = scalar_select %p135, %s130, 1
      %s137 = smul.addr %s134, 2
      %s138 = sadd.s32 %s136, %s137
      %s139 = smul.addr %s132, 8
      %s140 = sadd.s32 %s138, %s139
      %s141 = smul.addr %s140, 8
      %s142 = scalar_lea.vmem %s0, %s141
      %p143 = pneg %p56
      %p144 = pneg %p53
      %p145 = pneg %p84
      %p146 = pneg %p81
      %s147 = smul.u32 2, %s18
      %p148 = scmp.lt.s32.totalorder %s17, 3
      %s149 = scalar_select %p148, %s17, 3
      %p150 = scmp.lt.s32.totalorder %s147, 1
      %s151 = scalar_select %p150, %s147, 1
      %s152 = smul.addr %s149, 2
      %s153 = sadd.s32 %s151, %s152
      %s154 = smul.addr %s153, 2
      %s155 = scalar_lea.vmem %s1, %s154
      %s156 = smul.u32 4, %s19
      %s157 = smul.u32 2, %s18
      %p158 = scmp.lt.s32.totalorder %s17, 3
      %s159 = scalar_select %p158, %s17, 3
      %p160 = scmp.lt.s32.totalorder %s156, 3
      %s161 = scalar_select %p160, %s156, 3
      %p162 = scmp.lt.s32.totalorder %s157, 1
      %s163 = scalar_select %p162, %s157, 1
      %s164 = smul.addr %s161, 2
      %s165 = sadd.s32 %s163, %s164
      %s166 = smul.addr %s159, 8
      %s167 = sadd.s32 %s165, %s166
      %s168 = smul.addr %s167, 8
      %s169 = scalar_lea.vmem %s0, %s168
      %s170 = smul.u32 4, %s19
      %s171 = smul.u32 2, %s18
      %s172 = smul.u32 2, %s18
      %p173 = scmp.lt.s32.totalorder %s17, 3
      %s174 = scalar_select %p173, %s17, 3
      %p175 = scmp.lt.s32.totalorder %s172, 1
      %s176 = scalar_select %p175, %s172, 1
      %s177 = smul.addr %s174, 2
      %s178 = sadd.s32 %s176, %s177
      %s179 = smul.addr %s178, 2
      %s180 = scalar_lea.vmem %s1, %s179
      %s181 = smul.u32 2, %s18
      %v182 = vld [vmem:[%s169] sm:$0xff]
      %v183 = vld [vmem:[%s169 + $0x8] sm:$0xff]
      %v184 = vld [vmem:[%s169 + $0x10] sm:$0xff]
      %v185 = vld [vmem:[%s169 + $0x18] sm:$0xff]
      %v186 = vld [vmem:[%s169 + $0x20] sm:$0xff]
      %v187 = vld [vmem:[%s169 + $0x28] sm:$0xff]
      %v188 = vld [vmem:[%s169 + $0x30] sm:$0xff]
      %v189 = vld [vmem:[%s169 + $0x38] sm:$0xff]
      %v190 = vmax.f32 %v182, %v186
      %v191 = vmax.f32 %v184, %v188
      %v192 = vmax.f32 %v190, %v191
      %v193 = vmax.f32 %v183, %v187
      %v194 = vmax.f32 %v185, %v189
      %v195 = vmax.f32 %v193, %v194
      %v196 = vadd.f32 %v182, %v184
      %v197 = vadd.f32 %v196, %v186
      %v198 = vadd.f32 %v197, %v188
      %v199 = vadd.f32 %v183, %v185
      %v200 = vadd.f32 %v199, %v187
      %v201 = vadd.f32 %v200, %v189
      %p202 = scmp.eq.s32.totalorder %s19, 0
      // Predicated region
      $region25: #{spatial_attention.3} parent=23 // pred_check
        %p203 = pneg %p202
      $region26: #{spatial_attention.3} parent=23 // pred_check_branch
        %205 = sbr.rel (%p203) target = $region28
      $region27: #{spatial_attention.3} parent=23 // pred_region
        %206 = vst [vmem:[#allocation2] sm:$0xff] %v192
        %207 = vst [vmem:[#allocation2 + $0x8] sm:$0xff] %v195
        %208 = vst [vmem:[#allocation3] sm:$0xff] %v198
        %209 = vst [vmem:[#allocation3 + $0x8] sm:$0xff] %v201
      $region28: #{spatial_attention.3} parent=23 // pred_fallthru
        _
      %p210 = scmp.gt.s32.totalorder %s19, 0
      // Predicated region
      $region29: #{spatial_attention.3} parent=23 // pred_check
        %p211 = pneg %p210
      $region30: #{spatial_attention.3} parent=23 // pred_check_branch
        %213 = sbr.rel (%p211) target = $region32
      $region31: #{spatial_attention.3} parent=23 // pred_region
        %v214 = vld [vmem:[#allocation2] sm:$0xff]
        %v215 = vld [vmem:[#allocation2 + $0x8] sm:$0xff]
        %v216 = vmax.f32 %v214, %v192
        %v217 = vmax.f32 %v215, %v195
        %218 = vst [vmem:[#allocation2] sm:$0xff] %v216
        %219 = vst [vmem:[#allocation2 + $0x8] sm:$0xff] %v217
        %v220 = vld [vmem:[#allocation3] sm:$0xff]
        %v221 = vld [vmem:[#allocation3 + $0x8] sm:$0xff]
        %v222 = vadd.f32 %v220, %v198
        %v223 = vadd.f32 %v221, %v201
        %224 = vst [vmem:[#allocation3] sm:$0xff] %v222
        %225 = vst [vmem:[#allocation3 + $0x8] sm:$0xff] %v223
      $region32: #{spatial_attention.3} parent=23 // pred_fallthru
        _
      // Predicated region
      $region33: #{spatial_attention.3} parent=23 // pred_check
        %p226 = pneg %p202
      $region34: #{spatial_attention.3} parent=23 // pred_check_branch
        %228 = sbr.rel (%p226) target = $region36
      $region35: #{spatial_attention.3} parent=23 // pred_region
        %v229 = vld [vmem:[#allocation2] sm:$0xff]
        %v230 = vld [vmem:[#allocation2 + $0x8] sm:$0xff]
        %v231 = vrot.slane %v229, 4
        %v232 = vmax.f32 %v229, %v231
        %v233 = vrot.slane %v232, 2
        %v234 = vmax.f32 %v232, %v233
        %v235 = vrot.slane %v234, 1
        %v236 = vmax.f32 %v234, %v235
        %v237 = vrot.slane %v230, 4
        %v238 = vmax.f32 %v230, %v237
        %v239 = vrot.slane %v238, 2
        %v240 = vmax.f32 %v238, %v239
        %v241 = vrot.slane %v240, 1
        %v242 = vmax.f32 %v240, %v241
        %v245 = vcombine.low %v236, %v242
        %v247 = vunpack.c.l.s4 1966171168
        %v248 = vunpack.c.0.s8 %v247
        %v249 = vlaneseq
        %v250 = vshrl.u32 %v249, 7
        %v251 = vsub.s32 %v248, %v250
        %v252 = vrot.slane %v245, %v251
        %v254 = vunpack.c.l.s4 1966171168
        %v255 = vunpack.c.0.s8 %v254
        %v256 = vlaneseq
        %v257 = vshrl.u32 %v256, 7
        %v258 = vsub.s32 %v255, %v257
        %v259 = vrot.slane %v252, %v258
        %v261 = vlaneseq
        %vm262 = vcmp.ge.s32.totalorder %v261, 0
        %vm263 = vcmp.lt.s32.totalorder %v261, 256
        %vm264 = vmand %vm262, %vm263
        %265 = vst.msk [vmem:[%s180] ss:$2 sm:$0x3] %vm264, %v259
        %v266 = vld [vmem:[#allocation3] sm:$0xff]
        %v267 = vld [vmem:[#allocation3 + $0x8] sm:$0xff]
        %v268 = vrot.slane %v266, 4
        %v269 = vadd.f32 %v266, %v268
        %v270 = vrot.slane %v269, 2
        %v271 = vadd.f32 %v269, %v270
        %v272 = vrot.slane %v271, 1
        %v273 = vadd.f32 %v271, %v272
        %v274 = vrot.slane %v267, 4
        %v275 = vadd.f32 %v267, %v274
        %v276 = vrot.slane %v275, 2
        %v277 = vadd.f32 %v275, %v276
        %v278 = vrot.slane %v277, 1
        %v279 = vadd.f32 %v277, %v278
        %v280 = vmul.f32 %v273, 0.03125
        %v281 = vmul.f32 %v279, 0.03125
        %v284 = vcombine.low %v280, %v281
        %v286 = vunpack.c.l.s4 1966171168
        %v287 = vunpack.c.0.s8 %v286
        %v288 = vlaneseq
        %v289 = vshrl.u32 %v288, 7
        %v290 = vsub.s32 %v287, %v289
        %v291 = vrot.slane %v284, %v290
        %v293 = vunpack.c.l.s4 1966171168
        %v294 = vunpack.c.0.s8 %v293
        %v295 = vlaneseq
        %v296 = vshrl.u32 %v295, 7
        %v297 = vsub.s32 %v294, %v296
        %v298 = vrot.slane %v291, %v297
        %s300 = scalar_lea.vmem %s180, 1
        %301 = vst.msk [vmem:[%s300] ss:$2 sm:$0x3] %vm264, %v298
      $region36: #{spatial_attention.3} parent=23 // pred_fallthru
        _
      %s302 = smul.u32 2, %s18
      %p303 = scmp.lt.s32.totalorder %s17, 3
      %s304 = scalar_select %p303, %s17, 3
      %p305 = scmp.lt.s32.totalorder %s302, 1
      %s306 = scalar_select %p305, %s302, 1
      %s307 = smul.addr %s304, 2
      %s308 = sadd.s32 %s306, %s307
      %s309 = smul.addr %s308, 2
      %s310 = scalar_lea.vmem %s1, %s309
      // Predicated region
      $region37: #{spatial_attention.3} parent=23 // pred_check
        %p311 = pneg %p81
      $region38: #{spatial_attention.3} parent=23 // pred_check_branch
        %313 = sbr.rel (%p311) target = $region40
      $region39: #{spatial_attention.3} parent=23 // pred_region
        %s314 = smul.u32 2, %s18
      $region40: #{spatial_attention.3} parent=23 // pred_fallthru
        _
    $region24: #{spatial_attention.3} parent=5 // pred_fallthru
      _
    %p315 = scmp.le.s32.totalorder 2, %s7
    // Predicated region
    $region41: #{spatial_attention.3} parent=5 // pred_check
      %p316 = pneg %p315
    $region42: #{spatial_attention.3} parent=5 // pred_check_branch
      %318 = sbr.rel (%p316) target = $region44
    $region43: #{spatial_attention.3} parent=5 // pred_region
      %s319 = ssub.s32 %s7, 2
      // Predicated region
      $region45: #{spatial_attention.3} parent=43 // pred_check
        %p320 = pneg %p87
      $region46: #{spatial_attention.3} parent=43 // pred_check_branch
        %322 = sbr.rel (%p320) target = $region48
      $region47: #{spatial_attention.3} parent=43 // pred_region
        %s323 = smul.u32 2, %s21
        %p324 = scmp.lt.s32.totalorder %s20, 3
        %s325 = scalar_select %p324, %s20, 3
        %p326 = scmp.lt.s32.totalorder %s323, 1
        %s327 = scalar_select %p326, %s323, 1
        %s328 = smul.addr %s325, 2
        %s329 = sadd.s32 %s327, %s328
        %s330 = smul.addr %s329, 2
        %s331 = scalar_lea.vmem %s1, %s330
      $region48: #{spatial_attention.3} parent=43 // pred_fallthru
        _
    $region44: #{spatial_attention.3} parent=5 // pred_fallthru
      _
  $region6: #{spatial_attention.3} parent=0 // loop_footer
    %s11 = sadd.s32 1, %s7
  $region7: #{spatial_attention.3} parent=0 // loop_footer_branch
    %6 = sbr.rel target = $region3
  $region8: #{spatial_attention.3} parent=0 // loop_exit
    _

// kernel: spatial_attention.4
$region0: #{spatial_attention.4}
  #allocation0 [shape = 'u32[]', space=smem, size = 0x4, offset = 0x4, fixed_abs, tag = 'smem constant byte address 0x4 - core index']
  #allocation1 [shape = 'u32[144,128]{1,0:T(1,128)}', space=vmem, size = 0x12000, scoped, tag = 'internal scratch']
  #allocation2 [shape = 'f32[2,22,22]{2,1,0:T(8,128)}', space=vmem, size = 0x6000, scoped, tag = 'scratch operand']
  #allocation3 [shape = 'f32[2,7,22,16]{3,2,1,0:T(8,128)}', space=vmem, size = 0x2a000, scoped, tag = 'scratch operand']
  %s0 = inlined_call_operand.vmem [shape: f32[2,49], index: 0, kind: input, shape index: {}]
  %s1 = inlined_call_operand.vmem [shape: f32[4,2,16,16], index: 1, kind: input, shape index: {}]
  %s2 = inlined_call_operand.vmem [shape: f32[4,16,16], index: 2, kind: output, shape index: {}]
  %s3 = sld [smem:[#allocation0]]
  $region45: #{spatial_attention.4} parent=0
    _
  %s5 = ssub.s32 1, %s3
  %s6 = scalar_select 0, %s5, %s3
  $region1: #{spatial_attention.4} parent=0
    #allocation4 [shape = 'u8[1024]{0}', space=smem, size = 0x400, scoped, tag = 'input window, operand 0, single buffered']
    #allocation5 [shape = 's32[2]{0}', space=sflag, size = 0x8, scoped, tag = 'scoped memory for spatial_attention.4']
    %7 = vsyncpa [#allocation5], 0
    loop: start=0, step=1, limit=6
    $region2: #{spatial_attention.4} parent=1 // loop_pre_header
      _
    $region3: #{spatial_attention.4} parent=1 // loop_header
      %s9 = sphi 0, %s13
      %p10 = scmp.ge.s32.totalorder %s9, 6
      %s17 = sphi 0, %s17
      %s19 = sphi 0, %s17
      %s20 = sphi 0, %s19
      %s34 = sphi 0, %s20
      %s40 = sphi 0, %s42
      %s43 = sphi 0, %s40
      %s44 = sphi 0, %s43
      %s60 = sphi 0, %s44
      %s66 = sphi 0, %s68
      %s69 = sphi 0, %s66
      %s70 = sphi 0, %s69
      %s86 = sphi 0, %s70
    $region4: #{spatial_attention.4} parent=1 // loop_header_branch
      %12 = sbr.rel (%p10) target = $region8
    $region5: #{spatial_attention.4} parent=1 // loop_body
      %s14 = ssub.s32 %s9, 1
      %s15 = ssub.s32 %s9, 2
      %s16 = sadd.s32 %s9, 1
      %s18 = sadd.s32 %s17, 1
      %p21 = scmp.eq.s32.totalorder %s9, 3
      %p22 = scmp.ne.s32.totalorder %s17, %s19
      %p23 = scmp.eq.s32.totalorder %s9, 0
      %p24 = por %p22, %p23
      %p25 = scmp.ne.s32.totalorder %s17, %s19
      %p26 = scmp.eq.s32.totalorder %s14, 3
      %p27 = por %p25, %p26
      %p28 = scmp.ne.s32.totalorder %s19, %s20
      %p29 = scmp.eq.s32.totalorder %s14, 0
      %p30 = por %p28, %p29
      %p31 = scmp.ne.s32.totalorder %s19, %s20
      %p32 = scmp.eq.s32.totalorder %s15, 3
      %p33 = por %p31, %p32
      %p35 = scmp.ne.s32.totalorder %s20, %s34
      %p36 = scmp.eq.s32.totalorder %s15, 0
      %p37 = por %p35, %p36
      %s38 = ssub.s32 %s9, %s16
      %p39 = scmp.eq.s32.totalorder %s38, 0
      %s41 = sadd.s32 %s40, 1
      %s42 = scalar_select %p39, %s40, %s41
      %p45 = pneg %p39
      %p46 = scmp.eq.s32.totalorder %s9, 3
      %p47 = por %p45, %p46
      %p48 = scmp.ne.s32.totalorder %s40, %s43
      %p49 = scmp.eq.s32.totalorder %s9, 0
      %p50 = por %p48, %p49
      %p51 = scmp.ne.s32.totalorder %s40, %s43
      %p52 = scmp.eq.s32.totalorder %s14, 3
      %p53 = por %p51, %p52
      %p54 = scmp.ne.s32.totalorder %s43, %s44
      %p55 = scmp.eq.s32.totalorder %s14, 0
      %p56 = por %p54, %p55
      %p57 = scmp.ne.s32.totalorder %s43, %s44
      %p58 = scmp.eq.s32.totalorder %s15, 3
      %p59 = por %p57, %p58
      %p61 = scmp.ne.s32.totalorder %s44, %s60
      %p62 = scmp.eq.s32.totalorder %s15, 0
      %p63 = por %p61, %p62
      %s64 = ssub.s32 %s9, %s16
      %p65 = scmp.eq.s32.totalorder %s64, 0
      %s67 = sadd.s32 %s66, 1
      %s68 = scalar_select %p65, %s66, %s67
      %p71 = pneg %p65
      %p72 = scmp.eq.s32.totalorder %s9, 3
      %p73 = por %p71, %p72
      %p74 = scmp.ne.s32.totalorder %s66, %s69
      %p75 = scmp.eq.s32.totalorder %s9, 0
      %p76 = por %p74, %p75
      %p77 = scmp.ne.s32.totalorder %s66, %s69
      %p78 = scmp.eq.s32.totalorder %s14, 3
      %p79 = por %p77, %p78
      %p80 = scmp.ne.s32.totalorder %s69, %s70
      %p81 = scmp.eq.s32.totalorder %s14, 0
      %p82 = por %p80, %p81
      %p83 = scmp.ne.s32.totalorder %s69, %s70
      %p84 = scmp.eq.s32.totalorder %s15, 3
      %p85 = por %p83, %p84
      %p87 = scmp.ne.s32.totalorder %s70, %s86
      %p88 = scmp.eq.s32.totalorder %s15, 0
      %p89 = por %p87, %p88
      %p90 = scmp.le.s32.totalorder 1, %s9
      %p91 = scmp.lt.s32.totalorder %s9, 5
      %p92 = pnand %p90, %p91
      %p93 = pneg %p92
      // Predicated region
      $region9: #{spatial_attention.4} parent=5 // pred_check
        _
      $region10: #{spatial_attention.4} parent=5 // pred_check_branch
        %95 = sbr.rel (%p92) target = $region12
      $region11: #{spatial_attention.4} parent=5 // pred_region
        %s96 = ssub.s32 %s9, 1
        // Predicated region
        $region13: #{spatial_attention.4} parent=11 // pred_check
          %p97 = pneg %p30
        $region14: #{spatial_attention.4} parent=11 // pred_check_branch
          %99 = sbr.rel (%p97) target = $region16
        $region15: #{spatial_attention.4} parent=11 // pred_region
          %s101 = ssub.s32 32, 32
          %102 = vsyncadd [#allocation5], %s101
          %s104 = sshll.u32 %s0, 4
          %s105 = int_to_ptr.vmem [resolvable:$true] %s104
          %107 = dma.vmem_to_smem %s105, 32, [#allocation4], [#allocation5]
        $region16: #{spatial_attention.4} parent=11 // pred_fallthru
          _
      $region12: #{spatial_attention.4} parent=5 // pred_fallthru
        _
      %p108 = scmp.lt.s32.totalorder %s9, 4
      // Predicated region
      $region17: #{spatial_attention.4} parent=5 // pred_check
        %p109 = pneg %p108
      $region18: #{spatial_attention.4} parent=5 // pred_check_branch
        %111 = sbr.rel (%p109) target = $region20
      $region19: #{spatial_attention.4} parent=5 // pred_region
        // Predicated region
        $region21: #{spatial_attention.4} parent=19 // pred_check
          %p112 = pneg %p50
        $region22: #{spatial_attention.4} parent=19 // pred_check_branch
          %114 = sbr.rel (%p112) target = $region24
        $region23: #{spatial_attention.4} parent=19 // pred_region
          %p115 = scmp.lt.s32.totalorder %s9, 3
          %s116 = scalar_select %p115, %s9, 3
          %s117 = smul.addr %s116, 4
          %s118 = smul.addr %s117, 8
          %s119 = scalar_lea.vmem %s1, %s118
        $region24: #{spatial_attention.4} parent=19 // pred_fallthru
          _
      $region20: #{spatial_attention.4} parent=5 // pred_fallthru
        _
      %p120 = scmp.le.s32.totalorder 1, %s9
      %p121 = scmp.lt.s32.totalorder %s9, 5
      %p122 = pnand %p120, %p121
      %p123 = pneg %p122
      // Predicated region
      $region25: #{spatial_attention.4} parent=5 // pred_check
        _
      $region26: #{spatial_attention.4} parent=5 // pred_check_branch
        %125 = sbr.rel (%p122) target = $region28
      $region27: #{spatial_attention.4} parent=5 // pred_region
        %s126 = ssub.s32 %s9, 1
        // Predicated region
        $region29: #{spatial_attention.4} parent=27 // pred_check
          %p127 = pneg %p30
        $region30: #{spatial_attention.4} parent=27 // pred_check_branch
          %129 = sbr.rel (%p127) target = $region32
        $region31: #{spatial_attention.4} parent=27 // pred_region
          %130 = dma.done [#allocation5], 32
        $region32: #{spatial_attention.4} parent=27 // pred_fallthru
          _
        %131 = sfence
        %p132 = pneg %p30
        %p133 = pneg %p27
        %p134 = scmp.lt.s32.totalorder %s14, 3
        %s135 = scalar_select %p134, %s14, 3
        %s136 = smul.addr %s135, 4
        %s137 = smul.addr %s136, 8
        %s138 = scalar_lea.vmem %s1, %s137
        %p139 = pneg %p56
        %p140 = pneg %p53
        %p141 = pneg %p82
        %p142 = pneg %p79
        %p143 = scmp.lt.s32.totalorder %s14, 3
        %s144 = scalar_select %p143, %s14, 3
        %s145 = smul.addr %s144, 2
        %s146 = smul.addr %s145, 8
        %s147 = scalar_lea.vmem %s2, %s146
        %p148 = scmp.lt.s32.totalorder %s14, 3
        %s149 = scalar_select %p148, %s14, 3
        %s150 = smul.addr %s149, 4
        %s151 = smul.addr %s150, 8
        %s152 = scalar_lea.vmem %s1, %s151
        %p153 = scmp.lt.s32.totalorder %s14, 3
        %s154 = scalar_select %p153, %s14, 3
        %s155 = smul.addr %s154, 2
        %s156 = smul.addr %s155, 8
        %s157 = scalar_lea.vmem %s2, %s156
        %vm158 = vcmask 179200
        %159 = vst.msk [vmem:[#allocation2] sm:$0xff] %vm158, 0.0
        %160 = vst.msk [vmem:[#allocation2 + $0x8] sm:$0xff] %vm158, 0.0
        %vm161 = vcmask 177152
        %162 = vst.msk [vmem:[#allocation2 + $0x10] sm:$0x3f] %vm161, 0.0
        %163 = vst.msk [vmem:[#allocation2 + $0x18] sm:$0xff] %vm158, 0.0
        %164 = vst.msk [vmem:[#allocation2 + $0x20] sm:$0xff] %vm158, 0.0
        %165 = vst.msk [vmem:[#allocation2 + $0x28] sm:$0x3f] %vm161, 0.0
        %v166 = vld [vmem:[%s152] sm:$0xff]
        %v167 = vld [vmem:[%s152 + $0x8] sm:$0xff]
        %170 = vrot.lane.b32.xlu0 %v166, 3
        %v171 = vpop.permute.xlu0 %170
        %172 = vrot.lane.b32.xlu0 %v167, 3
        %v173 = vpop.permute.xlu0 %172
        %vm176 = vcmask 154648
        %177 = vst.msk [vmem:[#allocation2 + $0x3] sm:$0xff] %vm176, %v171
        %178 = vst.msk [vmem:[#allocation2 + $0xb] sm:$0xff] %vm176, %v173
        %v179 = vld [vmem:[#allocation2] sm:$0xff]
        %v180 = vld [vmem:[#allocation2 + $0x8] sm:$0xff]
        %v181 = vld [vmem:[#allocation2 + $0x10] sm:$0x3f]
        %vm182 = vcmask 130048
        %183 = vst.msk [vmem:[#allocation3] sm:$0xff] %vm182, %v179
        %184 = vst.msk [vmem:[#allocation3 + $0x8] sm:$0xff] %vm182, %v180
        %vm185 = vcmask 128000
        %186 = vst.msk [vmem:[#allocation3 + $0x10] sm:$0x3f] %vm185, %v181
        %v187 = vld [vmem:[#allocation2] sm:$0xff]
        %v188 = vld [vmem:[#allocation2 + $0x8] sm:$0xff]
        %v189 = vld [vmem:[#allocation2 + $0x10] sm:$0x3f]
        %193 = vrot.lane.b32.xlu0 %v187, 127
        %v194 = vpop.permute.xlu0 %193
        %195 = vrot.lane.b32.xlu0 %v188, 127
        %v196 = vpop.permute.xlu0 %195
        %197 = vrot.lane.b32.xlu0 %v189, 127
        %v198 = vpop.permute.xlu0 %197
        %s202 = scalar_lea.vmem [#allocation3], 24
        %203 = vst.msk [vmem:[%s202] sm:$0xff] %vm182, %v194
        %204 = vst.msk [vmem:[%s202 + $0x8] sm:$0xff] %vm182, %v196
        %205 = vst.msk [vmem:[%s202 + $0x10] sm:$0x3f] %vm185, %v198
        %v206 = vld [vmem:[#allocation2] sm:$0xff]
        %v207 = vld [vmem:[#allocation2 + $0x8] sm:$0xff]
        %v208 = vld [vmem:[#allocation2 + $0x10] sm:$0x3f]
        %212 = vrot.lane.b32.xlu0 %v206, 126
        %v213 = vpop.permute.xlu0 %212
        %214 = vrot.lane.b32.xlu0 %v207, 126
        %v215 = vpop.permute.xlu0 %214
        %216 = vrot.lane.b32.xlu0 %v208, 126
        %v217 = vpop.permute.xlu0 %216
        %s221 = scalar_lea.vmem [#allocation3], 48
        %222 = vst.msk [vmem:[%s221] sm:$0xff] %vm182, %v213
        %223 = vst.msk [vmem:[%s221 + $0x8] sm:$0xff] %vm182, %v215
        %224 = vst.msk [vmem:[%s221 + $0x10] sm:$0x3f] %vm185, %v217
        %v225 = vld [vmem:[#allocation2] sm:$0xff]
        %v226 = vld [vmem:[#allocation2 + $0x8] sm:$0xff]
        %v227 = vld [vmem:[#allocation2 + $0x10] sm:$0x3f]
        %231 = vrot.lane.b32.xlu0 %v225, 125
        %v232 = vpop.permute.xlu0 %231
        %233 = vrot.lane.b32.xlu0 %v226, 125
        %v234 = vpop.permute.xlu0 %233
        %235 = vrot.lane.b32.xlu0 %v227, 125
        %v236 = vpop.permute.xlu0 %235
        %s240 = scalar_lea.vmem [#allocation3], 72
        %241 = vst.msk [vmem:[%s240] sm:$0xff] %vm182, %v232
        %242 = vst.msk [vmem:[%s240 + $0x8] sm:$0xff] %vm182, %v234
        %243 = vst.msk [vmem:[%s240 + $0x10] sm:$0x3f] %vm185, %v236
        %v244 = vld [vmem:[#allocation2] sm:$0xff]
        %v245 = vld [vmem:[#allocation2 + $0x8] sm:$0xff]
        %v246 = vld [vmem:[#allocation2 + $0x10] sm:$0x3f]
        %250 = vrot.lane.b32.xlu0 %v244, 124
        %v251 = vpop.permute.xlu0 %250
        %252 = vrot.lane.b32.xlu0 %v245, 124
        %v253 = vpop.permute.xlu0 %252
        %254 = vrot.lane.b32.xlu0 %v246, 124
        %v255 = vpop.permute.xlu0 %254
        %s259 = scalar_lea.vmem [#allocation3], 96
        %260 = vst.msk [vmem:[%s259] sm:$0xff] %vm182, %v251
        %261 = vst.msk [vmem:[%s259 + $0x8] sm:$0xff] %vm182, %v253
        %262 = vst.msk [vmem:[%s259 + $0x10] sm:$0x3f] %vm185, %v255
        %v263 = vld [vmem:[#allocation2] sm:$0xff]
        %v264 = vld [vmem:[#allocation2 + $0x8] sm:$0xff]
        %v265 = vld [vmem:[#allocation2 + $0x10] sm:$0x3f]
        %269 = vrot.lane.b32.xlu0 %v263, 123
        %v270 = vpop.permute.xlu0 %269
        %271 = vrot.lane.b32.xlu0 %v264, 123
        %v272 = vpop.permute.xlu0 %271
        %273 = vrot.lane.b32.xlu0 %v265, 123
        %v274 = vpop.permute.xlu0 %273
        %s278 = scalar_lea.vmem [#allocation3], 120
        %279 = vst.msk [vmem:[%s278] sm:$0xff] %vm182, %v270
        %280 = vst.msk [vmem:[%s278 + $0x8] sm:$0xff] %vm182, %v272
        %281 = vst.msk [vmem:[%s278 + $0x10] sm:$0x3f] %vm185, %v274
        %v282 = vld [vmem:[#allocation2] sm:$0xff]
        %v283 = vld [vmem:[#allocation2 + $0x8] sm:$0xff]
        %v284 = vld [vmem:[#allocation2 + $0x10] sm:$0x3f]
        %288 = vrot.lane.b32.xlu0 %v282, 122
        %v289 = vpop.permute.xlu0 %288
        %290 = vrot.lane.b32.xlu0 %v283, 122
        %v291 = vpop.permute.xlu0 %290
        %292 = vrot.lane.b32.xlu0 %v284, 122
        %v293 = vpop.permute.xlu0 %292
        %s297 = scalar_lea.vmem [#allocation3], 144
        %298 = vst.msk [vmem:[%s297] sm:$0xff] %vm182, %v289
        %299 = vst.msk [vmem:[%s297 + $0x8] sm:$0xff] %vm182, %v291
        %300 = vst.msk [vmem:[%s297 + $0x10] sm:$0x3f] %vm185, %v293
        %s301 = scalar_lea.vmem %s152, 16
        %v302 = vld [vmem:[%s301] sm:$0xff]
        %v303 = vld [vmem:[%s301 + $0x8] sm:$0xff]
        %306 = vrot.lane.b32.xlu0 %v302, 3
        %v307 = vpop.permute.xlu0 %306
        %308 = vrot.lane.b32.xlu0 %v303, 3
        %v309 = vpop.permute.xlu0 %308
        %s312 = scalar_lea.vmem [#allocation2], 24
        %313 = vst.msk [vmem:[%s312 + $0x3] sm:$0xff] %vm176, %v307
        %314 = vst.msk [vmem:[%s312 + $0xb] sm:$0xff] %vm176, %v309
        %v315 = vld [vmem:[%s312] sm:$0xff]
        %v316 = vld [vmem:[%s312 + $0x8] sm:$0xff]
        %v317 = vld [vmem:[%s312 + $0x10] sm:$0x3f]
        %s318 = scalar_lea.vmem [#allocation3], 168
        %319 = vst.msk [vmem:[%s318] sm:$0xff] %vm182, %v315
        %320 = vst.msk [vmem:[%s318 + $0x8] sm:$0xff] %vm182, %v316
        %321 = vst.msk [vmem:[%s318 + $0x10] sm:$0x3f] %vm185, %v317
        %v322 = vld [vmem:[%s312] sm:$0xff]
        %v323 = vld [vmem:[%s312 + $0x8] sm:$0xff]
        %v324 = vld [vmem:[%s312 + $0x10] sm:$0x3f]
        %328 = vrot.lane.b32.xlu0 %v322, 127
        %v329 = vpop.permute.xlu0 %328
        %330 = vrot.lane.b32.xlu0 %v323, 127
        %v331 = vpop.permute.xlu0 %330
        %332 = vrot.lane.b32.xlu0 %v324, 127
        %v333 = vpop.permute.xlu0 %332
        %s337 = scalar_lea.vmem [#allocation3], 192
        %338 = vst.msk [vmem:[%s337] sm:$0xff] %vm182, %v329
        %339 = vst.msk [vmem:[%s337 + $0x8] sm:$0xff] %vm182, %v331
        %340 = vst.msk [vmem:[%s337 + $0x10] sm:$0x3f] %vm185, %v333
        %v341 = vld [vmem:[%s312] sm:$0xff]
        %v342 = vld [vmem:[%s312 + $0x8] sm:$0xff]
        %v343 = vld [vmem:[%s312 + $0x10] sm:$0x3f]
        %347 = vrot.lane.b32.xlu0 %v341, 126
        %v348 = vpop.permute.xlu0 %347
        %349 = vrot.lane.b32.xlu0 %v342, 126
        %v350 = vpop.permute.xlu0 %349
        %351 = vrot.lane.b32.xlu0 %v343, 126
        %v352 = vpop.permute.xlu0 %351
        %s356 = scalar_lea.vmem [#allocation3], 216
        %357 = vst.msk [vmem:[%s356] sm:$0xff] %vm182, %v348
        %358 = vst.msk [vmem:[%s356 + $0x8] sm:$0xff] %vm182, %v350
        %359 = vst.msk [vmem:[%s356 + $0x10] sm:$0x3f] %vm185, %v352
        %v360 = vld [vmem:[%s312] sm:$0xff]
        %v361 = vld [vmem:[%s312 + $0x8] sm:$0xff]
        %v362 = vld [vmem:[%s312 + $0x10] sm:$0x3f]
        %366 = vrot.lane.b32.xlu0 %v360, 125
        %v367 = vpop.permute.xlu0 %366
        %368 = vrot.lane.b32.xlu0 %v361, 125
        %v369 = vpop.permute.xlu0 %368
        %370 = vrot.lane.b32.xlu0 %v362, 125
        %v371 = vpop.permute.xlu0 %370
        %s375 = scalar_lea.vmem [#allocation3], 240
        %376 = vst.msk [vmem:[%s375] sm:$0xff] %vm182, %v367
        %377 = vst.msk [vmem:[%s375 + $0x8] sm:$0xff] %vm182, %v369
        %378 = vst.msk [vmem:[%s375 + $0x10] sm:$0x3f] %vm185, %v371
        %v379 = vld [vmem:[%s312] sm:$0xff]
        %v380 = vld [vmem:[%s312 + $0x8] sm:$0xff]
        %v381 = vld [vmem:[%s312 + $0x10] sm:$0x3f]
        %385 = vrot.lane.b32.xlu0 %v379, 124
        %v386 = vpop.permute.xlu0 %385
        %387 = vrot.lane.b32.xlu0 %v380, 124
        %v388 = vpop.permute.xlu0 %387
        %389 = vrot.lane.b32.xlu0 %v381, 124
        %v390 = vpop.permute.xlu0 %389
        %s394 = scalar_lea.vmem [#allocation3], 264
        %395 = vst.msk [vmem:[%s394] sm:$0xff] %vm182, %v386
        %396 = vst.msk [vmem:[%s394 + $0x8] sm:$0xff] %vm182, %v388
        %397 = vst.msk [vmem:[%s394 + $0x10] sm:$0x3f] %vm185, %v390
        %v398 = vld [vmem:[%s312] sm:$0xff]
        %v399 = vld [vmem:[%s312 + $0x8] sm:$0xff]
        %v400 = vld [vmem:[%s312 + $0x10] sm:$0x3f]
        %404 = vrot.lane.b32.xlu0 %v398, 123
        %v405 = vpop.permute.xlu0 %404
        %406 = vrot.lane.b32.xlu0 %v399, 123
        %v407 = vpop.permute.xlu0 %406
        %408 = vrot.lane.b32.xlu0 %v400, 123
        %v409 = vpop.permute.xlu0 %408
        %s413 = scalar_lea.vmem [#allocation3], 288
        %414 = vst.msk [vmem:[%s413] sm:$0xff] %vm182, %v405
        %415 = vst.msk [vmem:[%s413 + $0x8] sm:$0xff] %vm182, %v407
        %416 = vst.msk [vmem:[%s413 + $0x10] sm:$0x3f] %vm185, %v409
        %v417 = vld [vmem:[%s312] sm:$0xff]
        %v418 = vld [vmem:[%s312 + $0x8] sm:$0xff]
        %v419 = vld [vmem:[%s312 + $0x10] sm:$0x3f]
        %423 = vrot.lane.b32.xlu0 %v417, 122
        %v424 = vpop.permute.xlu0 %423
        %425 = vrot.lane.b32.xlu0 %v418, 122
        %v426 = vpop.permute.xlu0 %425
        %427 = vrot.lane.b32.xlu0 %v419, 122
        %v428 = vpop.permute.xlu0 %427
        %s432 = scalar_lea.vmem [#allocation3], 312
        %433 = vst.msk [vmem:[%s432] sm:$0xff] %vm182, %v424
        %434 = vst.msk [vmem:[%s432 + $0x8] sm:$0xff] %vm182, %v426
        %435 = vst.msk [vmem:[%s432 + $0x10] sm:$0x3f] %vm185, %v428
        %v436 = vld [vmem:[#allocation3] sm:$0xff]
        %v437 = vld [vmem:[#allocation3 + $0x8] sm:$0xff]
        %s438 = sld [smem:[#allocation4]]
        %v439 = vstv %s438
        %v440 = vmul.f32 %v436, %v439
        %v441 = vmul.f32 %v437, %v439
        %v442 = vld [vmem:[%s202] sm:$0xff]
        %v443 = vld [vmem:[%s202 + $0x8] sm:$0xff]
        %s444 = sld [smem:[#allocation4 + $0x1]]
        %v445 = vstv %s444
        %v446 = vmul.f32 %v442, %v445
        %v447 = vmul.f32 %v443, %v445
        %v448 = vadd.f32 %v440, %v446
        %v449 = vadd.f32 %v441, %v447
        %v450 = vld [vmem:[%s221] sm:$0xff]
        %v451 = vld [vmem:[%s221 + $0x8] sm:$0xff]
        %s452 = sld [smem:[#allocation4 + $0x2]]
        %v453 = vstv %s452
        %v454 = vmul.f32 %v450, %v453
        %v455 = vmul.f32 %v451, %v453
        %v456 = vadd.f32 %v448, %v454
        %v457 = vadd.f32 %v449, %v455
        %v458 = vld [vmem:[%s240] sm:$0xff]
        %v459 = vld [vmem:[%s240 + $0x8] sm:$0xff]
        %s460 = sld [smem:[#allocation4 + $0x3]]
        %v461 = vstv %s460
        %v462 = vmul.f32 %v458, %v461
        %v463 = vmul.f32 %v459, %v461
        %v464 = vadd.f32 %v456, %v462
        %v465 = vadd.f32 %v457, %v463
        %v466 = vld [vmem:[%s259] sm:$0xff]
        %v467 = vld [vmem:[%s259 + $0x8] sm:$0xff]
        %s468 = sld [smem:[#allocation4 + $0x4]]
        %v469 = vstv %s468
        %v470 = vmul.f32 %v466, %v469
        %v471 = vmul.f32 %v467, %v469
        %v472 = vadd.f32 %v464, %v470
        %v473 = vadd.f32 %v465, %v471
        %v474 = vld [vmem:[%s278] sm:$0xff]
        %v475 = vld [vmem:[%s278 + $0x8] sm:$0xff]
        %s476 = sld [smem:[#allocation4 + $0x5]]
        %v477 = vstv %s476
        %v478 = vmul.f32 %v474, %v477
        %v479 = vmul.f32 %v475, %v477
        %v480 = vadd.f32 %v472, %v478
        %v481 = vadd.f32 %v473, %v479
        %v482 = vld [vmem:[%s297] sm:$0xff]
        %v483 = vld [vmem:[%s297 + $0x8] sm:$0xff]
        %s484 = sld [smem:[#allocation4 + $0x6]]
        %v485 = vstv %s484
        %v486 = vmul.f32 %v482, %v485
        %v487 = vmul.f32 %v483, %v485
        %v488 = vadd.f32 %v480, %v486
        %v489 = vadd.f32 %v481, %v487
        %v490 = vld [vmem:[%s318] sm:$0xff]
        %v491 = vld [vmem:[%s318 + $0x8] sm:$0xff]
        %s492 = sld [smem:[#allocation4 + $0x80]]
        %v493 = vstv %s492
        %v494 = vmul.f32 %v490, %v493
        %v495 = vmul.f32 %v491, %v493
        %v496 = vadd.f32 %v488, %v494
        %v497 = vadd.f32 %v489, %v495
        %v498 = vld [vmem:[%s337] sm:$0xff]
        %v499 = vld [vmem:[%s337 + $0x8] sm:$0xff]
        %s500 = sld [smem:[#allocation4 + $0x81]]
        %v501 = vstv %s500
        %v502 = vmul.f32 %v498, %v501
        %v503 = vmul.f32 %v499, %v501
        %v504 = vadd.f32 %v496, %v502
        %v505 = vadd.f32 %v497, %v503
        %v506 = vld [vmem:[%s356] sm:$0xff]
        %v507 = vld [vmem:[%s356 + $0x8] sm:$0xff]
        %s508 = sld [smem:[#allocation4 + $0x82]]
        %v509 = vstv %s508
        %v510 = vmul.f32 %v506, %v509
        %v511 = vmul.f32 %v507, %v509
        %v512 = vadd.f32 %v504, %v510
        %v513 = vadd.f32 %v505, %v511
        %v514 = vld [vmem:[%s375] sm:$0xff]
        %v515 = vld [vmem:[%s375 + $0x8] sm:$0xff]
        %s516 = sld [smem:[#allocation4 + $0x83]]
        %v517 = vstv %s516
        %v518 = vmul.f32 %v514, %v517
        %v519 = vmul.f32 %v515, %v517
        %v520 = vadd.f32 %v512, %v518
        %v521 = vadd.f32 %v513, %v519
        %v522 = vld [vmem:[%s394] sm:$0xff]
        %v523 = vld [vmem:[%s394 + $0x8] sm:$0xff]
        %s524 = sld [smem:[#allocation4 + $0x84]]
        %v525 = vstv %s524
        %v526 = vmul.f32 %v522, %v525
        %v527 = vmul.f32 %v523, %v525
        %v528 = vadd.f32 %v520, %v526
        %v529 = vadd.f32 %v521, %v527
        %v530 = vld [vmem:[%s413] sm:$0xff]
        %v531 = vld [vmem:[%s413 + $0x8] sm:$0xff]
        %s532 = sld [smem:[#allocation4 + $0x85]]
        %v533 = vstv %s532
        %v534 = vmul.f32 %v530, %v533
        %v535 = vmul.f32 %v531, %v533
        %v536 = vadd.f32 %v528, %v534
        %v537 = vadd.f32 %v529, %v535
        %v538 = vld [vmem:[%s432] sm:$0xff]
        %v539 = vld [vmem:[%s432 + $0x8] sm:$0xff]
        %s540 = sld [smem:[#allocation4 + $0x86]]
        %v541 = vstv %s540
        %v542 = vmul.f32 %v538, %v541
        %v543 = vmul.f32 %v539, %v541
        %v544 = vadd.f32 %v536, %v542
        %v545 = vadd.f32 %v537, %v543
        %v546 = vld [vmem:[#allocation3 + $0x1] sm:$0xff]
        %v547 = vld [vmem:[#allocation3 + $0x9] sm:$0xff]
        %s548 = sld [smem:[#allocation4 + $0x7]]
        %v549 = vstv %s548
        %v550 = vmul.f32 %v546, %v549
        %v551 = vmul.f32 %v547, %v549
        %v552 = vld [vmem:[%s202 + $0x1] sm:$0xff]
        %v553 = vld [vmem:[%s202 + $0x9] sm:$0xff]
        %s554 = sld [smem:[#allocation4 + $0x8]]
        %v555 = vstv %s554
        %v556 = vmul.f32 %v552, %v555
        %v557 = vmul.f32 %v553, %v555
        %v558 = vadd.f32 %v550, %v556
        %v559 = vadd.f32 %v551, %v557
        %v560 = vld [vmem:[%s221 + $0x1] sm:$0xff]
        %v561 = vld [vmem:[%s221 + $0x9] sm:$0xff]
        %s562 = sld [smem:[#allocation4 + $0x9]]
        %v563 = vstv %s562
        %v564 = vmul.f32 %v560, %v563
        %v565 = vmul.f32 %v561, %v563
        %v566 = vadd.f32 %v558, %v564
        %v567 = vadd.f32 %v559, %v565
        %v568 = vld [vmem:[%s240 + $0x1] sm:$0xff]
        %v569 = vld [vmem:[%s240 + $0x9] sm:$0xff]
        %s570 = sld [smem:[#allocation4 + $0xa]]
        %v571 = vstv %s570
        %v572 = vmul.f32 %v568, %v571
        %v573 = vmul.f32 %v569, %v571
        %v574 = vadd.f32 %v566, %v572
        %v575 = vadd.f32 %v567, %v573
        %v576 = vld [vmem:[%s259 + $0x1] sm:$0xff]
        %v577 = vld [vmem:[%s259 + $0x9] sm:$0xff]
        %s578 = sld [smem:[#allocation4 + $0xb]]
        %v579 = vstv %s578
        %v580 = vmul.f32 %v576, %v579
        %v581 = vmul.f32 %v577, %v579
        %v582 = vadd.f32 %v574, %v580
        %v583 = vadd.f32 %v575, %v581
        %v584 = vld [vmem:[%s278 + $0x1] sm:$0xff]
        %v585 = vld [vmem:[%s278 + $0x9] sm:$0xff]
        %s586 = sld [smem:[#allocation4 + $0xc]]
        %v587 = vstv %s586
        %v588 = vmul.f32 %v584, %v587
        %v589 = vmul.f32 %v585, %v587
        %v590 = vadd.f32 %v582, %v588
        %v591 = vadd.f32 %v583, %v589
        %v592 = vld [vmem:[%s297 + $0x1] sm:$0xff]
        %v593 = vld [vmem:[%s297 + $0x9] sm:$0xff]
        %s594 = sld [smem:[#allocation4 + $0xd]]
        %v595 = vstv %s594
        %v596 = vmul.f32 %v592, %v595
        %v597 = vmul.f32 %v593, %v595
        %v598 = vadd.f32 %v590, %v596
        %v599 = vadd.f32 %v591, %v597
        %v600 = vld [vmem:[%s318 + $0x1] sm:$0xff]
        %v601 = vld [vmem:[%s318 + $0x9] sm:$0xff]
        %s602 = sld [smem:[#allocation4 + $0x87]]
        %v603 = vstv %s602
        %v604 = vmul.f32 %v600, %v603
        %v605 = vmul.f32 %v601, %v603
        %v606 = vadd.f32 %v598, %v604
        %v607 = vadd.f32 %v599, %v605
        %v608 = vld [vmem:[%s337 + $0x1] sm:$0xff]
        %v609 = vld [vmem:[%s337 + $0x9] sm:$0xff]
        %s610 = sld [smem:[#allocation4 + $0x88]]
        %v611 = vstv %s610
        %v612 = vmul.f32 %v608, %v611
        %v613 = vmul.f32 %v609, %v611
        %v614 = vadd.f32 %v606, %v612
        %v615 = vadd.f32 %v607, %v613
        %v616 = vld [vmem:[%s356 + $0x1] sm:$0xff]
        %v617 = vld [vmem:[%s356 + $0x9] sm:$0xff]
        %s618 = sld [smem:[#allocation4 + $0x89]]
        %v619 = vstv %s618
        %v620 = vmul.f32 %v616, %v619
        %v621 = vmul.f32 %v617, %v619
        %v622 = vadd.f32 %v614, %v620
        %v623 = vadd.f32 %v615, %v621
        %v624 = vld [vmem:[%s375 + $0x1] sm:$0xff]
        %v625 = vld [vmem:[%s375 + $0x9] sm:$0xff]
        %s626 = sld [smem:[#allocation4 + $0x8a]]
        %v627 = vstv %s626
        %v628 = vmul.f32 %v624, %v627
        %v629 = vmul.f32 %v625, %v627
        %v630 = vadd.f32 %v622, %v628
        %v631 = vadd.f32 %v623, %v629
        %v632 = vld [vmem:[%s394 + $0x1] sm:$0xff]
        %v633 = vld [vmem:[%s394 + $0x9] sm:$0xff]
        %s634 = sld [smem:[#allocation4 + $0x8b]]
        %v635 = vstv %s634
        %v636 = vmul.f32 %v632, %v635
        %v637 = vmul.f32 %v633, %v635
        %v638 = vadd.f32 %v630, %v636
        %v639 = vadd.f32 %v631, %v637
        %v640 = vld [vmem:[%s413 + $0x1] sm:$0xff]
        %v641 = vld [vmem:[%s413 + $0x9] sm:$0xff]
        %s642 = sld [smem:[#allocation4 + $0x8c]]
        %v643 = vstv %s642
        %v644 = vmul.f32 %v640, %v643
        %v645 = vmul.f32 %v641, %v643
        %v646 = vadd.f32 %v638, %v644
        %v647 = vadd.f32 %v639, %v645
        %v648 = vld [vmem:[%s432 + $0x1] sm:$0xff]
        %v649 = vld [vmem:[%s432 + $0x9] sm:$0xff]
        %s650 = sld [smem:[#allocation4 + $0x8d]]
        %v651 = vstv %s650
        %v652 = vmul.f32 %v648, %v651
        %v653 = vmul.f32 %v649, %v651
        %v654 = vadd.f32 %v646, %v652
        %v655 = vadd.f32 %v647, %v653
        %v656 = vld [vmem:[#allocation3 + $0x2] sm:$0xff]
        %v657 = vld [vmem:[#allocation3 + $0xa] sm:$0xff]
        %s658 = sld [smem:[#allocation4 + $0xe]]
        %v659 = vstv %s658
        %v660 = vmul.f32 %v656, %v659
        %v661 = vmul.f32 %v657, %v659
        %v662 = vld [vmem:[%s202 + $0x2] sm:$0xff]
        %v663 = vld [vmem:[%s202 + $0xa] sm:$0xff]
        %s664 = sld [smem:[#allocation4 + $0xf]]
        %v665 = vstv %s664
        %v666 = vmul.f32 %v662, %v665
        %v667 = vmul.f32 %v663, %v665
        %v668 = vadd.f32 %v660, %v666
        %v669 = vadd.f32 %v661, %v667
        %v670 = vld [vmem:[%s221 + $0x2] sm:$0xff]
        %v671 = vld [vmem:[%s221 + $0xa] sm:$0xff]
        %s672 = sld [smem:[#allocation4 + $0x10]]
        %v673 = vstv %s672
        %v674 = vmul.f32 %v670, %v673
        %v675 = vmul.f32 %v671, %v673
        %v676 = vadd.f32 %v668, %v674
        %v677 = vadd.f32 %v669, %v675
        %v678 = vld [vmem:[%s240 + $0x2] sm:$0xff]
        %v679 = vld [vmem:[%s240 + $0xa] sm:$0xff]
        %s680 = sld [smem:[#allocation4 + $0x11]]
        %v681 = vstv %s680
        %v682 = vmul.f32 %v678, %v681
        %v683 = vmul.f32 %v679, %v681
        %v684 = vadd.f32 %v676, %v682
        %v685 = vadd.f32 %v677, %v683
        %v686 = vld [vmem:[%s259 + $0x2] sm:$0xff]
        %v687 = vld [vmem:[%s259 + $0xa] sm:$0xff]
        %s688 = sld [smem:[#allocation4 + $0x12]]
        %v689 = vstv %s688
        %v690 = vmul.f32 %v686, %v689
        %v691 = vmul.f32 %v687, %v689
        %v692 = vadd.f32 %v684, %v690
        %v693 = vadd.f32 %v685, %v691
        %v694 = vld [vmem:[%s278 + $0x2] sm:$0xff]
        %v695 = vld [vmem:[%s278 + $0xa] sm:$0xff]
        %s696 = sld [smem:[#allocation4 + $0x13]]
        %v697 = vstv %s696
        %v698 = vmul.f32 %v694, %v697
        %v699 = vmul.f32 %v695, %v697
        %v700 = vadd.f32 %v692, %v698
        %v701 = vadd.f32 %v693, %v699
        %v702 = vld [vmem:[%s297 + $0x2] sm:$0xff]
        %v703 = vld [vmem:[%s297 + $0xa] sm:$0xff]
        %s704 = sld [smem:[#allocation4 + $0x14]]
        %v705 = vstv %s704
        %v706 = vmul.f32 %v702, %v705
        %v707 = vmul.f32 %v703, %v705
        %v708 = vadd.f32 %v700, %v706
        %v709 = vadd.f32 %v701, %v707
        %v710 = vld [vmem:[%s318 + $0x2] sm:$0xff]
        %v711 = vld [vmem:[%s318 + $0xa] sm:$0xff]
        %s712 = sld [smem:[#allocation4 + $0x8e]]
        %v713 = vstv %s712
        %v714 = vmul.f32 %v710, %v713
        %v715 = vmul.f32 %v711, %v713
        %v716 = vadd.f32 %v708, %v714
        %v717 = vadd.f32 %v709, %v715
        %v718 = vld [vmem:[%s337 + $0x2] sm:$0xff]
        %v719 = vld [vmem:[%s337 + $0xa] sm:$0xff]
        %s720 = sld [smem:[#allocation4 + $0x8f]]
        %v721 = vstv %s720
        %v722 = vmul.f32 %v718, %v721
        %v723 = vmul.f32 %v719, %v721
        %v724 = vadd.f32 %v716, %v722
        %v725 = vadd.f32 %v717, %v723
        %v726 = vld [vmem:[%s356 + $0x2] sm:$0xff]
        %v727 = vld [vmem:[%s356 + $0xa] sm:$0xff]
        %s728 = sld [smem:[#allocation4 + $0x90]]
        %v729 = vstv %s728
        %v730 = vmul.f32 %v726, %v729
        %v731 = vmul.f32 %v727, %v729
        %v732 = vadd.f32 %v724, %v730
        %v733 = vadd.f32 %v725, %v731
        %v734 = vld [vmem:[%s375 + $0x2] sm:$0xff]
        %v735 = vld [vmem:[%s375 + $0xa] sm:$0xff]
        %s736 = sld [smem:[#allocation4 + $0x91]]
        %v737 = vstv %s736
        %v738 = vmul.f32 %v734, %v737
        %v739 = vmul.f32 %v735, %v737
        %v740 = vadd.f32 %v732, %v738
        %v741 = vadd.f32 %v733, %v739
        %v742 = vld [vmem:[%s394 + $0x2] sm:$0xff]
        %v743 = vld [vmem:[%s394 + $0xa] sm:$0xff]
        %s744 = sld [smem:[#allocation4 + $0x92]]
        %v745 = vstv %s744
        %v746 = vmul.f32 %v742, %v745
        %v747 = vmul.f32 %v743, %v745
        %v748 = vadd.f32 %v740, %v746
        %v749 = vadd.f32 %v741, %v747
        %v750 = vld [vmem:[%s413 + $0x2] sm:$0xff]
        %v751 = vld [vmem:[%s413 + $0xa] sm:$0xff]
        %s752 = sld [smem:[#allocation4 + $0x93]]
        %v753 = vstv %s752
        %v754 = vmul.f32 %v750, %v753
        %v755 = vmul.f32 %v751, %v753
        %v756 = vadd.f32 %v748, %v754
        %v757 = vadd.f32 %v749, %v755
        %v758 = vld [vmem:[%s432 + $0x2] sm:$0xff]
        %v759 = vld [vmem:[%s432 + $0xa] sm:$0xff]
        %s760 = sld [smem:[#allocation4 + $0x94]]
        %v761 = vstv %s760
        %v762 = vmul.f32 %v758, %v761
        %v763 = vmul.f32 %v759, %v761
        %v764 = vadd.f32 %v756, %v762
        %v765 = vadd.f32 %v757, %v763
        %v766 = vld [vmem:[#allocation3 + $0x3] sm:$0xff]
        %v767 = vld [vmem:[#allocation3 + $0xb] sm:$0xff]
        %s768 = sld [smem:[#allocation4 + $0x15]]
        %v769 = vstv %s768
        %v770 = vmul.f32 %v766, %v769
        %v771 = vmul.f32 %v767, %v769
        %v772 = vld [vmem:[%s202 + $0x3] sm:$0xff]
        %v773 = vld [vmem:[%s202 + $0xb] sm:$0xff]
        %s774 = sld [smem:[#allocation4 + $0x16]]
        %v775 = vstv %s774
        %v776 = vmul.f32 %v772, %v775
        %v777 = vmul.f32 %v773, %v775
        %v778 = vadd.f32 %v770, %v776
        %v779 = vadd.f32 %v771, %v777
        %v780 = vld [vmem:[%s221 + $0x3] sm:$0xff]
        %v781 = vld [vmem:[%s221 + $0xb] sm:$0xff]
        %s782 = sld [smem:[#allocation4 + $0x17]]
        %v783 = vstv %s782
        %v784 = vmul.f32 %v780, %v783
        %v785 = vmul.f32 %v781, %v783
        %v786 = vadd.f32 %v778, %v784
        %v787 = vadd.f32 %v779, %v785
        %v788 = vld [vmem:[%s240 + $0x3] sm:$0xff]
        %v789 = vld [vmem:[%s240 + $0xb] sm:$0xff]
        %s790 = sld [smem:[#allocation4 + $0x18]]
        %v791 = vstv %s790
        %v792 = vmul.f32 %v788, %v791
        %v793 = vmul.f32 %v789, %v791
        %v794 = vadd.f32 %v786, %v792
        %v795 = vadd.f32 %v787, %v793
        %v796 = vld [vmem:[%s259 + $0x3] sm:$0xff]
        %v797 = vld [vmem:[%s259 + $0xb] sm:$0xff]
        %s798 = sld [smem:[#allocation4 + $0x19]]
        %v799 = vstv %s798
        %v800 = vmul.f32 %v796, %v799
        %v801 = vmul.f32 %v797, %v799
        %v802 = vadd.f32 %v794, %v800
        %v803 = vadd.f32 %v795, %v801
        %v804 = vld [vmem:[%s278 + $0x3] sm:$0xff]
        %v805 = vld [vmem:[%s278 + $0xb] sm:$0xff]
        %s806 = sld [smem:[#allocation4 + $0x1a]]
        %v807 = vstv %s806
        %v808 = vmul.f32 %v804, %v807
        %v809 = vmul.f32 %v805, %v807
        %v810 = vadd.f32 %v802, %v808
        %v811 = vadd.f32 %v803, %v809
        %v812 = vld [vmem:[%s297 + $0x3] sm:$0xff]
        %v813 = vld [vmem:[%s297 + $0xb] sm:$0xff]
        %s814 = sld [smem:[#allocation4 + $0x1b]]
        %v815 = vstv %s814
        %v816 = vmul.f32 %v812, %v815
        %v817 = vmul.f32 %v813, %v815
        %v818 = vadd.f32 %v810, %v816
        %v819 = vadd.f32 %v811, %v817
        %v820 = vld [vmem:[%s318 + $0x3] sm:$0xff]
        %v821 = vld [vmem:[%s318 + $0xb] sm:$0xff]
        %s822 = sld [smem:[#allocation4 + $0x95]]
        %v823 = vstv %s822
        %v824 = vmul.f32 %v820, %v823
        %v825 = vmul.f32 %v821, %v823
        %v826 = vadd.f32 %v818, %v824
        %v827 = vadd.f32 %v819, %v825
        %v828 = vld [vmem:[%s337 + $0x3] sm:$0xff]
        %v829 = vld [vmem:[%s337 + $0xb] sm:$0xff]
        %s830 = sld [smem:[#allocation4 + $0x96]]
        %v831 = vstv %s830
        %v832 = vmul.f32 %v828, %v831
        %v833 = vmul.f32 %v829, %v831
        %v834 = vadd.f32 %v826, %v832
        %v835 = vadd.f32 %v827, %v833
        %v836 = vld [vmem:[%s356 + $0x3] sm:$0xff]
        %v837 = vld [vmem:[%s356 + $0xb] sm:$0xff]
        %s838 = sld [smem:[#allocation4 + $0x97]]
        %v839 = vstv %s838
        %v840 = vmul.f32 %v836, %v839
        %v841 = vmul.f32 %v837, %v839
        %v842 = vadd.f32 %v834, %v840
        %v843 = vadd.f32 %v835, %v841
        %v844 = vld [vmem:[%s375 + $0x3] sm:$0xff]
        %v845 = vld [vmem:[%s375 + $0xb] sm:$0xff]
        %s846 = sld [smem:[#allocation4 + $0x98]]
        %v847 = vstv %s846
        %v848 = vmul.f32 %v844, %v847
        %v849 = vmul.f32 %v845, %v847
        %v850 = vadd.f32 %v842, %v848
        %v851 = vadd.f32 %v843, %v849
        %v852 = vld [vmem:[%s394 + $0x3] sm:$0xff]
        %v853 = vld [vmem:[%s394 + $0xb] sm:$0xff]
        %s854 = sld [smem:[#allocation4 + $0x99]]
        %v855 = vstv %s854
        %v856 = vmul.f32 %v852, %v855
        %v857 = vmul.f32 %v853, %v855
        %v858 = vadd.f32 %v850, %v856
        %v859 = vadd.f32 %v851, %v857
        %v860 = vld [vmem:[%s413 + $0x3] sm:$0xff]
        %v861 = vld [vmem:[%s413 + $0xb] sm:$0xff]
        %s862 = sld [smem:[#allocation4 + $0x9a]]
        %v863 = vstv %s862
        %v864 = vmul.f32 %v860, %v863
        %v865 = vmul.f32 %v861, %v863
        %v866 = vadd.f32 %v858, %v864
        %v867 = vadd.f32 %v859, %v865
        %v868 = vld [vmem:[%s432 + $0x3] sm:$0xff]
        %v869 = vld [vmem:[%s432 + $0xb] sm:$0xff]
        %s870 = sld [smem:[#allocation4 + $0x9b]]
        %v871 = vstv %s870
        %v872 = vmul.f32 %v868, %v871
        %v873 = vmul.f32 %v869, %v871
        %v874 = vadd.f32 %v866, %v872
        %v875 = vadd.f32 %v867, %v873
        %v876 = vld [vmem:[#allocation3 + $0x4] sm:$0xff]
        %v877 = vld [vmem:[#allocation3 + $0xc] sm:$0xff]
        %s878 = sld [smem:[#allocation4 + $0x1c]]
        %v879 = vstv %s878
        %v880 = vmul.f32 %v876, %v879
        %v881 = vmul.f32 %v877, %v879
        %v882 = vld [vmem:[%s202 + $0x4] sm:$0xff]
        %v883 = vld [vmem:[%s202 + $0xc] sm:$0xff]
        %s884 = sld [smem:[#allocation4 + $0x1d]]
        %v885 = vstv %s884
        %v886 = vmul.f32 %v882, %v885
        %v887 = vmul.f32 %v883, %v885
        %v888 = vadd.f32 %v880, %v886
        %v889 = vadd.f32 %v881, %v887
        %v890 = vld [vmem:[%s221 + $0x4] sm:$0xff]
        %v891 = vld [vmem:[%s221 + $0xc] sm:$0xff]
        %s892 = sld [smem:[#allocation4 + $0x1e]]
        %v893 = vstv %s892
        %v894 = vmul.f32 %v890, %v893
        %v895 = vmul.f32 %v891, %v893
        %v896 = vadd.f32 %v888, %v894
        %v897 = vadd.f32 %v889, %v895
        %v898 = vld [vmem:[%s240 + $0x4] sm:$0xff]
        %v899 = vld [vmem:[%s240 + $0xc] sm:$0xff]
        %s900 = sld [smem:[#allocation4 + $0x1f]]
        %v901 = vstv %s900
        %v902 = vmul.f32 %v898, %v901
        %v903 = vmul.f32 %v899, %v901
        %v904 = vadd.f32 %v896, %v902
        %v905 = vadd.f32 %v897, %v903
        %v906 = vld [vmem:[%s259 + $0x4] sm:$0xff]
        %v907 = vld [vmem:[%s259 + $0xc] sm:$0xff]
        %s908 = sld [smem:[#allocation4 + $0x20]]
        %v909 = vstv %s908
        %v910 = vmul.f32 %v906, %v909
        %v911 = vmul.f32 %v907, %v909
        %v912 = vadd.f32 %v904, %v910
        %v913 = vadd.f32 %v905, %v911
        %v914 = vld [vmem:[%s278 + $0x4] sm:$0xff]
        %v915 = vld [vmem:[%s278 + $0xc] sm:$0xff]
        %s916 = sld [smem:[#allocation4 + $0x21]]
        %v917 = vstv %s916
        %v918 = vmul.f32 %v914, %v917
        %v919 = vmul.f32 %v915, %v917
        %v920 = vadd.f32 %v912, %v918
        %v921 = vadd.f32 %v913, %v919
        %v922 = vld [vmem:[%s297 + $0x4] sm:$0xff]
        %v923 = vld [vmem:[%s297 + $0xc] sm:$0xff]
        %s924 = sld [smem:[#allocation4 + $0x22]]
        %v925 = vstv %s924
        %v926 = vmul.f32 %v922, %v925
        %v927 = vmul.f32 %v923, %v925
        %v928 = vadd.f32 %v920, %v926
        %v929 = vadd.f32 %v921, %v927
        %v930 = vld [vmem:[%s318 + $0x4] sm:$0xff]
        %v931 = vld [vmem:[%s318 + $0xc] sm:$0xff]
        %s932 = sld [smem:[#allocation4 + $0x9c]]
        %v933 = vstv %s932
        %v934 = vmul.f32 %v930, %v933
        %v935 = vmul.f32 %v931, %v933
        %v936 = vadd.f32 %v928, %v934
        %v937 = vadd.f32 %v929, %v935
        %v938 = vld [vmem:[%s337 + $0x4] sm:$0xff]
        %v939 = vld [vmem:[%s337 + $0xc] sm:$0xff]
        %s940 = sld [smem:[#allocation4 + $0x9d]]
        %v941 = vstv %s940
        %v942 = vmul.f32 %v938, %v941
        %v943 = vmul.f32 %v939, %v941
        %v944 = vadd.f32 %v936, %v942
        %v945 = vadd.f32 %v937, %v943
        %v946 = vld [vmem:[%s356 + $0x4] sm:$0xff]
        %v947 = vld [vmem:[%s356 + $0xc] sm:$0xff]
        %s948 = sld [smem:[#allocation4 + $0x9e]]
        %v949 = vstv %s948
        %v950 = vmul.f32 %v946, %v949
        %v951 = vmul.f32 %v947, %v949
        %v952 = vadd.f32 %v944, %v950
        %v953 = vadd.f32 %v945, %v951
        %v954 = vld [vmem:[%s375 + $0x4] sm:$0xff]
        %v955 = vld [vmem:[%s375 + $0xc] sm:$0xff]
        %s956 = sld [smem:[#allocation4 + $0x9f]]
        %v957 = vstv %s956
        %v958 = vmul.f32 %v954, %v957
        %v959 = vmul.f32 %v955, %v957
        %v960 = vadd.f32 %v952, %v958
        %v961 = vadd.f32 %v953, %v959
        %v962 = vld [vmem:[%s394 + $0x4] sm:$0xff]
        %v963 = vld [vmem:[%s394 + $0xc] sm:$0xff]
        %s964 = sld [smem:[#allocation4 + $0xa0]]
        %v965 = vstv %s964
        %v966 = vmul.f32 %v962, %v965
        %v967 = vmul.f32 %v963, %v965
        %v968 = vadd.f32 %v960, %v966
        %v969 = vadd.f32 %v961, %v967
        %v970 = vld [vmem:[%s413 + $0x4] sm:$0xff]
        %v971 = vld [vmem:[%s413 + $0xc] sm:$0xff]
        %s972 = sld [smem:[#allocation4 + $0xa1]]
        %v973 = vstv %s972
        %v974 = vmul.f32 %v970, %v973
        %v975 = vmul.f32 %v971, %v973
        %v976 = vadd.f32 %v968, %v974
        %v977 = vadd.f32 %v969, %v975
        %v978 = vld [vmem:[%s432 + $0x4] sm:$0xff]
        %v979 = vld [vmem:[%s432 + $0xc] sm:$0xff]
        %s980 = sld [smem:[#allocation4 + $0xa2]]
        %v981 = vstv %s980
        %v982 = vmul.f32 %v978, %v981
        %v983 = vmul.f32 %v979, %v981
        %v984 = vadd.f32 %v976, %v982
        %v985 = vadd.f32 %v977, %v983
        %v986 = vld [vmem:[#allocation3 + $0x5] sm:$0xff]
        %v987 = vld [vmem:[#allocation3 + $0xd] sm:$0xff]
        %s988 = sld [smem:[#allocation4 + $0x23]]
        %v989 = vstv %s988
        %v990 = vmul.f32 %v986, %v989
        %v991 = vmul.f32 %v987, %v989
        %v992 = vld [vmem:[%s202 + $0x5] sm:$0xff]
        %v993 = vld [vmem:[%s202 + $0xd] sm:$0xff]
        %s994 = sld [smem:[#allocation4 + $0x24]]
        %v995 = vstv %s994
        %v996 = vmul.f32 %v992, %v995
        %v997 = vmul.f32 %v993, %v995
        %v998 = vadd.f32 %v990, %v996
        %v999 = vadd.f32 %v991, %v997
        %v1000 = vld [vmem:[%s221 + $0x5] sm:$0xff]
        %v1001 = vld [vmem:[%s221 + $0xd] sm:$0xff]
        %s1002 = sld [smem:[#allocation4 + $0x25]]
        %v1003 = vstv %s1002
        %v1004 = vmul.f32 %v1000, %v1003
        %v1005 = vmul.f32 %v1001, %v1003
        %v1006 = vadd.f32 %v998, %v1004
        %v1007 = vadd.f32 %v999, %v1005
        %v1008 = vld [vmem:[%s240 + $0x5] sm:$0xff]
        %v1009 = vld [vmem:[%s240 + $0xd] sm:$0xff]
        %s1010 = sld [smem:[#allocation4 + $0x26]]
        %v1011 = vstv %s1010
        %v1012 = vmul.f32 %v1008, %v1011
        %v1013 = vmul.f32 %v1009, %v1011
        %v1014 = vadd.f32 %v1006, %v1012
        %v1015 = vadd.f32 %v1007, %v1013
        %v1016 = vld [vmem:[%s259 + $0x5] sm:$0xff]
        %v1017 = vld [vmem:[%s259 + $0xd] sm:$0xff]
        %s1018 = sld [smem:[#allocation4 + $0x27]]
        %v1019 = vstv %s1018
        %v1020 = vmul.f32 %v1016, %v1019
        %v1021 = vmul.f32 %v1017, %v1019
        %v1022 = vadd.f32 %v1014, %v1020
        %v1023 = vadd.f32 %v1015, %v1021
        %v1024 = vld [vmem:[%s278 + $0x5] sm:$0xff]
        %v1025 = vld [vmem:[%s278 + $0xd] sm:$0xff]
        %s1026 = sld [smem:[#allocation4 + $0x28]]
        %v1027 = vstv %s1026
        %v1028 = vmul.f32 %v1024, %v1027
        %v1029 = vmul.f32 %v1025, %v1027
        %v1030 = vadd.f32 %v1022, %v1028
        %v1031 = vadd.f32 %v1023, %v1029
        %v1032 = vld [vmem:[%s297 + $0x5] sm:$0xff]
        %v1033 = vld [vmem:[%s297 + $0xd] sm:$0xff]
        %s1034 = sld [smem:[#allocation4 + $0x29]]
        %v1035 = vstv %s1034
        %v1036 = vmul.f32 %v1032, %v1035
        %v1037 = vmul.f32 %v1033, %v1035
        %v1038 = vadd.f32 %v1030, %v1036
        %v1039 = vadd.f32 %v1031, %v1037
        %v1040 = vld [vmem:[%s318 + $0x5] sm:$0xff]
        %v1041 = vld [vmem:[%s318 + $0xd] sm:$0xff]
        %s1042 = sld [smem:[#allocation4 + $0xa3]]
        %v1043 = vstv %s1042
        %v1044 = vmul.f32 %v1040, %v1043
        %v1045 = vmul.f32 %v1041, %v1043
        %v1046 = vadd.f32 %v1038, %v1044
        %v1047 = vadd.f32 %v1039, %v1045
        %v1048 = vld [vmem:[%s337 + $0x5] sm:$0xff]
        %v1049 = vld [vmem:[%s337 + $0xd] sm:$0xff]
        %s1050 = sld [smem:[#allocation4 + $0xa4]]
        %v1051 = vstv %s1050
        %v1052 = vmul.f32 %v1048, %v1051
        %v1053 = vmul.f32 %v1049, %v1051
        %v1054 = vadd.f32 %v1046, %v1052
        %v1055 = vadd.f32 %v1047, %v1053
        %v1056 = vld [vmem:[%s356 + $0x5] sm:$0xff]
        %v1057 = vld [vmem:[%s356 + $0xd] sm:$0xff]
        %s1058 = sld [smem:[#allocation4 + $0xa5]]
        %v1059 = vstv %s1058
        %v1060 = vmul.f32 %v1056, %v1059
        %v1061 = vmul.f32 %v1057, %v1059
        %v1062 = vadd.f32 %v1054, %v1060
        %v1063 = vadd.f32 %v1055, %v1061
        %v1064 = vld [vmem:[%s375 + $0x5] sm:$0xff]
        %v1065 = vld [vmem:[%s375 + $0xd] sm:$0xff]
        %s1066 = sld [smem:[#allocation4 + $0xa6]]
        %v1067 = vstv %s1066
        %v1068 = vmul.f32 %v1064, %v1067
        %v1069 = vmul.f32 %v1065, %v1067
        %v1070 = vadd.f32 %v1062, %v1068
        %v1071 = vadd.f32 %v1063, %v1069
        %v1072 = vld [vmem:[%s394 + $0x5] sm:$0xff]
        %v1073 = vld [vmem:[%s394 + $0xd] sm:$0xff]
        %s1074 = sld [smem:[#allocation4 + $0xa7]]
        %v1075 = vstv %s1074
        %v1076 = vmul.f32 %v1072, %v1075
        %v1077 = vmul.f32 %v1073, %v1075
        %v1078 = vadd.f32 %v1070, %v1076
        %v1079 = vadd.f32 %v1071, %v1077
        %v1080 = vld [vmem:[%s413 + $0x5] sm:$0xff]
        %v1081 = vld [vmem:[%s413 + $0xd] sm:$0xff]
        %s1082 = sld [smem:[#allocation4 + $0xa8]]
        %v1083 = vstv %s1082
        %v1084 = vmul.f32 %v1080, %v1083
        %v1085 = vmul.f32 %v1081, %v1083
        %v1086 = vadd.f32 %v1078, %v1084
        %v1087 = vadd.f32 %v1079, %v1085
        %v1088 = vld [vmem:[%s432 + $0x5] sm:$0xff]
        %v1089 = vld [vmem:[%s432 + $0xd] sm:$0xff]
        %s1090 = sld [smem:[#allocation4 + $0xa9]]
        %v1091 = vstv %s1090
        %v1092 = vmul.f32 %v1088, %v1091
        %v1093 = vmul.f32 %v1089, %v1091
        %v1094 = vadd.f32 %v1086, %v1092
        %v1095 = vadd.f32 %v1087, %v1093
        %v1096 = vld [vmem:[#allocation3 + $0x6] sm:$0xff]
        %v1097 = vld [vmem:[#allocation3 + $0xe] sm:$0xff]
        %s1098 = sld [smem:[#allocation4 + $0x2a]]
        %v1099 = vstv %s1098
        %v1100 = vmul.f32 %v1096, %v1099
        %v1101 = vmul.f32 %v1097, %v1099
        %v1102 = vld [vmem:[%s202 + $0x6] sm:$0xff]
        %v1103 = vld [vmem:[%s202 + $0xe] sm:$0xff]
        %s1104 = sld [smem:[#allocation4 + $0x2b]]
        %v1105 = vstv %s1104
        %v1106 = vmul.f32 %v1102, %v1105
        %v1107 = vmul.f32 %v1103, %v1105
        %v1108 = vadd.f32 %v1100, %v1106
        %v1109 = vadd.f32 %v1101, %v1107
        %v1110 = vld [vmem:[%s221 + $0x6] sm:$0xff]
        %v1111 = vld [vmem:[%s221 + $0xe] sm:$0xff]
        %s1112 = sld [smem:[#allocation4 + $0x2c]]
        %v1113 = vstv %s1112
        %v1114 = vmul.f32 %v1110, %v1113
        %v1115 = vmul.f32 %v1111, %v1113
        %v1116 = vadd.f32 %v1108, %v1114
        %v1117 = vadd.f32 %v1109, %v1115
        %v1118 = vld [vmem:[%s240 + $0x6] sm:$0xff]
        %v1119 = vld [vmem:[%s240 + $0xe] sm:$0xff]
        %s1120 = sld [smem:[#allocation4 + $0x2d]]
        %v1121 = vstv %s1120
        %v1122 = vmul.f32 %v1118, %v1121
        %v1123 = vmul.f32 %v1119, %v1121
        %v1124 = vadd.f32 %v1116, %v1122
        %v1125 = vadd.f32 %v1117, %v1123
        %v1126 = vld [vmem:[%s259 + $0x6] sm:$0xff]
        %v1127 = vld [vmem:[%s259 + $0xe] sm:$0xff]
        %s1128 = sld [smem:[#allocation4 + $0x2e]]
        %v1129 = vstv %s1128
        %v1130 = vmul.f32 %v1126, %v1129
        %v1131 = vmul.f32 %v1127, %v1129
        %v1132 = vadd.f32 %v1124, %v1130
        %v1133 = vadd.f32 %v1125, %v1131
        %v1134 = vld [vmem:[%s278 + $0x6] sm:$0xff]
        %v1135 = vld [vmem:[%s278 + $0xe] sm:$0xff]
        %s1136 = sld [smem:[#allocation4 + $0x2f]]
        %v1137 = vstv %s1136
        %v1138 = vmul.f32 %v1134, %v1137
        %v1139 = vmul.f32 %v1135, %v1137
        %v1140 = vadd.f32 %v1132, %v1138
        %v1141 = vadd.f32 %v1133, %v1139
        %v1142 = vld [vmem:[%s297 + $0x6] sm:$0xff]
        %v1143 = vld [vmem:[%s297 + $0xe] sm:$0xff]
        %s1144 = sld [smem:[#allocation4 + $0x30]]
        %v1145 = vstv %s1144
        %v1146 = vmul.f32 %v1142, %v1145
        %v1147 = vmul.f32 %v1143, %v1145
        %v1148 = vadd.f32 %v1140, %v1146
        %v1149 = vadd.f32 %v1141, %v1147
        %v1150 = vld [vmem:[%s318 + $0x6] sm:$0xff]
        %v1151 = vld [vmem:[%s318 + $0xe] sm:$0xff]
        %s1152 = sld [smem:[#allocation4 + $0xaa]]
        %v1153 = vstv %s1152
        %v1154 = vmul.f32 %v1150, %v1153
        %v1155 = vmul.f32 %v1151, %v1153
        %v1156 = vadd.f32 %v1148, %v1154
        %v1157 = vadd.f32 %v1149, %v1155
        %v1158 = vld [vmem:[%s337 + $0x6] sm:$0xff]
        %v1159 = vld [vmem:[%s337 + $0xe] sm:$0xff]
        %s1160 = sld [smem:[#allocation4 + $0xab]]
        %v1161 = vstv %s1160
        %v1162 = vmul.f32 %v1158, %v1161
        %v1163 = vmul.f32 %v1159, %v1161
        %v1164 = vadd.f32 %v1156, %v1162
        %v1165 = vadd.f32 %v1157, %v1163
        %v1166 = vld [vmem:[%s356 + $0x6] sm:$0xff]
        %v1167 = vld [vmem:[%s356 + $0xe] sm:$0xff]
        %s1168 = sld [smem:[#allocation4 + $0xac]]
        %v1169 = vstv %s1168
        %v1170 = vmul.f32 %v1166, %v1169
        %v1171 = vmul.f32 %v1167, %v1169
        %v1172 = vadd.f32 %v1164, %v1170
        %v1173 = vadd.f32 %v1165, %v1171
        %v1174 = vld [vmem:[%s375 + $0x6] sm:$0xff]
        %v1175 = vld [vmem:[%s375 + $0xe] sm:$0xff]
        %s1176 = sld [smem:[#allocation4 + $0xad]]
        %v1177 = vstv %s1176
        %v1178 = vmul.f32 %v1174, %v1177
        %v1179 = vmul.f32 %v1175, %v1177
        %v1180 = vadd.f32 %v1172, %v1178
        %v1181 = vadd.f32 %v1173, %v1179
        %v1182 = vld [vmem:[%s394 + $0x6] sm:$0xff]
        %v1183 = vld [vmem:[%s394 + $0xe] sm:$0xff]
        %s1184 = sld [smem:[#allocation4 + $0xae]]
        %v1185 = vstv %s1184
        %v1186 = vmul.f32 %v1182, %v1185
        %v1187 = vmul.f32 %v1183, %v1185
        %v1188 = vadd.f32 %v1180, %v1186
        %v1189 = vadd.f32 %v1181, %v1187
        %v1190 = vld [vmem:[%s413 + $0x6] sm:$0xff]
        %v1191 = vld [vmem:[%s413 + $0xe] sm:$0xff]
        %s1192 = sld [smem:[#allocation4 + $0xaf]]
        %v1193 = vstv %s1192
        %v1194 = vmul.f32 %v1190, %v1193
        %v1195 = vmul.f32 %v1191, %v1193
        %v1196 = vadd.f32 %v1188, %v1194
        %v1197 = vadd.f32 %v1189, %v1195
        %v1198 = vld [vmem:[%s432 + $0x6] sm:$0xff]
        %v1199 = vld [vmem:[%s432 + $0xe] sm:$0xff]
        %s1200 = sld [smem:[#allocation4 + $0xb0]]
        %v1201 = vstv %s1200
        %v1202 = vmul.f32 %v1198, %v1201
        %v1203 = vmul.f32 %v1199, %v1201
        %v1204 = vadd.f32 %v1196, %v1202
        %v1205 = vadd.f32 %v1197, %v1203
        %v1206 = vadd.f32 %v544, %v654
        %v1207 = vadd.f32 %v545, %v655
        %v1208 = vadd.f32 %v764, %v874
        %v1209 = vadd.f32 %v765, %v875
        %v1210 = vadd.f32 %v984, %v1094
        %v1211 = vadd.f32 %v985, %v1095
        %v1212 = vadd.f32 %v1206, %v1208
        %v1213 = vadd.f32 %v1207, %v1209
        %v1214 = vadd.f32 %v1210, %v1204
        %v1215 = vadd.f32 %v1211, %v1205
        %v1216 = vadd.f32 %v1212, %v1214
        %v1217 = vadd.f32 %v1213, %v1215
        %v1218 = vxor.u32 %v1216, 2147483648
        %v1219 = vxor.u32 %v1217, 2147483648
        %v1220 = vmul.f32 %v1218, 1.442695
        %v1221 = vpow.pop %v1220
        %v1222 = vmul.f32 %v1219, 1.442695
        %v1223 = vpow.pop %v1222
        %v1224 = vadd.f32 %v1221, 1.0
        %v1225 = vadd.f32 %v1223, 1.0
        %v1226 = vrcp.pop %v1224
        %v1227 = vmul.f32 1.0, %v1226
        %v1228 = vrcp.pop %v1225
        %v1229 = vmul.f32 1.0, %v1228
        %1230 = vst.msk [vmem:[%s157] sm:$0xff] %vm182, %v1227
        %1231 = vst.msk [vmem:[%s157 + $0x8] sm:$0xff] %vm182, %v1229
        %p1232 = scmp.lt.s32.totalorder %s14, 3
        %s1233 = scalar_select %p1232, %s14, 3
        %s1234 = smul.addr %s1233, 2
        %s1235 = smul.addr %s1234, 8
        %s1236 = scalar_lea.vmem %s2, %s1235
        // Predicated region
        $region33: #{spatial_attention.4} parent=27 // pred_check
          %p1237 = pneg %p79
        $region34: #{spatial_attention.4} parent=27 // pred_check_branch
          %1239 = sbr.rel (%p1237) target = $region36
        $region35: #{spatial_attention.4} parent=27 // pred_region
          _
        $region36: #{spatial_attention.4} parent=27 // pred_fallthru
          _
      $region28: #{spatial_attention.4} parent=5 // pred_fallthru
        _
      %p1240 = scmp.le.s32.totalorder 2, %s9
      // Predicated region
      $region37: #{spatial_attention.4} parent=5 // pred_check
        %p1241 = pneg %p1240
      $region38: #{spatial_attention.4} parent=5 // pred_check_branch
        %1243 = sbr.rel (%p1241) target = $region40
      $region39: #{spatial_attention.4} parent=5 // pred_region
        %s1244 = ssub.s32 %s9, 2
        // Predicated region
        $region41: #{spatial_attention.4} parent=39 // pred_check
          %p1245 = pneg %p85
        $region42: #{spatial_attention.4} parent=39 // pred_check_branch
          %1247 = sbr.rel (%p1245) target = $region44
        $region43: #{spatial_attention.4} parent=39 // pred_region
          %p1248 = scmp.lt.s32.totalorder %s15, 3
          %s1249 = scalar_select %p1248, %s15, 3
          %s1250 = smul.addr %s1249, 2
          %s1251 = smul.addr %s1250, 8
          %s1252 = scalar_lea.vmem %s2, %s1251
        $region44: #{spatial_attention.4} parent=39 // pred_fallthru
          _
      $region40: #{spatial_attention.4} parent=5 // pred_fallthru
        _
    $region6: #{spatial_attention.4} parent=1 // loop_footer
      %s13 = sadd.s32 1, %s9
    $region7: #{spatial_attention.4} parent=1 // loop_footer_branch
      %8 = sbr.rel target = $region3
    $region8: #{spatial_attention.4} parent=1 // loop_exit
      _
    %1253 = vsyncpa [#allocation5], 1
    %s1254 = scalar_lea.sflag [#allocation5], 1
    %1255 = vsyncpa %s1254, 1

</llo_original>
